<compile_context>
chip_gen: v7x
topology: tpu7x:2x2x1
jax: 0.10.0
libtpu: 0.0.40
codegen_flags: <defaults>
</compile_context>

<pallas_src>
import functools
import math

import jax
import jax.numpy as jnp
from jax import lax
from jax.experimental import pallas as pl
from jax.experimental.pallas import tpu as pltpu

COMPUTE_DTYPE = jnp.bfloat16   # MXU operand dtype
ACT_DTYPE = jnp.bfloat16       # inter-kernel activation storage dtype
NORM_EPS = 0.25                # BasicNorm eps: exp(log(0.25)) = 0.25
MASK_VALUE = -1e30

# default linear tile sizes (bf16 operands): big M tiles amortize per-step
# overhead and keep output stores lane-dense.
TM, TN, TK = 512, 256, 512


def _round_up(x, m):
    return (x + m - 1) // m * m


def _vmem_limit_bytes():
    # Raise the scoped-VMEM ceiling above the per-chip defaults (16 MiB on
    # v5e, 32 MiB on v6e/v7x) but leave headroom on v7x's 64 MiB physical VMEM.
    try:
        cap = pltpu.get_tpu_info().vmem_capacity_bytes
        return int(min(96 * 1024 * 1024, cap * 3 // 4))
    except Exception:  # pragma: no cover - conservative fallback
        return 48 * 1024 * 1024


_VMEM_LIMIT = _vmem_limit_bytes()


# --------------------- prepared (pre-padded bf16) weights -------------------

@jax.tree_util.register_pytree_node_class
class PreparedLinear:
    """bf16, tile-padded weight + f32 bias with static tiling metadata.

    The ints/bool live in pytree aux_data so jit sees Python values, not
    tracers, and the weight pad/cast happens once at preparation time.
    """

    def __init__(self, w, b, n_out, block_k, block_n, fuse_norm):
        self.w = w                  # (Kp, Np) bf16
        self.b = b                  # (1, Np)  f32
        self.n_out = n_out          # original N (output slice)
        self.block_k = block_k
        self.block_n = block_n
        self.fuse_norm = fuse_norm

    def tree_flatten(self):
        return (self.w, self.b), (self.n_out, self.block_k, self.block_n,
                                  self.fuse_norm)

    @classmethod
    def tree_unflatten(cls, aux, children):
        return cls(*children, *aux)


def prepare_linear(w, b=None, *, tn=TN, tk=TK, fuse_norm=False):
    K, N = w.shape
    tn_eff = max(tn, N) if fuse_norm else tn   # norm needs the full feature dim
    bk = K if K <= tk else tk
    bn = N if N <= tn_eff else tn_eff
    Kp, Np = _round_up(K, bk), _round_up(N, bn)
    wp = jnp.pad(w, ((0, Kp - K), (0, Np - N))).astype(COMPUTE_DTYPE)
    if b is None:
        b = jnp.zeros((N,), jnp.float32)
    bp = jnp.pad(b.astype(jnp.float32).reshape(1, N), ((0, 0), (0, Np - N)))
    return PreparedLinear(wp, bp, N, bk, bn, fuse_norm)


# ------------------------ fused tiled linear kernel ------------------------
#
# One kernel covers every matmul in the model:
#   y = x @ w + b  [+ residual]  [DoubleSwish]  [BasicNorm]
# Tiled over (M, N, K) with an f32 VMEM accumulator; epilogues run in f32
# (v5e-safe) and are fused so activations make a single bf16 HBM round trip.

def _linear_kernel(x_ref, w_ref, b_ref, *rest, activation, fuse_norm,
                   has_residual):
    if has_residual:
        r_ref, o_ref, acc_ref = rest
    else:
        o_ref, acc_ref = rest
    k = pl.program_id(2)

    @pl.when(k == 0)
    def _init():
        acc_ref[...] = jnp.zeros_like(acc_ref)

    # operands are already bf16 (weights pre-cast at prepare time).
    acc_ref[...] += jnp.dot(x_ref[...], w_ref[...],
                            preferred_element_type=jnp.float32)

    @pl.when(k == pl.num_programs(2) - 1)
    def _finalize():
        y = acc_ref[...] + b_ref[...]
        if has_residual:
            y = y + r_ref[...].astype(jnp.float32)
        if activation == "double_swish":
            # DoubleSwish(x) = x * sigmoid(x - 1)   (f32 epilogue)
            y = y * jax.nn.sigmoid(y - 1.0)
        if fuse_norm:
            # BasicNorm: x * rsqrt(mean(x^2, -1) + eps)
            y = y * lax.rsqrt(jnp.mean(y * y, axis=-1, keepdims=True) + NORM_EPS)
        o_ref[...] = y.astype(o_ref.dtype)


def pallas_linear(x, lin: PreparedLinear, *, residual=None, activation="none",
                  out_dtype=ACT_DTYPE, tm=TM):
    M, K = x.shape
    Kp, Np = lin.w.shape
    N, bk, bn, fuse_norm = lin.n_out, lin.block_k, lin.block_n, lin.fuse_norm
    if fuse_norm:
        # The norm reduction must see the full, unpadded feature dimension.
        assert bn == Np == N, (bn, Np, N)

    bm = M if M <= tm else tm
    Mp = _round_up(M, bm)
    xp = x if (Mp == M and Kp == K) else jnp.pad(x, ((0, Mp - M), (0, Kp - K)))
    xp = xp.astype(COMPUTE_DTYPE)   # no-op when activations are already bf16

    inputs = [xp, lin.w, lin.b]
    in_specs = [
        pl.BlockSpec((bm, bk), lambda i, j, k: (i, k)),
        # TODO(synk): try pipeline_mode=pl.Buffered(3) here if the weight DMA
        # is exposed at large K.
        pl.BlockSpec((bk, bn), lambda i, j, k: (k, j)),
        pl.BlockSpec((1, bn), lambda i, j, k: (0, j)),
    ]
    if residual is not None:
        rp = residual
        if (Mp, Np) != (M, N):
            rp = jnp.pad(residual, ((0, Mp - M), (0, Np - N)))
        inputs.append(rp)
        in_specs.append(pl.BlockSpec((bm, bn), lambda i, j, k: (i, j)))

    out = pl.pallas_call(
        functools.partial(_linear_kernel, activation=activation,
                          fuse_norm=fuse_norm,
                          has_residual=residual is not None),
        out_shape=jax.ShapeDtypeStruct((Mp, Np), out_dtype),
        grid_spec=pltpu.PrefetchScalarGridSpec(
            num_scalar_prefetch=0,
            grid=(Mp // bm, Np // bn, Kp // bk),
            in_specs=in_specs,
            out_specs=pl.BlockSpec((bm, bn), lambda i, j, k: (i, j)),
            scratch_shapes=[pltpu.VMEM((bm, bn), jnp.float32)],
        ),
        compiler_params=pltpu.CompilerParams(
            dimension_semantics=("parallel", "parallel", "arbitrary"),
            vmem_limit_bytes=_VMEM_LIMIT),
    )(*inputs)
    if (Mp, Np) != (M, N):
        out = out[:M, :N]
    return out


# ----------------- relative-position multi-head attention ------------------
#
# Grid over batch; all heads are processed per grid step on bf16 (1,T,3D)
# input / (1,T,D) output blocks. x_lens lives in SMEM via scalar prefetch and
# the causal + key-padding mask is built in-kernel with iotas.  The rel-shift
# is a lane-0-aligned per-row lane rotation (XLU) followed by a free slice,
# and only the causal (non-negative relative position) half of the positional
# matrix is ever loaded/multiplied.

def _rel_attn_kernel(lens_ref, qkv_ref, p_ref, pbu_ref, pbv_ref, o_ref, *,
                     nhead, head_dim, scaling, shift):
    b = pl.program_id(0)
    T = qkv_ref.shape[1]
    D = nhead * head_dim

    # causal (triu, diag=1) | key-padding (j >= x_lens[b]) additive mask.
    # NOTE: padded query rows get a uniform softmax instead of PyTorch's NaN;
    # those rows must be masked by x_lens downstream.
    seq_len = lens_ref[b]
    row = lax.broadcasted_iota(jnp.int32, (T, T), 0)
    col = lax.broadcasted_iota(jnp.int32, (T, T), 1)
    invalid = (col > row) | (col >= seq_len)
    neg_mask = jnp.where(invalid, MASK_VALUE, 0.0).astype(jnp.float32)

    # TODO(synk): batch the per-head matmuls into a single head-major
    # dot_general (and flash-tile q/kv) for long T / wide MXUs; the unrolled
    # loop at least issues the H independent matmuls back-to-back.
    for h in range(nhead):
        s0 = h * head_dim
        q = qkv_ref[0, :, s0:s0 + head_dim].astype(jnp.float32) * scaling
        q_u = (q + pbu_ref[h:h + 1, :]).astype(COMPUTE_DTYPE)
        q_v = (q + pbv_ref[h:h + 1, :]).astype(COMPUTE_DTYPE)
        k = qkv_ref[0, :, D + s0:D + s0 + head_dim].astype(COMPUTE_DTYPE)
        v = qkv_ref[0, :, 2 * D + s0:2 * D + s0 + head_dim].astype(COMPUTE_DTYPE)
        ph = p_ref[:, s0:s0 + head_dim].astype(COMPUTE_DTYPE)        # (Tp, Dh)

        # matrix_ac = (q*scaling + pos_bias_u) @ k^T              -> (T, T)
        ac = lax.dot_general(q_u, k, (((1,), (1,)), ((), ())),
                             preferred_element_type=jnp.float32)
        # matrix_bd (pre-shift, causal half) = (q*scaling + pos_bias_v) @ p^T
        bd_full = lax.dot_general(q_v, ph, (((1,), (1,)), ((), ())),
                                  preferred_element_type=jnp.float32)  # (T, Tp)
        # rel_shift: bd[i, j] = bd_full[i, (T-1) - i + j].
        # Row i is rotated by (shift + i) lanes with shift = (-(T-1)) % Tp, so
        # the kept columns start at lane 0 and the slice is a free view.
        rolled = pltpu.roll(bd_full, shift, axis=1, stride=1, stride_axis=0)
        bd = rolled[:, :T]

        scores = ac + bd + neg_mask
        scores = scores - jnp.max(scores, axis=-1, keepdims=True)
        probs = jnp.exp(scores)
        # approx reciprocal: EUP slot, ~1e-3 relative error (inference-OK).
        probs = probs * pl.reciprocal(
            jnp.sum(probs, axis=-1, keepdims=True), approx=True)
        out_h = jnp.dot(probs.astype(COMPUTE_DTYPE), v,
                        preferred_element_type=jnp.float32)
        # Direct per-head store (no concat copy / full-head live range).
        o_ref[0, :, s0:s0 + head_dim] = out_h.astype(o_ref.dtype)


def pallas_rel_attention(qkv, p_pad, pos_bias_u, pos_bias_v, x_lens, *, nhead):
    B, T, three_d = qkv.shape
    D = three_d // 3
    head_dim = D // nhead
    Tp = p_pad.shape[0]
    scaling = float(head_dim) ** -0.5
    shift = (-(T - 1)) % Tp

    grid_spec = pltpu.PrefetchScalarGridSpec(
        num_scalar_prefetch=1,              # x_lens -> SMEM
        grid=(B,),
        in_specs=[
            pl.BlockSpec((1, T, three_d), lambda b, lens: (b, 0, 0)),
            pl.BlockSpec((Tp, D), lambda b, lens: (0, 0)),
            pl.BlockSpec((nhead, head_dim), lambda b, lens: (0, 0)),
            pl.BlockSpec((nhead, head_dim), lambda b, lens: (0, 0)),
        ],
        out_specs=pl.BlockSpec((1, T, D), lambda b, lens: (b, 0, 0)),
    )
    return pl.pallas_call(
        functools.partial(_rel_attn_kernel, nhead=nhead, head_dim=head_dim,
                          scaling=scaling, shift=shift),
        out_shape=jax.ShapeDtypeStruct((B, T, D), ACT_DTYPE),
        grid_spec=grid_spec,
        compiler_params=pltpu.CompilerParams(
            dimension_semantics=("parallel",),
            vmem_limit_bytes=_VMEM_LIMIT),
    )(x_lens, qkv, p_pad, pos_bias_u, pos_bias_v)


# ------------------------------- JAX glue ---------------------------------

def rel_positional_encoding_causal(T, d_model):
    """First T rows of RelPositionalEncoding's pos_emb (== flip(pe_positive)),
    i.e. relative positions T-1 .. 0.  The causal mask (always applied by this
    module) makes the negative-position half unreachable, so it is never built.
    """
    pos = ((T - 1) - jnp.arange(T, dtype=jnp.float32))[:, None]
    div = jnp.exp(jnp.arange(0, d_model, 2, dtype=jnp.float32)
                  * (-(math.log(10000.0) / d_model)))
    pe = jnp.zeros((T, d_model), jnp.float32)
    pe = pe.at[:, 0::2].set(jnp.sin(pos * div))
    pe = pe.at[:, 1::2].set(jnp.cos(pos * div))
    return pe


def init_params(key, input_dim, d_model, dim_ff, nhead, num_layers):
    head_dim = d_model // nhead

    def linear_init(k, fan_in, fan_out, scale=1.0, bias=True):
        kw, kb = jax.random.split(k)
        w = jax.random.normal(kw, (fan_in, fan_out), jnp.float32) * (scale / math.sqrt(fan_in))
        if bias:
            b = jax.random.normal(kb, (fan_out,), jnp.float32) * 0.01
        else:
            b = jnp.zeros((fan_out,), jnp.float32)
        return w, b

    keys = jax.random.split(key, 2 + num_layers)
    embed_w, embed_b = linear_init(keys[0], input_dim, d_model)

    layers = []
    for li in range(num_layers):
        lk = jax.random.split(keys[2 + li], 7)
        in_w, in_b = linear_init(lk[0], d_model, 3 * d_model)            # in_proj
        out_w, out_b = linear_init(lk[1], d_model, d_model, scale=0.25)  # out_proj
        pos_w, _ = linear_init(lk[2], d_model, d_model, bias=False)      # linear_pos
        pbu = jax.random.normal(lk[3], (nhead, head_dim), jnp.float32) * 0.1
        pbv = jax.random.normal(lk[4], (nhead, head_dim), jnp.float32) * 0.1
        ff1_w, ff1_b = linear_init(lk[5], d_model, dim_ff)
        ff2_w, ff2_b = linear_init(lk[6], dim_ff, d_model, scale=0.25)
        layers.append(dict(in_w=in_w, in_b=in_b, out_w=out_w, out_b=out_b,
                           pos_w=pos_w, pos_bias_u=pbu, pos_bias_v=pbv,
                           ff1_w=ff1_w, ff1_b=ff1_b, ff2_w=ff2_w, ff2_b=ff2_b))
    return dict(embed_w=embed_w, embed_b=embed_b, layers=layers)


def prepare_params(params):
    """One-time weight preparation: pad + cast every weight to bf16 MXU layout
    (no per-forward pad/cast HBM copies) and batch all layers' linear_pos
    projections into a single weight."""
    layers = []
    for lp in params["layers"]:
        layers.append(dict(
            in_proj=prepare_linear(lp["in_w"], lp["in_b"]),
            out_proj=prepare_linear(lp["out_w"], lp["out_b"]),
            ff1=prepare_linear(lp["ff1_w"], lp["ff1_b"]),
            ff2=prepare_linear(lp["ff2_w"], lp["ff2_b"], fuse_norm=True),
            pos_bias_u=lp["pos_bias_u"].astype(jnp.float32),
            pos_bias_v=lp["pos_bias_v"].astype(jnp.float32),
        ))
    pos_w_all = jnp.concatenate([lp["pos_w"] for lp in params["layers"]], axis=1)
    return dict(
        embed=prepare_linear(params["embed_w"], params["embed_b"], fuse_norm=True),
        pos_proj=prepare_linear(pos_w_all),     # linear_pos has no bias
        layers=layers,
    )


def transformer_forward(x, x_lens, fast, *, nhead):
    B, T, input_dim = x.shape
    layers = fast["layers"]
    num_layers = len(layers)
    d_model = fast["embed"].n_out

    # embed (ScaledLinear) with fused BasicNorm(learn_eps=False) epilogue
    src = pallas_linear(x.reshape(B * T, input_dim), fast["embed"])  # bf16 (B*T, d)

    # causal half of the relative positional encoding, projected once for ALL
    # layers; rows padded to a multiple of 128 so the in-kernel rel-shift is
    # lane-aligned (padded rows project to zero: linear_pos has no bias).
    Tp = _round_up(T, 128)
    pos_emb = rel_positional_encoding_causal(T, d_model)             # (T, d)
    pos_emb = jnp.pad(pos_emb, ((0, Tp - T), (0, 0)))
    p_all = pallas_linear(pos_emb, fast["pos_proj"])                 # (Tp, L*d) bf16

    x_lens32 = x_lens.astype(jnp.int32)

    for li, lp in enumerate(layers):
        # --- RelPositionMultiheadAttention ---
        qkv = pallas_linear(src, lp["in_proj"]).reshape(B, T, 3 * d_model)
        p_l = lax.slice_in_dim(p_all, li * d_model, (li + 1) * d_model, axis=1)
        attn = pallas_rel_attention(qkv, p_l, lp["pos_bias_u"], lp["pos_bias_v"],
                                    x_lens32, nhead=nhead)           # (B, T, d) bf16
        attn = attn.reshape(B * T, d_model)

        # out_proj + residual (dropout = identity)
        src2 = pallas_linear(attn, lp["out_proj"], residual=src)

        # feed-forward: ScaledLinear -> ActivationBalancer(id) -> DoubleSwish
        # -> Dropout(id) -> ScaledLinear ; + residual ; fused BasicNorm epilogue
        h1 = pallas_linear(src2, lp["ff1"], activation="double_swish")
        out_dtype = jnp.float32 if li == num_layers - 1 else ACT_DTYPE
        src = pallas_linear(h1, lp["ff2"], residual=src2, out_dtype=out_dtype)

    return src.reshape(B, T, d_model), x_lens


# --------------------------------- main ------------------------------------

if __name__ == "__main__":
    B, T = 2, 8
    INPUT_DIM, D_MODEL, DIM_FF, NHEAD, NUM_LAYERS = 16, 32, 64, 4, 2

    key = jax.random.PRNGKey(0)
    kx, kp = jax.random.split(key)
    x = jax.random.normal(kx, (B, T, INPUT_DIM), jnp.float32)
    x_lens = jnp.array([T, T - 2], jnp.int32)

    params = init_params(kp, INPUT_DIM, D_MODEL, DIM_FF, NHEAD, NUM_LAYERS)
    fast = prepare_params(params)   # one-time bf16 pad/cast of all weights

    fwd = jax.jit(functools.partial(transformer_forward, nhead=NHEAD))
    out, out_lens = fwd(x, x_lens, fast)
    jax.block_until_ready(out)

    assert out.shape == (B, T, D_MODEL), out.shape
    assert out_lens.shape == (B,), out_lens.shape
    print("KERNEL_OK")
</pallas_src>

<mosaic_0001>
module attributes {stable_mosaic.version = 11 : i64} {
  func.func @_linear_kernel(%arg0: i32, %arg1: i32, %arg2: i32, %arg3: memref<16x16xbf16, #tpu.memory_space<vmem>>, %arg4: memref<16x32xbf16, #tpu.memory_space<vmem>>, %arg5: memref<1x32xf32, #tpu.memory_space<vmem>>, %arg6: memref<16x32xbf16, #tpu.memory_space<vmem>>, %arg7: memref<16x32xf32, #tpu.memory_space<vmem>>) attributes {dimension_semantics = [#tpu.dimension_semantics<parallel>, #tpu.dimension_semantics<parallel>, #tpu.dimension_semantics<arbitrary>], iteration_bounds = array<i64: 1, 1, 1>, scalar_prefetch = 0 : i64, scratch_operands = 1 : i64, tpu.core_type = #tpu.core_type<tc>, window_params = [{transform_indices = @transform_0, window_bounds = array<i64: 16, 16>}, {transform_indices = @transform_1, window_bounds = array<i64: 16, 32>}, {transform_indices = @transform_2, window_bounds = array<i64: 1, 32>}, {transform_indices = @transform_3, window_bounds = array<i64: 16, 32>}]} {
    %c0_i32 = arith.constant 0 : i32
    %0 = arith.cmpi eq, %arg2, %c0_i32 : i32
    %1 = arith.extui %0 : i1 to i32
    %c0_i32_0 = arith.constant 0 : i32
    %2 = arith.cmpi ne, %1, %c0_i32_0 : i32
    scf.if %2 {
      %cst_10 = arith.constant 0.000000e+00 : f32
      %12 = vector.broadcast %cst_10 : f32 to vector<16x32xf32>
      %c0_11 = arith.constant 0 : index
      %c0_12 = arith.constant 0 : index
      %13 = vector.load %arg7[%c0_11, %c0_12] : memref<16x32xf32, #tpu.memory_space<vmem>>, vector<16x32xf32>
      tpu.vector_store %arg7[%c0_11, %c0_12], %12 {strides = array<i32>} : memref<16x32xf32, #tpu.memory_space<vmem>>, vector<16x32xf32>,
    } else {
    }
    %c0 = arith.constant 0 : index
    %c0_1 = arith.constant 0 : index
    %3 = vector.load %arg7[%c0, %c0_1] : memref<16x32xf32, #tpu.memory_space<vmem>>, vector<16x32xf32>
    %c0_2 = arith.constant 0 : index
    %c0_3 = arith.constant 0 : index
    %4 = vector.load %arg3[%c0_2, %c0_3] : memref<16x16xbf16, #tpu.memory_space<vmem>>, vector<16x16xbf16>
    %c0_4 = arith.constant 0 : index
    %c0_5 = arith.constant 0 : index
    %5 = vector.load %arg4[%c0_4, %c0_5] : memref<16x32xbf16, #tpu.memory_space<vmem>>, vector<16x32xbf16>
    %cst = arith.constant dense<0.000000e+00> : vector<16x32xf32>
    %6 = tpu.matmul %4, %5, %cst {dimension_numbers = #tpu.dot_dimension_numbers<[1], [0], [0], [1], [0, 0, 1, 1], [], []>} : vector<16x16xbf16>, vector<16x32xbf16>, vector<16x32xf32> -> vector<16x32xf32>
    %7 = arith.addf %3, %6 : vector<16x32xf32>
    %c0_6 = arith.constant 0 : index
    %c0_7 = arith.constant 0 : index
    %8 = vector.load %arg7[%c0_6, %c0_7] : memref<16x32xf32, #tpu.memory_space<vmem>>, vector<16x32xf32>
    tpu.vector_store %arg7[%c0_6, %c0_7], %7 {strides = array<i32>} : memref<16x32xf32, #tpu.memory_space<vmem>>, vector<16x32xf32>,
    %c0_i32_8 = arith.constant 0 : i32
    %9 = arith.cmpi eq, %arg2, %c0_i32_8 : i32
    %10 = arith.extui %9 : i1 to i32
    %c0_i32_9 = arith.constant 0 : i32
    %11 = arith.cmpi ne, %10, %c0_i32_9 : i32
    scf.if %11 {
      %c0_10 = arith.constant 0 : index
      %c0_11 = arith.constant 0 : index
      %12 = vector.load %arg7[%c0_10, %c0_11] : memref<16x32xf32, #tpu.memory_space<vmem>>, vector<16x32xf32>
      %c0_12 = arith.constant 0 : index
      %c0_13 = arith.constant 0 : index
      %13 = vector.load %arg5[%c0_12, %c0_13] : memref<1x32xf32, #tpu.memory_space<vmem>>, vector<1x32xf32>
      %14 = vector.broadcast %13 : vector<1x32xf32> to vector<16x32xf32>
      %15 = arith.addf %12, %14 : vector<16x32xf32>
      %16 = arith.mulf %15, %15 : vector<16x32xf32>
      %cst_14 = arith.constant dense<0.000000e+00> : vector<16xf32>
      %17 = vector.multi_reduction <add>, %16, %cst_14 [1] : vector<16x32xf32> to vector<16xf32>
      %18 = vector.shape_cast %17 : vector<16xf32> to vector<16x1xf32>
      %cst_15 = arith.constant 3.200000e+01 : f32
      %19 = vector.broadcast %cst_15 : f32 to vector<16x1xf32>
      %20 = arith.divf %18, %19 : vector<16x1xf32>
      %cst_16 = arith.constant 2.500000e-01 : f32
      %21 = vector.broadcast %cst_16 : f32 to vector<16x1xf32>
      %22 = arith.addf %20, %21 : vector<16x1xf32>
      %23 = math.rsqrt %22 : vector<16x1xf32>
      %24 = vector.broadcast %23 : vector<16x1xf32> to vector<16x32xf32>
      %25 = arith.mulf %15, %24 : vector<16x32xf32>
      %26 = arith.truncf %25 : vector<16x32xf32> to vector<16x32xbf16>
      %c0_17 = arith.constant 0 : index
      %c0_18 = arith.constant 0 : index
      %27 = vector.load %arg6[%c0_17, %c0_18] : memref<16x32xbf16, #tpu.memory_space<vmem>>, vector<16x32xbf16>
      tpu.vector_store %arg6[%c0_17, %c0_18], %26 {strides = array<i32>} : memref<16x32xbf16, #tpu.memory_space<vmem>>, vector<16x32xbf16>,
    } else {
    }
    return
  }
  func.func @transform_0(%arg0: i32, %arg1: i32, %arg2: i32) -> (i32, i32) {
    %c0_i32 = arith.constant 0 : i32
    return %arg0, %arg2 : i32, i32
  }
  func.func @transform_1(%arg0: i32, %arg1: i32, %arg2: i32) -> (i32, i32) {
    %c0_i32 = arith.constant 0 : i32
    return %arg2, %arg1 : i32, i32
  }
  func.func @transform_2(%arg0: i32, %arg1: i32, %arg2: i32) -> (i32, i32) {
    %c0_i32 = arith.constant 0 : i32
    %c0_i32_0 = arith.constant 0 : i32
    return %c0_i32, %arg1 : i32, i32
  }
  func.func @transform_3(%arg0: i32, %arg1: i32, %arg2: i32) -> (i32, i32) {
    %c0_i32 = arith.constant 0 : i32
    return %arg0, %arg1 : i32, i32
  }
}

module attributes {stable_mosaic.version = 11 : i64} {
  func.func @_linear_kernel(%arg0: i32, %arg1: i32, %arg2: i32, %arg3: memref<128x32xbf16, #tpu.memory_space<vmem>>, %arg4: memref<32x64xbf16, #tpu.memory_space<vmem>>, %arg5: memref<1x64xf32, #tpu.memory_space<vmem>>, %arg6: memref<128x64xbf16, #tpu.memory_space<vmem>>, %arg7: memref<128x64xf32, #tpu.memory_space<vmem>>) attributes {dimension_semantics = [#tpu.dimension_semantics<parallel>, #tpu.dimension_semantics<parallel>, #tpu.dimension_semantics<arbitrary>], iteration_bounds = array<i64: 1, 1, 1>, scalar_prefetch = 0 : i64, scratch_operands = 1 : i64, tpu.core_type = #tpu.core_type<tc>, window_params = [{transform_indices = @transform_0, window_bounds = array<i64: 128, 32>}, {transform_indices = @transform_1, window_bounds = array<i64: 32, 64>}, {transform_indices = @transform_2, window_bounds = array<i64: 1, 64>}, {transform_indices = @transform_3, window_bounds = array<i64: 128, 64>}]} {
    %c0_i32 = arith.constant 0 : i32
    %0 = arith.cmpi eq, %arg2, %c0_i32 : i32
    %1 = arith.extui %0 : i1 to i32
    %c0_i32_0 = arith.constant 0 : i32
    %2 = arith.cmpi ne, %1, %c0_i32_0 : i32
    scf.if %2 {
      %cst_10 = arith.constant 0.000000e+00 : f32
      %12 = vector.broadcast %cst_10 : f32 to vector<128x64xf32>
      %c0_11 = arith.constant 0 : index
      %c0_12 = arith.constant 0 : index
      %13 = vector.load %arg7[%c0_11, %c0_12] : memref<128x64xf32, #tpu.memory_space<vmem>>, vector<128x64xf32>
      tpu.vector_store %arg7[%c0_11, %c0_12], %12 {strides = array<i32>} : memref<128x64xf32, #tpu.memory_space<vmem>>, vector<128x64xf32>,
    } else {
    }
    %c0 = arith.constant 0 : index
    %c0_1 = arith.constant 0 : index
    %3 = vector.load %arg7[%c0, %c0_1] : memref<128x64xf32, #tpu.memory_space<vmem>>, vector<128x64xf32>
    %c0_2 = arith.constant 0 : index
    %c0_3 = arith.constant 0 : index
    %4 = vector.load %arg3[%c0_2, %c0_3] : memref<128x32xbf16, #tpu.memory_space<vmem>>, vector<128x32xbf16>
    %c0_4 = arith.constant 0 : index
    %c0_5 = arith.constant 0 : index
    %5 = vector.load %arg4[%c0_4, %c0_5] : memref<32x64xbf16, #tpu.memory_space<vmem>>, vector<32x64xbf16>
    %cst = arith.constant dense<0.000000e+00> : vector<128x64xf32>
    %6 = tpu.matmul %4, %5, %cst {dimension_numbers = #tpu.dot_dimension_numbers<[1], [0], [0], [1], [0, 0, 1, 1], [], []>} : vector<128x32xbf16>, vector<32x64xbf16>, vector<128x64xf32> -> vector<128x64xf32>
    %7 = arith.addf %3, %6 : vector<128x64xf32>
    %c0_6 = arith.constant 0 : index
    %c0_7 = arith.constant 0 : index
    %8 = vector.load %arg7[%c0_6, %c0_7] : memref<128x64xf32, #tpu.memory_space<vmem>>, vector<128x64xf32>
    tpu.vector_store %arg7[%c0_6, %c0_7], %7 {strides = array<i32>} : memref<128x64xf32, #tpu.memory_space<vmem>>, vector<128x64xf32>,
    %c0_i32_8 = arith.constant 0 : i32
    %9 = arith.cmpi eq, %arg2, %c0_i32_8 : i32
    %10 = arith.extui %9 : i1 to i32
    %c0_i32_9 = arith.constant 0 : i32
    %11 = arith.cmpi ne, %10, %c0_i32_9 : i32
    scf.if %11 {
      %c0_10 = arith.constant 0 : index
      %c0_11 = arith.constant 0 : index
      %12 = vector.load %arg7[%c0_10, %c0_11] : memref<128x64xf32, #tpu.memory_space<vmem>>, vector<128x64xf32>
      %c0_12 = arith.constant 0 : index
      %c0_13 = arith.constant 0 : index
      %13 = vector.load %arg5[%c0_12, %c0_13] : memref<1x64xf32, #tpu.memory_space<vmem>>, vector<1x64xf32>
      %14 = vector.broadcast %13 : vector<1x64xf32> to vector<128x64xf32>
      %15 = arith.addf %12, %14 : vector<128x64xf32>
      %16 = arith.truncf %15 : vector<128x64xf32> to vector<128x64xbf16>
      %c0_14 = arith.constant 0 : index
      %c0_15 = arith.constant 0 : index
      %17 = vector.load %arg6[%c0_14, %c0_15] : memref<128x64xbf16, #tpu.memory_space<vmem>>, vector<128x64xbf16>
      tpu.vector_store %arg6[%c0_14, %c0_15], %16 {strides = array<i32>} : memref<128x64xbf16, #tpu.memory_space<vmem>>, vector<128x64xbf16>,
    } else {
    }
    return
  }
  func.func @transform_0(%arg0: i32, %arg1: i32, %arg2: i32) -> (i32, i32) {
    %c0_i32 = arith.constant 0 : i32
    return %arg0, %arg2 : i32, i32
  }
  func.func @transform_1(%arg0: i32, %arg1: i32, %arg2: i32) -> (i32, i32) {
    %c0_i32 = arith.constant 0 : i32
    return %arg2, %arg1 : i32, i32
  }
  func.func @transform_2(%arg0: i32, %arg1: i32, %arg2: i32) -> (i32, i32) {
    %c0_i32 = arith.constant 0 : i32
    %c0_i32_0 = arith.constant 0 : i32
    return %c0_i32, %arg1 : i32, i32
  }
  func.func @transform_3(%arg0: i32, %arg1: i32, %arg2: i32) -> (i32, i32) {
    %c0_i32 = arith.constant 0 : i32
    return %arg0, %arg1 : i32, i32
  }
}

module attributes {stable_mosaic.version = 11 : i64} {
  func.func @_linear_kernel(%arg0: i32, %arg1: i32, %arg2: i32, %arg3: memref<16x32xbf16, #tpu.memory_space<vmem>>, %arg4: memref<32x96xbf16, #tpu.memory_space<vmem>>, %arg5: memref<1x96xf32, #tpu.memory_space<vmem>>, %arg6: memref<16x96xbf16, #tpu.memory_space<vmem>>, %arg7: memref<16x96xf32, #tpu.memory_space<vmem>>) attributes {dimension_semantics = [#tpu.dimension_semantics<parallel>, #tpu.dimension_semantics<parallel>, #tpu.dimension_semantics<arbitrary>], iteration_bounds = array<i64: 1, 1, 1>, scalar_prefetch = 0 : i64, scratch_operands = 1 : i64, tpu.core_type = #tpu.core_type<tc>, window_params = [{transform_indices = @transform_0, window_bounds = array<i64: 16, 32>}, {transform_indices = @transform_1, window_bounds = array<i64: 32, 96>}, {transform_indices = @transform_2, window_bounds = array<i64: 1, 96>}, {transform_indices = @transform_3, window_bounds = array<i64: 16, 96>}]} {
    %c0_i32 = arith.constant 0 : i32
    %0 = arith.cmpi eq, %arg2, %c0_i32 : i32
    %1 = arith.extui %0 : i1 to i32
    %c0_i32_0 = arith.constant 0 : i32
    %2 = arith.cmpi ne, %1, %c0_i32_0 : i32
    scf.if %2 {
      %cst_10 = arith.constant 0.000000e+00 : f32
      %12 = vector.broadcast %cst_10 : f32 to vector<16x96xf32>
      %c0_11 = arith.constant 0 : index
      %c0_12 = arith.constant 0 : index
      %13 = vector.load %arg7[%c0_11, %c0_12] : memref<16x96xf32, #tpu.memory_space<vmem>>, vector<16x96xf32>
      tpu.vector_store %arg7[%c0_11, %c0_12], %12 {strides = array<i32>} : memref<16x96xf32, #tpu.memory_space<vmem>>, vector<16x96xf32>,
    } else {
    }
    %c0 = arith.constant 0 : index
    %c0_1 = arith.constant 0 : index
    %3 = vector.load %arg7[%c0, %c0_1] : memref<16x96xf32, #tpu.memory_space<vmem>>, vector<16x96xf32>
    %c0_2 = arith.constant 0 : index
    %c0_3 = arith.constant 0 : index
    %4 = vector.load %arg3[%c0_2, %c0_3] : memref<16x32xbf16, #tpu.memory_space<vmem>>, vector<16x32xbf16>
    %c0_4 = arith.constant 0 : index
    %c0_5 = arith.constant 0 : index
    %5 = vector.load %arg4[%c0_4, %c0_5] : memref<32x96xbf16, #tpu.memory_space<vmem>>, vector<32x96xbf16>
    %cst = arith.constant dense<0.000000e+00> : vector<16x96xf32>
    %6 = tpu.matmul %4, %5, %cst {dimension_numbers = #tpu.dot_dimension_numbers<[1], [0], [0], [1], [0, 0, 1, 1], [], []>} : vector<16x32xbf16>, vector<32x96xbf16>, vector<16x96xf32> -> vector<16x96xf32>
    %7 = arith.addf %3, %6 : vector<16x96xf32>
    %c0_6 = arith.constant 0 : index
    %c0_7 = arith.constant 0 : index
    %8 = vector.load %arg7[%c0_6, %c0_7] : memref<16x96xf32, #tpu.memory_space<vmem>>, vector<16x96xf32>
    tpu.vector_store %arg7[%c0_6, %c0_7], %7 {strides = array<i32>} : memref<16x96xf32, #tpu.memory_space<vmem>>, vector<16x96xf32>,
    %c0_i32_8 = arith.constant 0 : i32
    %9 = arith.cmpi eq, %arg2, %c0_i32_8 : i32
    %10 = arith.extui %9 : i1 to i32
    %c0_i32_9 = arith.constant 0 : i32
    %11 = arith.cmpi ne, %10, %c0_i32_9 : i32
    scf.if %11 {
      %c0_10 = arith.constant 0 : index
      %c0_11 = arith.constant 0 : index
      %12 = vector.load %arg7[%c0_10, %c0_11] : memref<16x96xf32, #tpu.memory_space<vmem>>, vector<16x96xf32>
      %c0_12 = arith.constant 0 : index
      %c0_13 = arith.constant 0 : index
      %13 = vector.load %arg5[%c0_12, %c0_13] : memref<1x96xf32, #tpu.memory_space<vmem>>, vector<1x96xf32>
      %14 = vector.broadcast %13 : vector<1x96xf32> to vector<16x96xf32>
      %15 = arith.addf %12, %14 : vector<16x96xf32>
      %16 = arith.truncf %15 : vector<16x96xf32> to vector<16x96xbf16>
      %c0_14 = arith.constant 0 : index
      %c0_15 = arith.constant 0 : index
      %17 = vector.load %arg6[%c0_14, %c0_15] : memref<16x96xbf16, #tpu.memory_space<vmem>>, vector<16x96xbf16>
      tpu.vector_store %arg6[%c0_14, %c0_15], %16 {strides = array<i32>} : memref<16x96xbf16, #tpu.memory_space<vmem>>, vector<16x96xbf16>,
    } else {
    }
    return
  }
  func.func @transform_0(%arg0: i32, %arg1: i32, %arg2: i32) -> (i32, i32) {
    %c0_i32 = arith.constant 0 : i32
    return %arg0, %arg2 : i32, i32
  }
  func.func @transform_1(%arg0: i32, %arg1: i32, %arg2: i32) -> (i32, i32) {
    %c0_i32 = arith.constant 0 : i32
    return %arg2, %arg1 : i32, i32
  }
  func.func @transform_2(%arg0: i32, %arg1: i32, %arg2: i32) -> (i32, i32) {
    %c0_i32 = arith.constant 0 : i32
    %c0_i32_0 = arith.constant 0 : i32
    return %c0_i32, %arg1 : i32, i32
  }
  func.func @transform_3(%arg0: i32, %arg1: i32, %arg2: i32) -> (i32, i32) {
    %c0_i32 = arith.constant 0 : i32
    return %arg0, %arg1 : i32, i32
  }
}

module attributes {stable_mosaic.version = 11 : i64} {
  func.func @_rel_attn_kernel(%arg0: i32, %arg1: memref<2xi32, #tpu.memory_space<smem>>, %arg2: memref<1x8x96xbf16, #tpu.memory_space<vmem>>, %arg3: memref<128x32xbf16, #tpu.memory_space<vmem>>, %arg4: memref<4x8xf32, #tpu.memory_space<vmem>>, %arg5: memref<4x8xf32, #tpu.memory_space<vmem>>, %arg6: memref<1x8x32xbf16, #tpu.memory_space<vmem>>) attributes {dimension_semantics = [#tpu.dimension_semantics<parallel>], iteration_bounds = array<i64: 2>, scalar_prefetch = 1 : i64, scratch_operands = 0 : i64, tpu.core_type = #tpu.core_type<tc>, window_params = [{transform_indices = @transform_0, window_bounds = array<i64: 1, 8, 96>}, {pipeline_mode = #tpu.pipeline_mode<synchronous>, transform_indices = @transform_1, window_bounds = array<i64: 128, 32>}, {pipeline_mode = #tpu.pipeline_mode<synchronous>, transform_indices = @transform_2, window_bounds = array<i64: 4, 8>}, {pipeline_mode = #tpu.pipeline_mode<synchronous>, transform_indices = @transform_3, window_bounds = array<i64: 4, 8>}, {transform_indices = @transform_4, window_bounds = array<i64: 1, 8, 32>}]} {
    %0 = arith.index_cast %arg0 : i32 to index
    %1 = memref.load %arg1[%0] : memref<2xi32, #tpu.memory_space<smem>>
    %2 = tpu.iota {dimensions = array<i32: 0>} : vector<8x8xi32>
    %3 = tpu.iota {dimensions = array<i32: 1>} : vector<8x8xi32>
    %4 = arith.cmpi sgt, %3, %2 : vector<8x8xi32>
    %5 = vector.broadcast %1 : i32 to vector<8x8xi32>
    %6 = arith.cmpi sge, %3, %5 : vector<8x8xi32>
    %7 = arith.ori %4, %6 : vector<8x8xi1>
    %cst = arith.constant -1.000000e+30 : f32
    %cst_0 = arith.constant 0.000000e+00 : f32
    %8 = vector.broadcast %cst : f32 to vector<8x8xf32>
    %9 = vector.broadcast %cst_0 : f32 to vector<8x8xf32>
    %10 = arith.select %7, %8, %9 : vector<8x8xi1>, vector<8x8xf32>
    %c0 = arith.constant 0 : index
    %c0_1 = arith.constant 0 : index
    %c0_2 = arith.constant 0 : index
    %11 = vector.load %arg2[%c0, %c0_1, %c0_2] : memref<1x8x96xbf16, #tpu.memory_space<vmem>>, vector<1x8x8xbf16>
    %12 = vector.shape_cast %11 : vector<1x8x8xbf16> to vector<8x8xbf16>
    %13 = arith.extf %12 : vector<8x8xbf16> to vector<8x8xf32>
    %cst_3 = arith.constant 0.353553385 : f32
    %14 = vector.broadcast %cst_3 : f32 to vector<8x8xf32>
    %15 = arith.mulf %13, %14 : vector<8x8xf32>
    %c0_4 = arith.constant 0 : index
    %c0_5 = arith.constant 0 : index
    %16 = vector.load %arg4[%c0_4, %c0_5] : memref<4x8xf32, #tpu.memory_space<vmem>>, vector<1x8xf32>
    %17 = vector.broadcast %16 : vector<1x8xf32> to vector<8x8xf32>
    %18 = arith.addf %15, %17 : vector<8x8xf32>
    %19 = arith.truncf %18 : vector<8x8xf32> to vector<8x8xbf16>
    %c0_6 = arith.constant 0 : index
    %c0_7 = arith.constant 0 : index
    %20 = vector.load %arg5[%c0_6, %c0_7] : memref<4x8xf32, #tpu.memory_space<vmem>>, vector<1x8xf32>
    %21 = vector.broadcast %20 : vector<1x8xf32> to vector<8x8xf32>
    %22 = arith.addf %15, %21 : vector<8x8xf32>
    %23 = arith.truncf %22 : vector<8x8xf32> to vector<8x8xbf16>
    %c0_8 = arith.constant 0 : index
    %c0_9 = arith.constant 0 : index
    %c32 = arith.constant 32 : index
    %24 = vector.load %arg2[%c0_8, %c0_9, %c32] : memref<1x8x96xbf16, #tpu.memory_space<vmem>>, vector<1x8x8xbf16>
    %25 = vector.shape_cast %24 : vector<1x8x8xbf16> to vector<8x8xbf16>
    %c0_10 = arith.constant 0 : index
    %c0_11 = arith.constant 0 : index
    %c64 = arith.constant 64 : index
    %26 = vector.load %arg2[%c0_10, %c0_11, %c64] : memref<1x8x96xbf16, #tpu.memory_space<vmem>>, vector<1x8x8xbf16>
    %27 = vector.shape_cast %26 : vector<1x8x8xbf16> to vector<8x8xbf16>
    %c0_12 = arith.constant 0 : index
    %c0_13 = arith.constant 0 : index
    %28 = vector.load %arg3[%c0_12, %c0_13] : memref<128x32xbf16, #tpu.memory_space<vmem>>, vector<128x8xbf16>
    %cst_14 = arith.constant dense<0.000000e+00> : vector<8x8xf32>
    %29 = tpu.matmul %19, %25, %cst_14 {dimension_numbers = #tpu.dot_dimension_numbers<[1], [1], [0], [0], [0, 0, 1, 0], [], []>} : vector<8x8xbf16>, vector<8x8xbf16>, vector<8x8xf32> -> vector<8x8xf32>
    %cst_15 = arith.constant dense<0.000000e+00> : vector<8x128xf32>
    %30 = tpu.matmul %23, %28, %cst_15 {dimension_numbers = #tpu.dot_dimension_numbers<[1], [1], [0], [0], [0, 0, 1, 0], [], []>} : vector<8x8xbf16>, vector<128x8xbf16>, vector<8x128xf32> -> vector<8x128xf32>
    %c121_i32 = arith.constant 121 : i32
    %31 = tpu.dynamic_rotate %30 by %c121_i32 dim 1 {stride = 1 : si32, stride_dimension = 0 : si32} : vector<8x128xf32>, i32 -> vector<8x128xf32>
    %32 = vector.extract_strided_slice %31 {offsets = [0, 0], sizes = [8, 8], strides = [1, 1]} : vector<8x128xf32> to vector<8x8xf32>
    %33 = arith.addf %29, %32 : vector<8x8xf32>
    %34 = arith.addf %33, %10 : vector<8x8xf32>
    %cst_16 = arith.constant dense<0xFF800000> : vector<8xf32>
    %35 = vector.multi_reduction <maximumf>, %34, %cst_16 [1] : vector<8x8xf32> to vector<8xf32>
    %36 = vector.shape_cast %35 : vector<8xf32> to vector<8x1xf32>
    %37 = vector.broadcast %36 : vector<8x1xf32> to vector<8x8xf32>
    %38 = arith.subf %34, %37 : vector<8x8xf32>
    %39 = math.exp %38 : vector<8x8xf32>
    %cst_17 = arith.constant dense<0.000000e+00> : vector<8xf32>
    %40 = vector.multi_reduction <add>, %39, %cst_17 [1] : vector<8x8xf32> to vector<8xf32>
    %41 = vector.shape_cast %40 : vector<8xf32> to vector<8x1xf32>
    %42 = tpu.reciprocal %41 {approx = true} : vector<8x1xf32> -> vector<8x1xf32>
    %43 = vector.broadcast %42 : vector<8x1xf32> to vector<8x8xf32>
    %44 = arith.mulf %39, %43 : vector<8x8xf32>
    %45 = arith.truncf %44 : vector<8x8xf32> to vector<8x8xbf16>
    %cst_18 = arith.constant dense<0.000000e+00> : vector<8x8xf32>
    %46 = tpu.matmul %45, %27, %cst_18 {dimension_numbers = #tpu.dot_dimension_numbers<[1], [0], [0], [1], [0, 0, 1, 1], [], []>} : vector<8x8xbf16>, vector<8x8xbf16>, vector<8x8xf32> -> vector<8x8xf32>
    %47 = arith.truncf %46 : vector<8x8xf32> to vector<8x8xbf16>
    %c0_19 = arith.constant 0 : index
    %c0_20 = arith.constant 0 : index
    %c0_21 = arith.constant 0 : index
    %48 = vector.load %arg6[%c0_19, %c0_20, %c0_21] : memref<1x8x32xbf16, #tpu.memory_space<vmem>>, vector<1x8x8xbf16>
    %49 = vector.shape_cast %48 : vector<1x8x8xbf16> to vector<8x8xbf16>
    %50 = vector.shape_cast %47 : vector<8x8xbf16> to vector<1x8x8xbf16>
    tpu.vector_store %arg6[%c0_19, %c0_20, %c0_21], %50 {strides = array<i32>} : memref<1x8x32xbf16, #tpu.memory_space<vmem>>, vector<1x8x8xbf16>,
    %c0_22 = arith.constant 0 : index
    %c0_23 = arith.constant 0 : index
    %c8 = arith.constant 8 : index
    %51 = vector.load %arg2[%c0_22, %c0_23, %c8] : memref<1x8x96xbf16, #tpu.memory_space<vmem>>, vector<1x8x8xbf16>
    %52 = vector.shape_cast %51 : vector<1x8x8xbf16> to vector<8x8xbf16>
    %53 = arith.extf %52 : vector<8x8xbf16> to vector<8x8xf32>
    %cst_24 = arith.constant 0.353553385 : f32
    %54 = vector.broadcast %cst_24 : f32 to vector<8x8xf32>
    %55 = arith.mulf %53, %54 : vector<8x8xf32>
    %c1 = arith.constant 1 : index
    %c0_25 = arith.constant 0 : index
    %56 = vector.load %arg4[%c1, %c0_25] : memref<4x8xf32, #tpu.memory_space<vmem>>, vector<1x8xf32>
    %57 = vector.broadcast %56 : vector<1x8xf32> to vector<8x8xf32>
    %58 = arith.addf %55, %57 : vector<8x8xf32>
    %59 = arith.truncf %58 : vector<8x8xf32> to vector<8x8xbf16>
    %c1_26 = arith.constant 1 : index
    %c0_27 = arith.constant 0 : index
    %60 = vector.load %arg5[%c1_26, %c0_27] : memref<4x8xf32, #tpu.memory_space<vmem>>, vector<1x8xf32>
    %61 = vector.broadcast %60 : vector<1x8xf32> to vector<8x8xf32>
    %62 = arith.addf %55, %61 : vector<8x8xf32>
    %63 = arith.truncf %62 : vector<8x8xf32> to vector<8x8xbf16>
    %c0_28 = arith.constant 0 : index
    %c0_29 = arith.constant 0 : index
    %c40 = arith.constant 40 : index
    %64 = vector.load %arg2[%c0_28, %c0_29, %c40] : memref<1x8x96xbf16, #tpu.memory_space<vmem>>, vector<1x8x8xbf16>
    %65 = vector.shape_cast %64 : vector<1x8x8xbf16> to vector<8x8xbf16>
    %c0_30 = arith.constant 0 : index
    %c0_31 = arith.constant 0 : index
    %c72 = arith.constant 72 : index
    %66 = vector.load %arg2[%c0_30, %c0_31, %c72] : memref<1x8x96xbf16, #tpu.memory_space<vmem>>, vector<1x8x8xbf16>
    %67 = vector.shape_cast %66 : vector<1x8x8xbf16> to vector<8x8xbf16>
    %c0_32 = arith.constant 0 : index
    %c8_33 = arith.constant 8 : index
    %68 = vector.load %arg3[%c0_32, %c8_33] : memref<128x32xbf16, #tpu.memory_space<vmem>>, vector<128x8xbf16>
    %cst_34 = arith.constant dense<0.000000e+00> : vector<8x8xf32>
    %69 = tpu.matmul %59, %65, %cst_34 {dimension_numbers = #tpu.dot_dimension_numbers<[1], [1], [0], [0], [0, 0, 1, 0], [], []>} : vector<8x8xbf16>, vector<8x8xbf16>, vector<8x8xf32> -> vector<8x8xf32>
    %cst_35 = arith.constant dense<0.000000e+00> : vector<8x128xf32>
    %70 = tpu.matmul %63, %68, %cst_35 {dimension_numbers = #tpu.dot_dimension_numbers<[1], [1], [0], [0], [0, 0, 1, 0], [], []>} : vector<8x8xbf16>, vector<128x8xbf16>, vector<8x128xf32> -> vector<8x128xf32>
    %c121_i32_36 = arith.constant 121 : i32
    %71 = tpu.dynamic_rotate %70 by %c121_i32_36 dim 1 {stride = 1 : si32, stride_dimension = 0 : si32} : vector<8x128xf32>, i32 -> vector<8x128xf32>
    %72 = vector.extract_strided_slice %71 {offsets = [0, 0], sizes = [8, 8], strides = [1, 1]} : vector<8x128xf32> to vector<8x8xf32>
    %73 = arith.addf %69, %72 : vector<8x8xf32>
    %74 = arith.addf %73, %10 : vector<8x8xf32>
    %cst_37 = arith.constant dense<0xFF800000> : vector<8xf32>
    %75 = vector.multi_reduction <maximumf>, %74, %cst_37 [1] : vector<8x8xf32> to vector<8xf32>
    %76 = vector.shape_cast %75 : vector<8xf32> to vector<8x1xf32>
    %77 = vector.broadcast %76 : vector<8x1xf32> to vector<8x8xf32>
    %78 = arith.subf %74, %77 : vector<8x8xf32>
    %79 = math.exp %78 : vector<8x8xf32>
    %cst_38 = arith.constant dense<0.000000e+00> : vector<8xf32>
    %80 = vector.multi_reduction <add>, %79, %cst_38 [1] : vector<8x8xf32> to vector<8xf32>
    %81 = vector.shape_cast %80 : vector<8xf32> to vector<8x1xf32>
    %82 = tpu.reciprocal %81 {approx = true} : vector<8x1xf32> -> vector<8x1xf32>
    %83 = vector.broadcast %82 : vector<8x1xf32> to vector<8x8xf32>
    %84 = arith.mulf %79, %83 : vector<8x8xf32>
    %85 = arith.truncf %84 : vector<8x8xf32> to vector<8x8xbf16>
    %cst_39 = arith.constant dense<0.000000e+00> : vector<8x8xf32>
    %86 = tpu.matmul %85, %67, %cst_39 {dimension_numbers = #tpu.dot_dimension_numbers<[1], [0], [0], [1], [0, 0, 1, 1], [], []>} : vector<8x8xbf16>, vector<8x8xbf16>, vector<8x8xf32> -> vector<8x8xf32>
    %87 = arith.truncf %86 : vector<8x8xf32> to vector<8x8xbf16>
    %c0_40 = arith.constant 0 : index
    %c0_41 = arith.constant 0 : index
    %c8_42 = arith.constant 8 : index
    %88 = vector.load %arg6[%c0_40, %c0_41, %c8_42] : memref<1x8x32xbf16, #tpu.memory_space<vmem>>, vector<1x8x8xbf16>
    %89 = vector.shape_cast %88 : vector<1x8x8xbf16> to vector<8x8xbf16>
    %90 = vector.shape_cast %87 : vector<8x8xbf16> to vector<1x8x8xbf16>
    tpu.vector_store %arg6[%c0_40, %c0_41, %c8_42], %90 {strides = array<i32>} : memref<1x8x32xbf16, #tpu.memory_space<vmem>>, vector<1x8x8xbf16>,
    %c0_43 = arith.constant 0 : index
    %c0_44 = arith.constant 0 : index
    %c16 = arith.constant 16 : index
    %91 = vector.load %arg2[%c0_43, %c0_44, %c16] : memref<1x8x96xbf16, #tpu.memory_space<vmem>>, vector<1x8x8xbf16>
    %92 = vector.shape_cast %91 : vector<1x8x8xbf16> to vector<8x8xbf16>
    %93 = arith.extf %92 : vector<8x8xbf16> to vector<8x8xf32>
    %cst_45 = arith.constant 0.353553385 : f32
    %94 = vector.broadcast %cst_45 : f32 to vector<8x8xf32>
    %95 = arith.mulf %93, %94 : vector<8x8xf32>
    %c2 = arith.constant 2 : index
    %c0_46 = arith.constant 0 : index
    %96 = vector.load %arg4[%c2, %c0_46] : memref<4x8xf32, #tpu.memory_space<vmem>>, vector<1x8xf32>
    %97 = vector.broadcast %96 : vector<1x8xf32> to vector<8x8xf32>
    %98 = arith.addf %95, %97 : vector<8x8xf32>
    %99 = arith.truncf %98 : vector<8x8xf32> to vector<8x8xbf16>
    %c2_47 = arith.constant 2 : index
    %c0_48 = arith.constant 0 : index
    %100 = vector.load %arg5[%c2_47, %c0_48] : memref<4x8xf32, #tpu.memory_space<vmem>>, vector<1x8xf32>
    %101 = vector.broadcast %100 : vector<1x8xf32> to vector<8x8xf32>
    %102 = arith.addf %95, %101 : vector<8x8xf32>
    %103 = arith.truncf %102 : vector<8x8xf32> to vector<8x8xbf16>
    %c0_49 = arith.constant 0 : index
    %c0_50 = arith.constant 0 : index
    %c48 = arith.constant 48 : index
    %104 = vector.load %arg2[%c0_49, %c0_50, %c48] : memref<1x8x96xbf16, #tpu.memory_space<vmem>>, vector<1x8x8xbf16>
    %105 = vector.shape_cast %104 : vector<1x8x8xbf16> to vector<8x8xbf16>
    %c0_51 = arith.constant 0 : index
    %c0_52 = arith.constant 0 : index
    %c80 = arith.constant 80 : index
    %106 = vector.load %arg2[%c0_51, %c0_52, %c80] : memref<1x8x96xbf16, #tpu.memory_space<vmem>>, vector<1x8x8xbf16>
    %107 = vector.shape_cast %106 : vector<1x8x8xbf16> to vector<8x8xbf16>
    %c0_53 = arith.constant 0 : index
    %c16_54 = arith.constant 16 : index
    %108 = vector.load %arg3[%c0_53, %c16_54] : memref<128x32xbf16, #tpu.memory_space<vmem>>, vector<128x8xbf16>
    %cst_55 = arith.constant dense<0.000000e+00> : vector<8x8xf32>
    %109 = tpu.matmul %99, %105, %cst_55 {dimension_numbers = #tpu.dot_dimension_numbers<[1], [1], [0], [0], [0, 0, 1, 0], [], []>} : vector<8x8xbf16>, vector<8x8xbf16>, vector<8x8xf32> -> vector<8x8xf32>
    %cst_56 = arith.constant dense<0.000000e+00> : vector<8x128xf32>
    %110 = tpu.matmul %103, %108, %cst_56 {dimension_numbers = #tpu.dot_dimension_numbers<[1], [1], [0], [0], [0, 0, 1, 0], [], []>} : vector<8x8xbf16>, vector<128x8xbf16>, vector<8x128xf32> -> vector<8x128xf32>
    %c121_i32_57 = arith.constant 121 : i32
    %111 = tpu.dynamic_rotate %110 by %c121_i32_57 dim 1 {stride = 1 : si32, stride_dimension = 0 : si32} : vector<8x128xf32>, i32 -> vector<8x128xf32>
    %112 = vector.extract_strided_slice %111 {offsets = [0, 0], sizes = [8, 8], strides = [1, 1]} : vector<8x128xf32> to vector<8x8xf32>
    %113 = arith.addf %109, %112 : vector<8x8xf32>
    %114 = arith.addf %113, %10 : vector<8x8xf32>
    %cst_58 = arith.constant dense<0xFF800000> : vector<8xf32>
    %115 = vector.multi_reduction <maximumf>, %114, %cst_58 [1] : vector<8x8xf32> to vector<8xf32>
    %116 = vector.shape_cast %115 : vector<8xf32> to vector<8x1xf32>
    %117 = vector.broadcast %116 : vector<8x1xf32> to vector<8x8xf32>
    %118 = arith.subf %114, %117 : vector<8x8xf32>
    %119 = math.exp %118 : vector<8x8xf32>
    %cst_59 = arith.constant dense<0.000000e+00> : vector<8xf32>
    %120 = vector.multi_reduction <add>, %119, %cst_59 [1] : vector<8x8xf32> to vector<8xf32>
    %121 = vector.shape_cast %120 : vector<8xf32> to vector<8x1xf32>
    %122 = tpu.reciprocal %121 {approx = true} : vector<8x1xf32> -> vector<8x1xf32>
    %123 = vector.broadcast %122 : vector<8x1xf32> to vector<8x8xf32>
    %124 = arith.mulf %119, %123 : vector<8x8xf32>
    %125 = arith.truncf %124 : vector<8x8xf32> to vector<8x8xbf16>
    %cst_60 = arith.constant dense<0.000000e+00> : vector<8x8xf32>
    %126 = tpu.matmul %125, %107, %cst_60 {dimension_numbers = #tpu.dot_dimension_numbers<[1], [0], [0], [1], [0, 0, 1, 1], [], []>} : vector<8x8xbf16>, vector<8x8xbf16>, vector<8x8xf32> -> vector<8x8xf32>
    %127 = arith.truncf %126 : vector<8x8xf32> to vector<8x8xbf16>
    %c0_61 = arith.constant 0 : index
    %c0_62 = arith.constant 0 : index
    %c16_63 = arith.constant 16 : index
    %128 = vector.load %arg6[%c0_61, %c0_62, %c16_63] : memref<1x8x32xbf16, #tpu.memory_space<vmem>>, vector<1x8x8xbf16>
    %129 = vector.shape_cast %128 : vector<1x8x8xbf16> to vector<8x8xbf16>
    %130 = vector.shape_cast %127 : vector<8x8xbf16> to vector<1x8x8xbf16>
    tpu.vector_store %arg6[%c0_61, %c0_62, %c16_63], %130 {strides = array<i32>} : memref<1x8x32xbf16, #tpu.memory_space<vmem>>, vector<1x8x8xbf16>,
    %c0_64 = arith.constant 0 : index
    %c0_65 = arith.constant 0 : index
    %c24 = arith.constant 24 : index
    %131 = vector.load %arg2[%c0_64, %c0_65, %c24] : memref<1x8x96xbf16, #tpu.memory_space<vmem>>, vector<1x8x8xbf16>
    %132 = vector.shape_cast %131 : vector<1x8x8xbf16> to vector<8x8xbf16>
    %133 = arith.extf %132 : vector<8x8xbf16> to vector<8x8xf32>
    %cst_66 = arith.constant 0.353553385 : f32
    %134 = vector.broadcast %cst_66 : f32 to vector<8x8xf32>
    %135 = arith.mulf %133, %134 : vector<8x8xf32>
    %c3 = arith.constant 3 : index
    %c0_67 = arith.constant 0 : index
    %136 = vector.load %arg4[%c3, %c0_67] : memref<4x8xf32, #tpu.memory_space<vmem>>, vector<1x8xf32>
    %137 = vector.broadcast %136 : vector<1x8xf32> to vector<8x8xf32>
    %138 = arith.addf %135, %137 : vector<8x8xf32>
    %139 = arith.truncf %138 : vector<8x8xf32> to vector<8x8xbf16>
    %c3_68 = arith.constant 3 : index
    %c0_69 = arith.constant 0 : index
    %140 = vector.load %arg5[%c3_68, %c0_69] : memref<4x8xf32, #tpu.memory_space<vmem>>, vector<1x8xf32>
    %141 = vector.broadcast %140 : vector<1x8xf32> to vector<8x8xf32>
    %142 = arith.addf %135, %141 : vector<8x8xf32>
    %143 = arith.truncf %142 : vector<8x8xf32> to vector<8x8xbf16>
    %c0_70 = arith.constant 0 : index
    %c0_71 = arith.constant 0 : index
    %c56 = arith.constant 56 : index
    %144 = vector.load %arg2[%c0_70, %c0_71, %c56] : memref<1x8x96xbf16, #tpu.memory_space<vmem>>, vector<1x8x8xbf16>
    %145 = vector.shape_cast %144 : vector<1x8x8xbf16> to vector<8x8xbf16>
    %c0_72 = arith.constant 0 : index
    %c0_73 = arith.constant 0 : index
    %c88 = arith.constant 88 : index
    %146 = vector.load %arg2[%c0_72, %c0_73, %c88] : memref<1x8x96xbf16, #tpu.memory_space<vmem>>, vector<1x8x8xbf16>
    %147 = vector.shape_cast %146 : vector<1x8x8xbf16> to vector<8x8xbf16>
    %c0_74 = arith.constant 0 : index
    %c24_75 = arith.constant 24 : index
    %148 = vector.load %arg3[%c0_74, %c24_75] : memref<128x32xbf16, #tpu.memory_space<vmem>>, vector<128x8xbf16>
    %cst_76 = arith.constant dense<0.000000e+00> : vector<8x8xf32>
    %149 = tpu.matmul %139, %145, %cst_76 {dimension_numbers = #tpu.dot_dimension_numbers<[1], [1], [0], [0], [0, 0, 1, 0], [], []>} : vector<8x8xbf16>, vector<8x8xbf16>, vector<8x8xf32> -> vector<8x8xf32>
    %cst_77 = arith.constant dense<0.000000e+00> : vector<8x128xf32>
    %150 = tpu.matmul %143, %148, %cst_77 {dimension_numbers = #tpu.dot_dimension_numbers<[1], [1], [0], [0], [0, 0, 1, 0], [], []>} : vector<8x8xbf16>, vector<128x8xbf16>, vector<8x128xf32> -> vector<8x128xf32>
    %c121_i32_78 = arith.constant 121 : i32
    %151 = tpu.dynamic_rotate %150 by %c121_i32_78 dim 1 {stride = 1 : si32, stride_dimension = 0 : si32} : vector<8x128xf32>, i32 -> vector<8x128xf32>
    %152 = vector.extract_strided_slice %151 {offsets = [0, 0], sizes = [8, 8], strides = [1, 1]} : vector<8x128xf32> to vector<8x8xf32>
    %153 = arith.addf %149, %152 : vector<8x8xf32>
    %154 = arith.addf %153, %10 : vector<8x8xf32>
    %cst_79 = arith.constant dense<0xFF800000> : vector<8xf32>
    %155 = vector.multi_reduction <maximumf>, %154, %cst_79 [1] : vector<8x8xf32> to vector<8xf32>
    %156 = vector.shape_cast %155 : vector<8xf32> to vector<8x1xf32>
    %157 = vector.broadcast %156 : vector<8x1xf32> to vector<8x8xf32>
    %158 = arith.subf %154, %157 : vector<8x8xf32>
    %159 = math.exp %158 : vector<8x8xf32>
    %cst_80 = arith.constant dense<0.000000e+00> : vector<8xf32>
    %160 = vector.multi_reduction <add>, %159, %cst_80 [1] : vector<8x8xf32> to vector<8xf32>
    %161 = vector.shape_cast %160 : vector<8xf32> to vector<8x1xf32>
    %162 = tpu.reciprocal %161 {approx = true} : vector<8x1xf32> -> vector<8x1xf32>
    %163 = vector.broadcast %162 : vector<8x1xf32> to vector<8x8xf32>
    %164 = arith.mulf %159, %163 : vector<8x8xf32>
    %165 = arith.truncf %164 : vector<8x8xf32> to vector<8x8xbf16>
    %cst_81 = arith.constant dense<0.000000e+00> : vector<8x8xf32>
    %166 = tpu.matmul %165, %147, %cst_81 {dimension_numbers = #tpu.dot_dimension_numbers<[1], [0], [0], [1], [0, 0, 1, 1], [], []>} : vector<8x8xbf16>, vector<8x8xbf16>, vector<8x8xf32> -> vector<8x8xf32>
    %167 = arith.truncf %166 : vector<8x8xf32> to vector<8x8xbf16>
    %c0_82 = arith.constant 0 : index
    %c0_83 = arith.constant 0 : index
    %c24_84 = arith.constant 24 : index
    %168 = vector.load %arg6[%c0_82, %c0_83, %c24_84] : memref<1x8x32xbf16, #tpu.memory_space<vmem>>, vector<1x8x8xbf16>
    %169 = vector.shape_cast %168 : vector<1x8x8xbf16> to vector<8x8xbf16>
    %170 = vector.shape_cast %167 : vector<8x8xbf16> to vector<1x8x8xbf16>
    tpu.vector_store %arg6[%c0_82, %c0_83, %c24_84], %170 {strides = array<i32>} : memref<1x8x32xbf16, #tpu.memory_space<vmem>>, vector<1x8x8xbf16>,
    return
  }
  func.func @transform_0(%arg0: i32, %arg1: memref<2xi32, #tpu.memory_space<smem>>) -> (i32, i32, i32) {
    %c0_i32 = arith.constant 0 : i32
    %c0_i32_0 = arith.constant 0 : i32
    %c0_i32_1 = arith.constant 0 : i32
    return %arg0, %c0_i32, %c0_i32_0 : i32, i32, i32
  }
  func.func @transform_1(%arg0: i32, %arg1: memref<2xi32, #tpu.memory_space<smem>>) -> (i32, i32) {
    %c0_i32 = arith.constant 0 : i32
    %c0_i32_0 = arith.constant 0 : i32
    %c0_i32_1 = arith.constant 0 : i32
    return %c0_i32, %c0_i32_0 : i32, i32
  }
  func.func @transform_2(%arg0: i32, %arg1: memref<2xi32, #tpu.memory_space<smem>>) -> (i32, i32) {
    %c0_i32 = arith.constant 0 : i32
    %c0_i32_0 = arith.constant 0 : i32
    %c0_i32_1 = arith.constant 0 : i32
    return %c0_i32, %c0_i32_0 : i32, i32
  }
  func.func @transform_3(%arg0: i32, %arg1: memref<2xi32, #tpu.memory_space<smem>>) -> (i32, i32) {
    %c0_i32 = arith.constant 0 : i32
    %c0_i32_0 = arith.constant 0 : i32
    %c0_i32_1 = arith.constant 0 : i32
    return %c0_i32, %c0_i32_0 : i32, i32
  }
  func.func @transform_4(%arg0: i32, %arg1: memref<2xi32, #tpu.memory_space<smem>>) -> (i32, i32, i32) {
    %c0_i32 = arith.constant 0 : i32
    %c0_i32_0 = arith.constant 0 : i32
    %c0_i32_1 = arith.constant 0 : i32
    return %arg0, %c0_i32, %c0_i32_0 : i32, i32, i32
  }
}

module attributes {stable_mosaic.version = 11 : i64} {
  func.func @_linear_kernel(%arg0: i32, %arg1: i32, %arg2: i32, %arg3: memref<16x32xbf16, #tpu.memory_space<vmem>>, %arg4: memref<32x32xbf16, #tpu.memory_space<vmem>>, %arg5: memref<1x32xf32, #tpu.memory_space<vmem>>, %arg6: memref<16x32xbf16, #tpu.memory_space<vmem>>, %arg7: memref<16x32xbf16, #tpu.memory_space<vmem>>, %arg8: memref<16x32xf32, #tpu.memory_space<vmem>>) attributes {dimension_semantics = [#tpu.dimension_semantics<parallel>, #tpu.dimension_semantics<parallel>, #tpu.dimension_semantics<arbitrary>], iteration_bounds = array<i64: 1, 1, 1>, scalar_prefetch = 0 : i64, scratch_operands = 1 : i64, tpu.core_type = #tpu.core_type<tc>, window_params = [{transform_indices = @transform_0, window_bounds = array<i64: 16, 32>}, {transform_indices = @transform_1, window_bounds = array<i64: 32, 32>}, {transform_indices = @transform_2, window_bounds = array<i64: 1, 32>}, {transform_indices = @transform_3, window_bounds = array<i64: 16, 32>}, {transform_indices = @transform_4, window_bounds = array<i64: 16, 32>}]} {
    %c0_i32 = arith.constant 0 : i32
    %0 = arith.cmpi eq, %arg2, %c0_i32 : i32
    %1 = arith.extui %0 : i1 to i32
    %c0_i32_0 = arith.constant 0 : i32
    %2 = arith.cmpi ne, %1, %c0_i32_0 : i32
    scf.if %2 {
      %cst_10 = arith.constant 0.000000e+00 : f32
      %12 = vector.broadcast %cst_10 : f32 to vector<16x32xf32>
      %c0_11 = arith.constant 0 : index
      %c0_12 = arith.constant 0 : index
      %13 = vector.load %arg8[%c0_11, %c0_12] : memref<16x32xf32, #tpu.memory_space<vmem>>, vector<16x32xf32>
      tpu.vector_store %arg8[%c0_11, %c0_12], %12 {strides = array<i32>} : memref<16x32xf32, #tpu.memory_space<vmem>>, vector<16x32xf32>,
    } else {
    }
    %c0 = arith.constant 0 : index
    %c0_1 = arith.constant 0 : index
    %3 = vector.load %arg8[%c0, %c0_1] : memref<16x32xf32, #tpu.memory_space<vmem>>, vector<16x32xf32>
    %c0_2 = arith.constant 0 : index
    %c0_3 = arith.constant 0 : index
    %4 = vector.load %arg3[%c0_2, %c0_3] : memref<16x32xbf16, #tpu.memory_space<vmem>>, vector<16x32xbf16>
    %c0_4 = arith.constant 0 : index
    %c0_5 = arith.constant 0 : index
    %5 = vector.load %arg4[%c0_4, %c0_5] : memref<32x32xbf16, #tpu.memory_space<vmem>>, vector<32x32xbf16>
    %cst = arith.constant dense<0.000000e+00> : vector<16x32xf32>
    %6 = tpu.matmul %4, %5, %cst {dimension_numbers = #tpu.dot_dimension_numbers<[1], [0], [0], [1], [0, 0, 1, 1], [], []>} : vector<16x32xbf16>, vector<32x32xbf16>, vector<16x32xf32> -> vector<16x32xf32>
    %7 = arith.addf %3, %6 : vector<16x32xf32>
    %c0_6 = arith.constant 0 : index
    %c0_7 = arith.constant 0 : index
    %8 = vector.load %arg8[%c0_6, %c0_7] : memref<16x32xf32, #tpu.memory_space<vmem>>, vector<16x32xf32>
    tpu.vector_store %arg8[%c0_6, %c0_7], %7 {strides = array<i32>} : memref<16x32xf32, #tpu.memory_space<vmem>>, vector<16x32xf32>,
    %c0_i32_8 = arith.constant 0 : i32
    %9 = arith.cmpi eq, %arg2, %c0_i32_8 : i32
    %10 = arith.extui %9 : i1 to i32
    %c0_i32_9 = arith.constant 0 : i32
    %11 = arith.cmpi ne, %10, %c0_i32_9 : i32
    scf.if %11 {
      %c0_10 = arith.constant 0 : index
      %c0_11 = arith.constant 0 : index
      %12 = vector.load %arg8[%c0_10, %c0_11] : memref<16x32xf32, #tpu.memory_space<vmem>>, vector<16x32xf32>
      %c0_12 = arith.constant 0 : index
      %c0_13 = arith.constant 0 : index
      %13 = vector.load %arg5[%c0_12, %c0_13] : memref<1x32xf32, #tpu.memory_space<vmem>>, vector<1x32xf32>
      %14 = vector.broadcast %13 : vector<1x32xf32> to vector<16x32xf32>
      %15 = arith.addf %12, %14 : vector<16x32xf32>
      %c0_14 = arith.constant 0 : index
      %c0_15 = arith.constant 0 : index
      %16 = vector.load %arg6[%c0_14, %c0_15] : memref<16x32xbf16, #tpu.memory_space<vmem>>, vector<16x32xbf16>
      %17 = arith.extf %16 : vector<16x32xbf16> to vector<16x32xf32>
      %18 = arith.addf %15, %17 : vector<16x32xf32>
      %19 = arith.truncf %18 : vector<16x32xf32> to vector<16x32xbf16>
      %c0_16 = arith.constant 0 : index
      %c0_17 = arith.constant 0 : index
      %20 = vector.load %arg7[%c0_16, %c0_17] : memref<16x32xbf16, #tpu.memory_space<vmem>>, vector<16x32xbf16>
      tpu.vector_store %arg7[%c0_16, %c0_17], %19 {strides = array<i32>} : memref<16x32xbf16, #tpu.memory_space<vmem>>, vector<16x32xbf16>,
    } else {
    }
    return
  }
  func.func @transform_0(%arg0: i32, %arg1: i32, %arg2: i32) -> (i32, i32) {
    %c0_i32 = arith.constant 0 : i32
    return %arg0, %arg2 : i32, i32
  }
  func.func @transform_1(%arg0: i32, %arg1: i32, %arg2: i32) -> (i32, i32) {
    %c0_i32 = arith.constant 0 : i32
    return %arg2, %arg1 : i32, i32
  }
  func.func @transform_2(%arg0: i32, %arg1: i32, %arg2: i32) -> (i32, i32) {
    %c0_i32 = arith.constant 0 : i32
    %c0_i32_0 = arith.constant 0 : i32
    return %c0_i32, %arg1 : i32, i32
  }
  func.func @transform_3(%arg0: i32, %arg1: i32, %arg2: i32) -> (i32, i32) {
    %c0_i32 = arith.constant 0 : i32
    return %arg0, %arg1 : i32, i32
  }
  func.func @transform_4(%arg0: i32, %arg1: i32, %arg2: i32) -> (i32, i32) {
    %c0_i32 = arith.constant 0 : i32
    return %arg0, %arg1 : i32, i32
  }
}

module attributes {stable_mosaic.version = 11 : i64} {
  func.func @_linear_kernel(%arg0: i32, %arg1: i32, %arg2: i32, %arg3: memref<16x32xbf16, #tpu.memory_space<vmem>>, %arg4: memref<32x64xbf16, #tpu.memory_space<vmem>>, %arg5: memref<1x64xf32, #tpu.memory_space<vmem>>, %arg6: memref<16x64xbf16, #tpu.memory_space<vmem>>, %arg7: memref<16x64xf32, #tpu.memory_space<vmem>>) attributes {dimension_semantics = [#tpu.dimension_semantics<parallel>, #tpu.dimension_semantics<parallel>, #tpu.dimension_semantics<arbitrary>], iteration_bounds = array<i64: 1, 1, 1>, scalar_prefetch = 0 : i64, scratch_operands = 1 : i64, tpu.core_type = #tpu.core_type<tc>, window_params = [{transform_indices = @transform_0, window_bounds = array<i64: 16, 32>}, {transform_indices = @transform_1, window_bounds = array<i64: 32, 64>}, {transform_indices = @transform_2, window_bounds = array<i64: 1, 64>}, {transform_indices = @transform_3, window_bounds = array<i64: 16, 64>}]} {
    %c0_i32 = arith.constant 0 : i32
    %0 = arith.cmpi eq, %arg2, %c0_i32 : i32
    %1 = arith.extui %0 : i1 to i32
    %c0_i32_0 = arith.constant 0 : i32
    %2 = arith.cmpi ne, %1, %c0_i32_0 : i32
    scf.if %2 {
      %cst_10 = arith.constant 0.000000e+00 : f32
      %12 = vector.broadcast %cst_10 : f32 to vector<16x64xf32>
      %c0_11 = arith.constant 0 : index
      %c0_12 = arith.constant 0 : index
      %13 = vector.load %arg7[%c0_11, %c0_12] : memref<16x64xf32, #tpu.memory_space<vmem>>, vector<16x64xf32>
      tpu.vector_store %arg7[%c0_11, %c0_12], %12 {strides = array<i32>} : memref<16x64xf32, #tpu.memory_space<vmem>>, vector<16x64xf32>,
    } else {
    }
    %c0 = arith.constant 0 : index
    %c0_1 = arith.constant 0 : index
    %3 = vector.load %arg7[%c0, %c0_1] : memref<16x64xf32, #tpu.memory_space<vmem>>, vector<16x64xf32>
    %c0_2 = arith.constant 0 : index
    %c0_3 = arith.constant 0 : index
    %4 = vector.load %arg3[%c0_2, %c0_3] : memref<16x32xbf16, #tpu.memory_space<vmem>>, vector<16x32xbf16>
    %c0_4 = arith.constant 0 : index
    %c0_5 = arith.constant 0 : index
    %5 = vector.load %arg4[%c0_4, %c0_5] : memref<32x64xbf16, #tpu.memory_space<vmem>>, vector<32x64xbf16>
    %cst = arith.constant dense<0.000000e+00> : vector<16x64xf32>
    %6 = tpu.matmul %4, %5, %cst {dimension_numbers = #tpu.dot_dimension_numbers<[1], [0], [0], [1], [0, 0, 1, 1], [], []>} : vector<16x32xbf16>, vector<32x64xbf16>, vector<16x64xf32> -> vector<16x64xf32>
    %7 = arith.addf %3, %6 : vector<16x64xf32>
    %c0_6 = arith.constant 0 : index
    %c0_7 = arith.constant 0 : index
    %8 = vector.load %arg7[%c0_6, %c0_7] : memref<16x64xf32, #tpu.memory_space<vmem>>, vector<16x64xf32>
    tpu.vector_store %arg7[%c0_6, %c0_7], %7 {strides = array<i32>} : memref<16x64xf32, #tpu.memory_space<vmem>>, vector<16x64xf32>,
    %c0_i32_8 = arith.constant 0 : i32
    %9 = arith.cmpi eq, %arg2, %c0_i32_8 : i32
    %10 = arith.extui %9 : i1 to i32
    %c0_i32_9 = arith.constant 0 : i32
    %11 = arith.cmpi ne, %10, %c0_i32_9 : i32
    scf.if %11 {
      %c0_10 = arith.constant 0 : index
      %c0_11 = arith.constant 0 : index
      %12 = vector.load %arg7[%c0_10, %c0_11] : memref<16x64xf32, #tpu.memory_space<vmem>>, vector<16x64xf32>
      %c0_12 = arith.constant 0 : index
      %c0_13 = arith.constant 0 : index
      %13 = vector.load %arg5[%c0_12, %c0_13] : memref<1x64xf32, #tpu.memory_space<vmem>>, vector<1x64xf32>
      %14 = vector.broadcast %13 : vector<1x64xf32> to vector<16x64xf32>
      %15 = arith.addf %12, %14 : vector<16x64xf32>
      %cst_14 = arith.constant 1.000000e+00 : f32
      %16 = vector.broadcast %cst_14 : f32 to vector<16x64xf32>
      %17 = arith.subf %15, %16 : vector<16x64xf32>
      %18 = arith.negf %17 : vector<16x64xf32>
      %19 = math.exp %18 : vector<16x64xf32>
      %cst_15 = arith.constant 1.000000e+00 : f32
      %20 = vector.broadcast %cst_15 : f32 to vector<16x64xf32>
      %21 = arith.addf %20, %19 : vector<16x64xf32>
      %22 = arith.divf %20, %21 : vector<16x64xf32>
      %23 = arith.mulf %15, %22 : vector<16x64xf32>
      %24 = arith.truncf %23 : vector<16x64xf32> to vector<16x64xbf16>
      %c0_16 = arith.constant 0 : index
      %c0_17 = arith.constant 0 : index
      %25 = vector.load %arg6[%c0_16, %c0_17] : memref<16x64xbf16, #tpu.memory_space<vmem>>, vector<16x64xbf16>
      tpu.vector_store %arg6[%c0_16, %c0_17], %24 {strides = array<i32>} : memref<16x64xbf16, #tpu.memory_space<vmem>>, vector<16x64xbf16>,
    } else {
    }
    return
  }
  func.func @transform_0(%arg0: i32, %arg1: i32, %arg2: i32) -> (i32, i32) {
    %c0_i32 = arith.constant 0 : i32
    return %arg0, %arg2 : i32, i32
  }
  func.func @transform_1(%arg0: i32, %arg1: i32, %arg2: i32) -> (i32, i32) {
    %c0_i32 = arith.constant 0 : i32
    return %arg2, %arg1 : i32, i32
  }
  func.func @transform_2(%arg0: i32, %arg1: i32, %arg2: i32) -> (i32, i32) {
    %c0_i32 = arith.constant 0 : i32
    %c0_i32_0 = arith.constant 0 : i32
    return %c0_i32, %arg1 : i32, i32
  }
  func.func @transform_3(%arg0: i32, %arg1: i32, %arg2: i32) -> (i32, i32) {
    %c0_i32 = arith.constant 0 : i32
    return %arg0, %arg1 : i32, i32
  }
}

module attributes {stable_mosaic.version = 11 : i64} {
  func.func @_linear_kernel(%arg0: i32, %arg1: i32, %arg2: i32, %arg3: memref<16x64xbf16, #tpu.memory_space<vmem>>, %arg4: memref<64x32xbf16, #tpu.memory_space<vmem>>, %arg5: memref<1x32xf32, #tpu.memory_space<vmem>>, %arg6: memref<16x32xbf16, #tpu.memory_space<vmem>>, %arg7: memref<16x32xbf16, #tpu.memory_space<vmem>>, %arg8: memref<16x32xf32, #tpu.memory_space<vmem>>) attributes {dimension_semantics = [#tpu.dimension_semantics<parallel>, #tpu.dimension_semantics<parallel>, #tpu.dimension_semantics<arbitrary>], iteration_bounds = array<i64: 1, 1, 1>, scalar_prefetch = 0 : i64, scratch_operands = 1 : i64, tpu.core_type = #tpu.core_type<tc>, window_params = [{transform_indices = @transform_0, window_bounds = array<i64: 16, 64>}, {transform_indices = @transform_1, window_bounds = array<i64: 64, 32>}, {transform_indices = @transform_2, window_bounds = array<i64: 1, 32>}, {transform_indices = @transform_3, window_bounds = array<i64: 16, 32>}, {transform_indices = @transform_4, window_bounds = array<i64: 16, 32>}]} {
    %c0_i32 = arith.constant 0 : i32
    %0 = arith.cmpi eq, %arg2, %c0_i32 : i32
    %1 = arith.extui %0 : i1 to i32
    %c0_i32_0 = arith.constant 0 : i32
    %2 = arith.cmpi ne, %1, %c0_i32_0 : i32
    scf.if %2 {
      %cst_10 = arith.constant 0.000000e+00 : f32
      %12 = vector.broadcast %cst_10 : f32 to vector<16x32xf32>
      %c0_11 = arith.constant 0 : index
      %c0_12 = arith.constant 0 : index
      %13 = vector.load %arg8[%c0_11, %c0_12] : memref<16x32xf32, #tpu.memory_space<vmem>>, vector<16x32xf32>
      tpu.vector_store %arg8[%c0_11, %c0_12], %12 {strides = array<i32>} : memref<16x32xf32, #tpu.memory_space<vmem>>, vector<16x32xf32>,
    } else {
    }
    %c0 = arith.constant 0 : index
    %c0_1 = arith.constant 0 : index
    %3 = vector.load %arg8[%c0, %c0_1] : memref<16x32xf32, #tpu.memory_space<vmem>>, vector<16x32xf32>
    %c0_2 = arith.constant 0 : index
    %c0_3 = arith.constant 0 : index
    %4 = vector.load %arg3[%c0_2, %c0_3] : memref<16x64xbf16, #tpu.memory_space<vmem>>, vector<16x64xbf16>
    %c0_4 = arith.constant 0 : index
    %c0_5 = arith.constant 0 : index
    %5 = vector.load %arg4[%c0_4, %c0_5] : memref<64x32xbf16, #tpu.memory_space<vmem>>, vector<64x32xbf16>
    %cst = arith.constant dense<0.000000e+00> : vector<16x32xf32>
    %6 = tpu.matmul %4, %5, %cst {dimension_numbers = #tpu.dot_dimension_numbers<[1], [0], [0], [1], [0, 0, 1, 1], [], []>} : vector<16x64xbf16>, vector<64x32xbf16>, vector<16x32xf32> -> vector<16x32xf32>
    %7 = arith.addf %3, %6 : vector<16x32xf32>
    %c0_6 = arith.constant 0 : index
    %c0_7 = arith.constant 0 : index
    %8 = vector.load %arg8[%c0_6, %c0_7] : memref<16x32xf32, #tpu.memory_space<vmem>>, vector<16x32xf32>
    tpu.vector_store %arg8[%c0_6, %c0_7], %7 {strides = array<i32>} : memref<16x32xf32, #tpu.memory_space<vmem>>, vector<16x32xf32>,
    %c0_i32_8 = arith.constant 0 : i32
    %9 = arith.cmpi eq, %arg2, %c0_i32_8 : i32
    %10 = arith.extui %9 : i1 to i32
    %c0_i32_9 = arith.constant 0 : i32
    %11 = arith.cmpi ne, %10, %c0_i32_9 : i32
    scf.if %11 {
      %c0_10 = arith.constant 0 : index
      %c0_11 = arith.constant 0 : index
      %12 = vector.load %arg8[%c0_10, %c0_11] : memref<16x32xf32, #tpu.memory_space<vmem>>, vector<16x32xf32>
      %c0_12 = arith.constant 0 : index
      %c0_13 = arith.constant 0 : index
      %13 = vector.load %arg5[%c0_12, %c0_13] : memref<1x32xf32, #tpu.memory_space<vmem>>, vector<1x32xf32>
      %14 = vector.broadcast %13 : vector<1x32xf32> to vector<16x32xf32>
      %15 = arith.addf %12, %14 : vector<16x32xf32>
      %c0_14 = arith.constant 0 : index
      %c0_15 = arith.constant 0 : index
      %16 = vector.load %arg6[%c0_14, %c0_15] : memref<16x32xbf16, #tpu.memory_space<vmem>>, vector<16x32xbf16>
      %17 = arith.extf %16 : vector<16x32xbf16> to vector<16x32xf32>
      %18 = arith.addf %15, %17 : vector<16x32xf32>
      %19 = arith.mulf %18, %18 : vector<16x32xf32>
      %cst_16 = arith.constant dense<0.000000e+00> : vector<16xf32>
      %20 = vector.multi_reduction <add>, %19, %cst_16 [1] : vector<16x32xf32> to vector<16xf32>
      %21 = vector.shape_cast %20 : vector<16xf32> to vector<16x1xf32>
      %cst_17 = arith.constant 3.200000e+01 : f32
      %22 = vector.broadcast %cst_17 : f32 to vector<16x1xf32>
      %23 = arith.divf %21, %22 : vector<16x1xf32>
      %cst_18 = arith.constant 2.500000e-01 : f32
      %24 = vector.broadcast %cst_18 : f32 to vector<16x1xf32>
      %25 = arith.addf %23, %24 : vector<16x1xf32>
      %26 = math.rsqrt %25 : vector<16x1xf32>
      %27 = vector.broadcast %26 : vector<16x1xf32> to vector<16x32xf32>
      %28 = arith.mulf %18, %27 : vector<16x32xf32>
      %29 = arith.truncf %28 : vector<16x32xf32> to vector<16x32xbf16>
      %c0_19 = arith.constant 0 : index
      %c0_20 = arith.constant 0 : index
      %30 = vector.load %arg7[%c0_19, %c0_20] : memref<16x32xbf16, #tpu.memory_space<vmem>>, vector<16x32xbf16>
      tpu.vector_store %arg7[%c0_19, %c0_20], %29 {strides = array<i32>} : memref<16x32xbf16, #tpu.memory_space<vmem>>, vector<16x32xbf16>,
    } else {
    }
    return
  }
  func.func @transform_0(%arg0: i32, %arg1: i32, %arg2: i32) -> (i32, i32) {
    %c0_i32 = arith.constant 0 : i32
    return %arg0, %arg2 : i32, i32
  }
  func.func @transform_1(%arg0: i32, %arg1: i32, %arg2: i32) -> (i32, i32) {
    %c0_i32 = arith.constant 0 : i32
    return %arg2, %arg1 : i32, i32
  }
  func.func @transform_2(%arg0: i32, %arg1: i32, %arg2: i32) -> (i32, i32) {
    %c0_i32 = arith.constant 0 : i32
    %c0_i32_0 = arith.constant 0 : i32
    return %c0_i32, %arg1 : i32, i32
  }
  func.func @transform_3(%arg0: i32, %arg1: i32, %arg2: i32) -> (i32, i32) {
    %c0_i32 = arith.constant 0 : i32
    return %arg0, %arg1 : i32, i32
  }
  func.func @transform_4(%arg0: i32, %arg1: i32, %arg2: i32) -> (i32, i32) {
    %c0_i32 = arith.constant 0 : i32
    return %arg0, %arg1 : i32, i32
  }
}

module attributes {stable_mosaic.version = 11 : i64} {
  func.func @_linear_kernel(%arg0: i32, %arg1: i32, %arg2: i32, %arg3: memref<16x64xbf16, #tpu.memory_space<vmem>>, %arg4: memref<64x32xbf16, #tpu.memory_space<vmem>>, %arg5: memref<1x32xf32, #tpu.memory_space<vmem>>, %arg6: memref<16x32xbf16, #tpu.memory_space<vmem>>, %arg7: memref<16x32xf32, #tpu.memory_space<vmem>>, %arg8: memref<16x32xf32, #tpu.memory_space<vmem>>) attributes {dimension_semantics = [#tpu.dimension_semantics<parallel>, #tpu.dimension_semantics<parallel>, #tpu.dimension_semantics<arbitrary>], iteration_bounds = array<i64: 1, 1, 1>, scalar_prefetch = 0 : i64, scratch_operands = 1 : i64, tpu.core_type = #tpu.core_type<tc>, window_params = [{transform_indices = @transform_0, window_bounds = array<i64: 16, 64>}, {transform_indices = @transform_1, window_bounds = array<i64: 64, 32>}, {transform_indices = @transform_2, window_bounds = array<i64: 1, 32>}, {transform_indices = @transform_3, window_bounds = array<i64: 16, 32>}, {transform_indices = @transform_4, window_bounds = array<i64: 16, 32>}]} {
    %c0_i32 = arith.constant 0 : i32
    %0 = arith.cmpi eq, %arg2, %c0_i32 : i32
    %1 = arith.extui %0 : i1 to i32
    %c0_i32_0 = arith.constant 0 : i32
    %2 = arith.cmpi ne, %1, %c0_i32_0 : i32
    scf.if %2 {
      %cst_10 = arith.constant 0.000000e+00 : f32
      %12 = vector.broadcast %cst_10 : f32 to vector<16x32xf32>
      %c0_11 = arith.constant 0 : index
      %c0_12 = arith.constant 0 : index
      %13 = vector.load %arg8[%c0_11, %c0_12] : memref<16x32xf32, #tpu.memory_space<vmem>>, vector<16x32xf32>
      tpu.vector_store %arg8[%c0_11, %c0_12], %12 {strides = array<i32>} : memref<16x32xf32, #tpu.memory_space<vmem>>, vector<16x32xf32>,
    } else {
    }
    %c0 = arith.constant 0 : index
    %c0_1 = arith.constant 0 : index
    %3 = vector.load %arg8[%c0, %c0_1] : memref<16x32xf32, #tpu.memory_space<vmem>>, vector<16x32xf32>
    %c0_2 = arith.constant 0 : index
    %c0_3 = arith.constant 0 : index
    %4 = vector.load %arg3[%c0_2, %c0_3] : memref<16x64xbf16, #tpu.memory_space<vmem>>, vector<16x64xbf16>
    %c0_4 = arith.constant 0 : index
    %c0_5 = arith.constant 0 : index
    %5 = vector.load %arg4[%c0_4, %c0_5] : memref<64x32xbf16, #tpu.memory_space<vmem>>, vector<64x32xbf16>
    %cst = arith.constant dense<0.000000e+00> : vector<16x32xf32>
    %6 = tpu.matmul %4, %5, %cst {dimension_numbers = #tpu.dot_dimension_numbers<[1], [0], [0], [1], [0, 0, 1, 1], [], []>} : vector<16x64xbf16>, vector<64x32xbf16>, vector<16x32xf32> -> vector<16x32xf32>
    %7 = arith.addf %3, %6 : vector<16x32xf32>
    %c0_6 = arith.constant 0 : index
    %c0_7 = arith.constant 0 : index
    %8 = vector.load %arg8[%c0_6, %c0_7] : memref<16x32xf32, #tpu.memory_space<vmem>>, vector<16x32xf32>
    tpu.vector_store %arg8[%c0_6, %c0_7], %7 {strides = array<i32>} : memref<16x32xf32, #tpu.memory_space<vmem>>, vector<16x32xf32>,
    %c0_i32_8 = arith.constant 0 : i32
    %9 = arith.cmpi eq, %arg2, %c0_i32_8 : i32
    %10 = arith.extui %9 : i1 to i32
    %c0_i32_9 = arith.constant 0 : i32
    %11 = arith.cmpi ne, %10, %c0_i32_9 : i32
    scf.if %11 {
      %c0_10 = arith.constant 0 : index
      %c0_11 = arith.constant 0 : index
      %12 = vector.load %arg8[%c0_10, %c0_11] : memref<16x32xf32, #tpu.memory_space<vmem>>, vector<16x32xf32>
      %c0_12 = arith.constant 0 : index
      %c0_13 = arith.constant 0 : index
      %13 = vector.load %arg5[%c0_12, %c0_13] : memref<1x32xf32, #tpu.memory_space<vmem>>, vector<1x32xf32>
      %14 = vector.broadcast %13 : vector<1x32xf32> to vector<16x32xf32>
      %15 = arith.addf %12, %14 : vector<16x32xf32>
      %c0_14 = arith.constant 0 : index
      %c0_15 = arith.constant 0 : index
      %16 = vector.load %arg6[%c0_14, %c0_15] : memref<16x32xbf16, #tpu.memory_space<vmem>>, vector<16x32xbf16>
      %17 = arith.extf %16 : vector<16x32xbf16> to vector<16x32xf32>
      %18 = arith.addf %15, %17 : vector<16x32xf32>
      %19 = arith.mulf %18, %18 : vector<16x32xf32>
      %cst_16 = arith.constant dense<0.000000e+00> : vector<16xf32>
      %20 = vector.multi_reduction <add>, %19, %cst_16 [1] : vector<16x32xf32> to vector<16xf32>
      %21 = vector.shape_cast %20 : vector<16xf32> to vector<16x1xf32>
      %cst_17 = arith.constant 3.200000e+01 : f32
      %22 = vector.broadcast %cst_17 : f32 to vector<16x1xf32>
      %23 = arith.divf %21, %22 : vector<16x1xf32>
      %cst_18 = arith.constant 2.500000e-01 : f32
      %24 = vector.broadcast %cst_18 : f32 to vector<16x1xf32>
      %25 = arith.addf %23, %24 : vector<16x1xf32>
      %26 = math.rsqrt %25 : vector<16x1xf32>
      %27 = vector.broadcast %26 : vector<16x1xf32> to vector<16x32xf32>
      %28 = arith.mulf %18, %27 : vector<16x32xf32>
      %c0_19 = arith.constant 0 : index
      %c0_20 = arith.constant 0 : index
      %29 = vector.load %arg7[%c0_19, %c0_20] : memref<16x32xf32, #tpu.memory_space<vmem>>, vector<16x32xf32>
      tpu.vector_store %arg7[%c0_19, %c0_20], %28 {strides = array<i32>} : memref<16x32xf32, #tpu.memory_space<vmem>>, vector<16x32xf32>,
    } else {
    }
    return
  }
  func.func @transform_0(%arg0: i32, %arg1: i32, %arg2: i32) -> (i32, i32) {
    %c0_i32 = arith.constant 0 : i32
    return %arg0, %arg2 : i32, i32
  }
  func.func @transform_1(%arg0: i32, %arg1: i32, %arg2: i32) -> (i32, i32) {
    %c0_i32 = arith.constant 0 : i32
    return %arg2, %arg1 : i32, i32
  }
  func.func @transform_2(%arg0: i32, %arg1: i32, %arg2: i32) -> (i32, i32) {
    %c0_i32 = arith.constant 0 : i32
    %c0_i32_0 = arith.constant 0 : i32
    return %c0_i32, %arg1 : i32, i32
  }
  func.func @transform_3(%arg0: i32, %arg1: i32, %arg2: i32) -> (i32, i32) {
    %c0_i32 = arith.constant 0 : i32
    return %arg0, %arg1 : i32, i32
  }
  func.func @transform_4(%arg0: i32, %arg1: i32, %arg2: i32) -> (i32, i32) {
    %c0_i32 = arith.constant 0 : i32
    return %arg0, %arg1 : i32, i32
  }
}

</mosaic_0001>

<llo_original>
// kernel: transformer_forward.12
$region0: #{transformer_forward.12}
  #allocation0 [shape = 'u32[]', space=smem, size = 0x4, offset = 0x4, fixed_abs, tag = 'smem constant byte address 0x4 - core index']
  #allocation1 [shape = 'u32[144,128]{1,0:T(1,128)}', space=vmem, size = 0x12000, scoped, tag = 'internal scratch']
  #allocation2 [shape = 'f32[16,32]{1,0:T(8,128)}', space=vmem, size = 0x2000, scoped, tag = 'scratch operand']
  %s0 = inlined_call_operand.vmem [shape: bf16[16,16], index: 0, kind: input, shape index: {}]
  %s1 = inlined_call_operand.vmem [shape: bf16[16,32], index: 1, kind: input, shape index: {}]
  %s2 = inlined_call_operand.vmem [shape: f32[1,32], index: 2, kind: input, shape index: {}]
  %s3 = inlined_call_operand.vmem [shape: bf16[16,32], index: 3, kind: output, shape index: {}]
  %s4 = sld [smem:[#allocation0]]
  $region30: #{transformer_forward.12} parent=0
    _
  %s6 = ssub.s32 1, %s4
  %s7 = scalar_select 0, %s6, %s4
  // Predicated region
  $region2: #{transformer_forward.12} parent=0 // pred_check
    _
  $region3: #{transformer_forward.12} parent=0 // pred_check_branch
    %9 = sbr.rel (0) target = $region5
  $region4: #{transformer_forward.12} parent=0 // pred_region
    _
  $region5: #{transformer_forward.12} parent=0 // pred_fallthru
    _
  // Predicated region
  $region6: #{transformer_forward.12} parent=0 // pred_check
    _
  $region7: #{transformer_forward.12} parent=0 // pred_check_branch
    %11 = sbr.rel (0) target = $region9
  $region8: #{transformer_forward.12} parent=0 // pred_region
    _
  $region9: #{transformer_forward.12} parent=0 // pred_fallthru
    _
  // Predicated region
  $region10: #{transformer_forward.12} parent=0 // pred_check
    _
  $region11: #{transformer_forward.12} parent=0 // pred_check_branch
    %13 = sbr.rel (0) target = $region13
  $region12: #{transformer_forward.12} parent=0 // pred_region
    _
  $region13: #{transformer_forward.12} parent=0 // pred_fallthru
    _
  %p15 = scmp.eq.s32.totalorder 0, 0
  // Predicated region
  $region14: #{transformer_forward.12} parent=0 // pred_check
    %p16 = pneg %p15
  $region15: #{transformer_forward.12} parent=0 // pred_check_branch
    %18 = sbr.rel (%p16) target = $region17
  $region16: #{transformer_forward.12} parent=0 // pred_region
    %vm19 = vcmask 261120
    %20 = vst.msk [vmem:[#allocation2] sm:$0xff] %vm19, 0.0
    %21 = vst.msk [vmem:[#allocation2 + $0x8] sm:$0xff] %vm19, 0.0
  $region17: #{transformer_forward.12} parent=0 // pred_fallthru
    _
  %v22 = vld [vmem:[#allocation2] sm:$0xff]
  %v23 = vld [vmem:[#allocation2 + $0x8] sm:$0xff]
  %v24 = vld [vmem:[%s0] sm:$0xf]
  %v25 = vld [vmem:[%s0 + $0x4] sm:$0xf]
  %v26 = vld [vmem:[%s1] sm:$0xf]
  %v27 = vld [vmem:[%s1 + $0x4] sm:$0xf]
  %v30 = vunpack.c.l.b16 %v24
  %v31 = vunpack.c.l.b16 %v25
  %v32 = vpack.c.b16 %v31, %v30
  %v35 = vunpack.c.l.b16 %v26
  %v36 = vunpack.c.l.b16 %v27
  %v37 = vpack.c.b16 %v36, %v35
  %vm39 = vcmask 130048
  %v41 = vsel %vm39, %v32, 0
  %43 = vmatprep.subr.bf16.mxu0 0
  %44 = vmatpush1.bf16.msra.mxu0 %v37
  %45 = vmatprep.subr.bf16.mxu0 0
  %46 = vmatpush1.bf16.msra.mxu0 0
  %47 = vmatprep.subr.bf16.mxu0 0
  %48 = vmatpush1.bf16.msra.mxu0 0
  %49 = vmatprep.subr.bf16.mxu0 0
  %50 = vmatpush1.bf16.msra.mxu0 0
  %51 = vmatprep.subr.bf16.mxu0 0
  %52 = vmatpush1.bf16.msra.mxu0 0
  %53 = vmatprep.subr.bf16.mxu0 0
  %54 = vmatpush1.bf16.msra.mxu0 0
  %55 = vmatprep.subr.bf16.mxu0 0
  %56 = vmatpush1.bf16.msra.mxu0 0
  %57 = vmatprep.subr.bf16.mxu0 0
  %58 = vmatpush1.bf16.msra.mxu0 0
  %59 = vmatprep.subr.bf16.mxu0 0
  %60 = vmatpush1.bf16.msra.mxu0 0
  %61 = vmatprep.subr.bf16.mxu0 0
  %62 = vmatpush1.bf16.msra.mxu0 0
  %63 = vmatprep.subr.bf16.mxu0 0
  %64 = vmatpush1.bf16.msra.mxu0 0
  %65 = vmatprep.subr.bf16.mxu0 0
  %66 = vmatpush1.bf16.msra.mxu0 0
  %67 = vmatprep.subr.bf16.mxu0 0
  %68 = vmatpush1.bf16.msra.mxu0 0
  %69 = vmatprep.subr.bf16.mxu0 0
  %70 = vmatpush1.bf16.msra.mxu0 0
  %71 = vmatprep.subr.bf16.mxu0 0
  %72 = vmatpush1.bf16.msra.mxu0 0
  %73 = vmatprep.subr.bf16.mxu0 0
  %74 = vmatpush1.bf16.msra.mxu0 0
  %75 = vmatprep.mubr.bf16.mxu0 0
  %76 = vmatmul.mubr.bf16.gmra.mrb[0].mxu0 %v41
  %v77 = vpop.f32.mrb[0].mxu0
  %v78 = vadd.f32 0.0, %v77
  %v79 = vpop.f32.mrb[0].mxu0
  %v80 = vpop.f32.mrb[0].mxu0
  %v81 = vadd.f32 0.0, %v80
  %v82 = vpop.f32.mrb[0].mxu0
  %83 = vdwg.mxu0
  %v84 = vadd.f32 %v22, %v78
  %v85 = vadd.f32 %v23, %v81
  %vm86 = vcmask 261120
  %87 = vst.msk [vmem:[#allocation2] sm:$0xff] %vm86, %v84
  %88 = vst.msk [vmem:[#allocation2 + $0x8] sm:$0xff] %vm86, %v85
  // Predicated region
  $region18: #{transformer_forward.12} parent=0 // pred_check
    %p89 = pneg %p15
  $region19: #{transformer_forward.12} parent=0 // pred_check_branch
    %91 = sbr.rel (%p89) target = $region21
  $region20: #{transformer_forward.12} parent=0 // pred_region
    %v92 = vld [vmem:[#allocation2] sm:$0xff]
    %v93 = vld [vmem:[#allocation2 + $0x8] sm:$0xff]
    %v94 = vld [vmem:[%s2] sm:$0x1]
    %v96 = vlaneseq
    %v97 = vshrl.u32 %v96, 7
    %v98 = vsub.s32 0, %v97
    %v99 = vrot.slane %v94, %v98
    %v101 = vadd.f32 %v92, %v99
    %v102 = vadd.f32 %v93, %v99
    %v103 = vmul.f32 %v101, %v101
    %v104 = vmul.f32 %v102, %v102
    %v105 = vsel %vm86, %v103, 0.0
    %106 = vadd.xlane.f32.xlu0 %v105
    %v107 = vpop.xlane.xlu0 %106
    %v108 = vsel %vm86, %v104, 0.0
    %109 = vadd.xlane.f32.xlu0 %v108
    %v110 = vpop.xlane.xlu0 %109
    %v111 = vrcp.pop 32.0
    %v112 = vmul.f32 %v107, %v111
    %v113 = vmul.f32 %v110, %v111
    %v114 = vadd.f32 %v112, 0.25
    %v115 = vadd.f32 %v113, 0.25
    %v116 = vrsqrt.pop %v114
    %v117 = vrsqrt.pop %v115
    %v118 = vmul.f32 %v101, %v116
    %v119 = vmul.f32 %v102, %v117
    %v120 = vpack.c.bf16 %v119, %v118
    %v122 = vunpack.c.l.b16 %v120
    %v123 = vunpack.c.h.b16 %v120
    %v124 = vpack.c.b16 %v122, %v122
    %v125 = vpack.c.b16 %v123, %v123
    %vm128 = vcmask 257024
    %129 = vst.msk [vmem:[%s3] sm:$0xf] %vm128, %v124
    %130 = vst.msk [vmem:[%s3 + $0x4] sm:$0xf] %vm128, %v125
  $region21: #{transformer_forward.12} parent=0 // pred_fallthru
    _
  // Predicated region
  $region22: #{transformer_forward.12} parent=0 // pred_check
    _
  $region23: #{transformer_forward.12} parent=0 // pred_check_branch
    %132 = sbr.rel (0) target = $region25
  $region24: #{transformer_forward.12} parent=0 // pred_region
    _
  $region25: #{transformer_forward.12} parent=0 // pred_fallthru
    _
  // Predicated region
  $region26: #{transformer_forward.12} parent=0 // pred_check
    _
  $region27: #{transformer_forward.12} parent=0 // pred_check_branch
    %134 = sbr.rel (0) target = $region29
  $region28: #{transformer_forward.12} parent=0 // pred_region
    _
  $region29: #{transformer_forward.12} parent=0 // pred_fallthru
    _

// kernel: transformer_forward.14
$region0: #{transformer_forward.14}
  #allocation0 [shape = 'u32[]', space=smem, size = 0x4, offset = 0x4, fixed_abs, tag = 'smem constant byte address 0x4 - core index']
  #allocation1 [shape = 'u32[144,128]{1,0:T(1,128)}', space=vmem, size = 0x12000, scoped, tag = 'internal scratch']
  #allocation2 [shape = 'f32[16,96]{1,0:T(8,128)}', space=vmem, size = 0x2000, scoped, tag = 'scratch operand']
  %s0 = inlined_call_operand.vmem [shape: bf16[16,32], index: 0, kind: input, shape index: {}]
  %s1 = inlined_call_operand.vmem [shape: bf16[32,96], index: 1, kind: input, shape index: {}]
  %s2 = inlined_call_operand.vmem [shape: f32[1,96], index: 2, kind: input, shape index: {}]
  %s3 = inlined_call_operand.vmem [shape: bf16[16,96], index: 3, kind: output, shape index: {}]
  %s4 = sld [smem:[#allocation0]]
  $region30: #{transformer_forward.14} parent=0
    _
  %s6 = ssub.s32 1, %s4
  %s7 = scalar_select 0, %s6, %s4
  // Predicated region
  $region2: #{transformer_forward.14} parent=0 // pred_check
    _
  $region3: #{transformer_forward.14} parent=0 // pred_check_branch
    %9 = sbr.rel (0) target = $region5
  $region4: #{transformer_forward.14} parent=0 // pred_region
    _
  $region5: #{transformer_forward.14} parent=0 // pred_fallthru
    _
  // Predicated region
  $region6: #{transformer_forward.14} parent=0 // pred_check
    _
  $region7: #{transformer_forward.14} parent=0 // pred_check_branch
    %11 = sbr.rel (0) target = $region9
  $region8: #{transformer_forward.14} parent=0 // pred_region
    _
  $region9: #{transformer_forward.14} parent=0 // pred_fallthru
    _
  // Predicated region
  $region10: #{transformer_forward.14} parent=0 // pred_check
    _
  $region11: #{transformer_forward.14} parent=0 // pred_check_branch
    %13 = sbr.rel (0) target = $region13
  $region12: #{transformer_forward.14} parent=0 // pred_region
    _
  $region13: #{transformer_forward.14} parent=0 // pred_fallthru
    _
  %p15 = scmp.eq.s32.totalorder 0, 0
  // Predicated region
  $region14: #{transformer_forward.14} parent=0 // pred_check
    %p16 = pneg %p15
  $region15: #{transformer_forward.14} parent=0 // pred_check_branch
    %18 = sbr.rel (%p16) target = $region17
  $region16: #{transformer_forward.14} parent=0 // pred_region
    %vm19 = vcmask 785408
    %20 = vst.msk [vmem:[#allocation2] sm:$0xff] %vm19, 0.0
    %21 = vst.msk [vmem:[#allocation2 + $0x8] sm:$0xff] %vm19, 0.0
  $region17: #{transformer_forward.14} parent=0 // pred_fallthru
    _
  %v22 = vld [vmem:[#allocation2] sm:$0xff]
  %v23 = vld [vmem:[#allocation2 + $0x8] sm:$0xff]
  %v24 = vld [vmem:[%s0] sm:$0xf]
  %v25 = vld [vmem:[%s0 + $0x4] sm:$0xf]
  %v26 = vld [vmem:[%s1] sm:$0xf]
  %v27 = vld [vmem:[%s1 + $0x4] sm:$0xf]
  %v28 = vld [vmem:[%s1 + $0x8] sm:$0xf]
  %v29 = vld [vmem:[%s1 + $0xc] sm:$0xf]
  %v32 = vunpack.c.l.b16 %v24
  %v33 = vunpack.c.l.b16 %v25
  %v34 = vpack.c.b16 %v33, %v32
  %v39 = vunpack.c.l.b16 %v26
  %v40 = vunpack.c.l.b16 %v27
  %v41 = vunpack.c.l.b16 %v28
  %v42 = vunpack.c.l.b16 %v29
  %v43 = vpack.c.b16 %v40, %v39
  %v44 = vpack.c.b16 %v42, %v41
  %vm47 = vcmask 261120
  %v49 = vsel %vm47, %v34, 0
  %51 = vmatprep.subr.bf16.mxu0 0
  %52 = vmatpush1.bf16.msra.mxu0 %v43
  %53 = vmatprep.subr.bf16.mxu0 0
  %54 = vmatpush1.bf16.msra.mxu0 %v44
  %55 = vmatprep.subr.bf16.mxu0 0
  %56 = vmatpush1.bf16.msra.mxu0 0
  %57 = vmatprep.subr.bf16.mxu0 0
  %58 = vmatpush1.bf16.msra.mxu0 0
  %59 = vmatprep.subr.bf16.mxu0 0
  %60 = vmatpush1.bf16.msra.mxu0 0
  %61 = vmatprep.subr.bf16.mxu0 0
  %62 = vmatpush1.bf16.msra.mxu0 0
  %63 = vmatprep.subr.bf16.mxu0 0
  %64 = vmatpush1.bf16.msra.mxu0 0
  %65 = vmatprep.subr.bf16.mxu0 0
  %66 = vmatpush1.bf16.msra.mxu0 0
  %67 = vmatprep.subr.bf16.mxu0 0
  %68 = vmatpush1.bf16.msra.mxu0 0
  %69 = vmatprep.subr.bf16.mxu0 0
  %70 = vmatpush1.bf16.msra.mxu0 0
  %71 = vmatprep.subr.bf16.mxu0 0
  %72 = vmatpush1.bf16.msra.mxu0 0
  %73 = vmatprep.subr.bf16.mxu0 0
  %74 = vmatpush1.bf16.msra.mxu0 0
  %75 = vmatprep.subr.bf16.mxu0 0
  %76 = vmatpush1.bf16.msra.mxu0 0
  %77 = vmatprep.subr.bf16.mxu0 0
  %78 = vmatpush1.bf16.msra.mxu0 0
  %79 = vmatprep.subr.bf16.mxu0 0
  %80 = vmatpush1.bf16.msra.mxu0 0
  %81 = vmatprep.subr.bf16.mxu0 0
  %82 = vmatpush1.bf16.msra.mxu0 0
  %83 = vmatprep.mubr.bf16.mxu0 0
  %84 = vmatmul.mubr.bf16.gmra.mrb[0].mxu0 %v49
  %v85 = vpop.f32.mrb[0].mxu0
  %v86 = vadd.f32 0.0, %v85
  %v87 = vpop.f32.mrb[0].mxu0
  %v88 = vpop.f32.mrb[0].mxu0
  %v89 = vadd.f32 0.0, %v88
  %v90 = vpop.f32.mrb[0].mxu0
  %91 = vdwg.mxu0
  %v92 = vadd.f32 %v22, %v86
  %v93 = vadd.f32 %v23, %v89
  %vm94 = vcmask 785408
  %95 = vst.msk [vmem:[#allocation2] sm:$0xff] %vm94, %v92
  %96 = vst.msk [vmem:[#allocation2 + $0x8] sm:$0xff] %vm94, %v93
  // Predicated region
  $region18: #{transformer_forward.14} parent=0 // pred_check
    %p97 = pneg %p15
  $region19: #{transformer_forward.14} parent=0 // pred_check_branch
    %99 = sbr.rel (%p97) target = $region21
  $region20: #{transformer_forward.14} parent=0 // pred_region
    %v100 = vld [vmem:[#allocation2] sm:$0xff]
    %v101 = vld [vmem:[#allocation2 + $0x8] sm:$0xff]
    %v102 = vld [vmem:[%s2] sm:$0x1]
    %v104 = vlaneseq
    %v105 = vshrl.u32 %v104, 7
    %v106 = vsub.s32 0, %v105
    %v107 = vrot.slane %v102, %v106
    %v109 = vadd.f32 %v100, %v107
    %v110 = vadd.f32 %v101, %v107
    %v111 = vpack.c.bf16 %v110, %v109
    %v113 = vunpack.c.l.b16 %v111
    %v114 = vunpack.c.h.b16 %v111
    %v115 = vpack.c.b16 %v113, %v113
    %v116 = vpack.c.b16 %v114, %v114
    %vm119 = vcmask 781312
    %120 = vst.msk [vmem:[%s3] sm:$0xf] %vm119, %v115
    %121 = vst.msk [vmem:[%s3 + $0x4] sm:$0xf] %vm119, %v116
  $region21: #{transformer_forward.14} parent=0 // pred_fallthru
    _
  // Predicated region
  $region22: #{transformer_forward.14} parent=0 // pred_check
    _
  $region23: #{transformer_forward.14} parent=0 // pred_check_branch
    %123 = sbr.rel (0) target = $region25
  $region24: #{transformer_forward.14} parent=0 // pred_region
    _
  $region25: #{transformer_forward.14} parent=0 // pred_fallthru
    _
  // Predicated region
  $region26: #{transformer_forward.14} parent=0 // pred_check
    _
  $region27: #{transformer_forward.14} parent=0 // pred_check_branch
    %125 = sbr.rel (0) target = $region29
  $region28: #{transformer_forward.14} parent=0 // pred_region
    _
  $region29: #{transformer_forward.14} parent=0 // pred_fallthru
    _

// kernel: transformer_forward.13
$region0: #{transformer_forward.13}
  #allocation0 [shape = 'u32[]', space=smem, size = 0x4, offset = 0x4, fixed_abs, tag = 'smem constant byte address 0x4 - core index']
  #allocation1 [shape = 'u32[144,128]{1,0:T(1,128)}', space=vmem, size = 0x12000, scoped, tag = 'internal scratch']
  #allocation2 [shape = 'f32[128,64]{1,0:T(8,128)}', space=vmem, size = 0x10000, scoped, tag = 'scratch operand']
  %s0 = inlined_call_operand.vmem [shape: bf16[128,32], index: 0, kind: input, shape index: {}]
  %s1 = inlined_call_operand.vmem [shape: bf16[32,64], index: 1, kind: input, shape index: {}]
  %s2 = inlined_call_operand.vmem [shape: f32[1,64], index: 2, kind: input, shape index: {}]
  %s3 = inlined_call_operand.vmem [shape: bf16[128,64], index: 3, kind: output, shape index: {}]
  %s4 = sld [smem:[#allocation0]]
  $region30: #{transformer_forward.13} parent=0
    _
  %s6 = ssub.s32 1, %s4
  %s7 = scalar_select 0, %s6, %s4
  // Predicated region
  $region2: #{transformer_forward.13} parent=0 // pred_check
    _
  $region3: #{transformer_forward.13} parent=0 // pred_check_branch
    %9 = sbr.rel (0) target = $region5
  $region4: #{transformer_forward.13} parent=0 // pred_region
    _
  $region5: #{transformer_forward.13} parent=0 // pred_fallthru
    _
  // Predicated region
  $region6: #{transformer_forward.13} parent=0 // pred_check
    _
  $region7: #{transformer_forward.13} parent=0 // pred_check_branch
    %11 = sbr.rel (0) target = $region9
  $region8: #{transformer_forward.13} parent=0 // pred_region
    _
  $region9: #{transformer_forward.13} parent=0 // pred_fallthru
    _
  // Predicated region
  $region10: #{transformer_forward.13} parent=0 // pred_check
    _
  $region11: #{transformer_forward.13} parent=0 // pred_check_branch
    %13 = sbr.rel (0) target = $region13
  $region12: #{transformer_forward.13} parent=0 // pred_region
    _
  $region13: #{transformer_forward.13} parent=0 // pred_fallthru
    _
  %p15 = scmp.eq.s32.totalorder 0, 0
  // Predicated region
  $region14: #{transformer_forward.13} parent=0 // pred_check
    %p16 = pneg %p15
  $region15: #{transformer_forward.13} parent=0 // pred_check_branch
    %18 = sbr.rel (%p16) target = $region17
  $region16: #{transformer_forward.13} parent=0 // pred_region
    %vm19 = vcmask 523264
    %20 = vst.msk [vmem:[#allocation2] sm:$0xff] %vm19, 0.0
    %21 = vst.msk [vmem:[#allocation2 + $0x8] sm:$0xff] %vm19, 0.0
    %22 = vst.msk [vmem:[#allocation2 + $0x10] sm:$0xff] %vm19, 0.0
    %23 = vst.msk [vmem:[#allocation2 + $0x18] sm:$0xff] %vm19, 0.0
    %24 = vst.msk [vmem:[#allocation2 + $0x20] sm:$0xff] %vm19, 0.0
    %25 = vst.msk [vmem:[#allocation2 + $0x28] sm:$0xff] %vm19, 0.0
    %26 = vst.msk [vmem:[#allocation2 + $0x30] sm:$0xff] %vm19, 0.0
    %27 = vst.msk [vmem:[#allocation2 + $0x38] sm:$0xff] %vm19, 0.0
    %28 = vst.msk [vmem:[#allocation2 + $0x40] sm:$0xff] %vm19, 0.0
    %29 = vst.msk [vmem:[#allocation2 + $0x48] sm:$0xff] %vm19, 0.0
    %30 = vst.msk [vmem:[#allocation2 + $0x50] sm:$0xff] %vm19, 0.0
    %31 = vst.msk [vmem:[#allocation2 + $0x58] sm:$0xff] %vm19, 0.0
    %32 = vst.msk [vmem:[#allocation2 + $0x60] sm:$0xff] %vm19, 0.0
    %33 = vst.msk [vmem:[#allocation2 + $0x68] sm:$0xff] %vm19, 0.0
    %34 = vst.msk [vmem:[#allocation2 + $0x70] sm:$0xff] %vm19, 0.0
    %35 = vst.msk [vmem:[#allocation2 + $0x78] sm:$0xff] %vm19, 0.0
  $region17: #{transformer_forward.13} parent=0 // pred_fallthru
    _
  %v36 = vld [vmem:[#allocation2] sm:$0xff]
  %v37 = vld [vmem:[#allocation2 + $0x8] sm:$0xff]
  %v38 = vld [vmem:[#allocation2 + $0x10] sm:$0xff]
  %v39 = vld [vmem:[#allocation2 + $0x18] sm:$0xff]
  %v40 = vld [vmem:[#allocation2 + $0x20] sm:$0xff]
  %v41 = vld [vmem:[#allocation2 + $0x28] sm:$0xff]
  %v42 = vld [vmem:[#allocation2 + $0x30] sm:$0xff]
  %v43 = vld [vmem:[#allocation2 + $0x38] sm:$0xff]
  %v44 = vld [vmem:[#allocation2 + $0x40] sm:$0xff]
  %v45 = vld [vmem:[#allocation2 + $0x48] sm:$0xff]
  %v46 = vld [vmem:[#allocation2 + $0x50] sm:$0xff]
  %v47 = vld [vmem:[#allocation2 + $0x58] sm:$0xff]
  %v48 = vld [vmem:[#allocation2 + $0x60] sm:$0xff]
  %v49 = vld [vmem:[#allocation2 + $0x68] sm:$0xff]
  %v50 = vld [vmem:[#allocation2 + $0x70] sm:$0xff]
  %v51 = vld [vmem:[#allocation2 + $0x78] sm:$0xff]
  %v52 = vld [vmem:[%s0] sm:$0xf]
  %v53 = vld [vmem:[%s0 + $0x4] sm:$0xf]
  %v54 = vld [vmem:[%s0 + $0x8] sm:$0xf]
  %v55 = vld [vmem:[%s0 + $0xc] sm:$0xf]
  %v56 = vld [vmem:[%s0 + $0x10] sm:$0xf]
  %v57 = vld [vmem:[%s0 + $0x14] sm:$0xf]
  %v58 = vld [vmem:[%s0 + $0x18] sm:$0xf]
  %v59 = vld [vmem:[%s0 + $0x1c] sm:$0xf]
  %v60 = vld [vmem:[%s0 + $0x20] sm:$0xf]
  %v61 = vld [vmem:[%s0 + $0x24] sm:$0xf]
  %v62 = vld [vmem:[%s0 + $0x28] sm:$0xf]
  %v63 = vld [vmem:[%s0 + $0x2c] sm:$0xf]
  %v64 = vld [vmem:[%s0 + $0x30] sm:$0xf]
  %v65 = vld [vmem:[%s0 + $0x34] sm:$0xf]
  %v66 = vld [vmem:[%s0 + $0x38] sm:$0xf]
  %v67 = vld [vmem:[%s0 + $0x3c] sm:$0xf]
  %v68 = vld [vmem:[%s1] sm:$0xf]
  %v69 = vld [vmem:[%s1 + $0x4] sm:$0xf]
  %v70 = vld [vmem:[%s1 + $0x8] sm:$0xf]
  %v71 = vld [vmem:[%s1 + $0xc] sm:$0xf]
  %v88 = vunpack.c.l.b16 %v52
  %v89 = vunpack.c.l.b16 %v53
  %v90 = vunpack.c.l.b16 %v54
  %v91 = vunpack.c.l.b16 %v55
  %v92 = vunpack.c.l.b16 %v56
  %v93 = vunpack.c.l.b16 %v57
  %v94 = vunpack.c.l.b16 %v58
  %v95 = vunpack.c.l.b16 %v59
  %v96 = vunpack.c.l.b16 %v60
  %v97 = vunpack.c.l.b16 %v61
  %v98 = vunpack.c.l.b16 %v62
  %v99 = vunpack.c.l.b16 %v63
  %v100 = vunpack.c.l.b16 %v64
  %v101 = vunpack.c.l.b16 %v65
  %v102 = vunpack.c.l.b16 %v66
  %v103 = vunpack.c.l.b16 %v67
  %v104 = vpack.c.b16 %v89, %v88
  %v105 = vpack.c.b16 %v91, %v90
  %v106 = vpack.c.b16 %v93, %v92
  %v107 = vpack.c.b16 %v95, %v94
  %v108 = vpack.c.b16 %v97, %v96
  %v109 = vpack.c.b16 %v99, %v98
  %v110 = vpack.c.b16 %v101, %v100
  %v111 = vpack.c.b16 %v103, %v102
  %v116 = vunpack.c.l.b16 %v68
  %v117 = vunpack.c.l.b16 %v69
  %v118 = vunpack.c.l.b16 %v70
  %v119 = vunpack.c.l.b16 %v71
  %v120 = vpack.c.b16 %v117, %v116
  %v121 = vpack.c.b16 %v119, %v118
  %vm124 = vcmask 261120
  %v126 = vsel %vm124, %v104, 0
  %v129 = vsel %vm124, %v105, 0
  %v132 = vsel %vm124, %v106, 0
  %v135 = vsel %vm124, %v107, 0
  %v138 = vsel %vm124, %v108, 0
  %v141 = vsel %vm124, %v109, 0
  %v144 = vsel %vm124, %v110, 0
  %v147 = vsel %vm124, %v111, 0
  %149 = vmatprep.subr.bf16.mxu0 0
  %150 = vmatpush1.bf16.msra.mxu0 %v120
  %151 = vmatprep.subr.bf16.mxu0 0
  %152 = vmatpush1.bf16.msra.mxu0 %v121
  %153 = vmatprep.subr.bf16.mxu0 0
  %154 = vmatpush1.bf16.msra.mxu0 0
  %155 = vmatprep.subr.bf16.mxu0 0
  %156 = vmatpush1.bf16.msra.mxu0 0
  %157 = vmatprep.subr.bf16.mxu0 0
  %158 = vmatpush1.bf16.msra.mxu0 0
  %159 = vmatprep.subr.bf16.mxu0 0
  %160 = vmatpush1.bf16.msra.mxu0 0
  %161 = vmatprep.subr.bf16.mxu0 0
  %162 = vmatpush1.bf16.msra.mxu0 0
  %163 = vmatprep.subr.bf16.mxu0 0
  %164 = vmatpush1.bf16.msra.mxu0 0
  %165 = vmatprep.subr.bf16.mxu0 0
  %166 = vmatpush1.bf16.msra.mxu0 0
  %167 = vmatprep.subr.bf16.mxu0 0
  %168 = vmatpush1.bf16.msra.mxu0 0
  %169 = vmatprep.subr.bf16.mxu0 0
  %170 = vmatpush1.bf16.msra.mxu0 0
  %171 = vmatprep.subr.bf16.mxu0 0
  %172 = vmatpush1.bf16.msra.mxu0 0
  %173 = vmatprep.subr.bf16.mxu0 0
  %174 = vmatpush1.bf16.msra.mxu0 0
  %175 = vmatprep.subr.bf16.mxu0 0
  %176 = vmatpush1.bf16.msra.mxu0 0
  %177 = vmatprep.subr.bf16.mxu0 0
  %178 = vmatpush1.bf16.msra.mxu0 0
  %179 = vmatprep.subr.bf16.mxu0 0
  %180 = vmatpush1.bf16.msra.mxu0 0
  %181 = vmatprep.mubr.bf16.mxu0 0
  %182 = vmatmul.mubr.bf16.gmra.mrb[0].mxu0 %v126
  %v183 = vpop.f32.mrb[0].mxu0
  %v184 = vadd.f32 0.0, %v183
  %v185 = vpop.f32.mrb[0].mxu0
  %v186 = vpop.f32.mrb[0].mxu0
  %v187 = vadd.f32 0.0, %v186
  %v188 = vpop.f32.mrb[0].mxu0
  %189 = vmatprep.mubr.bf16.mxu0 0
  %190 = vmatmul.mubr.bf16.gmra.mrb[0].mxu0 %v129
  %v191 = vpop.f32.mrb[0].mxu0
  %v192 = vadd.f32 0.0, %v191
  %v193 = vpop.f32.mrb[0].mxu0
  %v194 = vpop.f32.mrb[0].mxu0
  %v195 = vadd.f32 0.0, %v194
  %v196 = vpop.f32.mrb[0].mxu0
  %197 = vmatprep.mubr.bf16.mxu0 0
  %198 = vmatmul.mubr.bf16.gmra.mrb[0].mxu0 %v132
  %v199 = vpop.f32.mrb[0].mxu0
  %v200 = vadd.f32 0.0, %v199
  %v201 = vpop.f32.mrb[0].mxu0
  %v202 = vpop.f32.mrb[0].mxu0
  %v203 = vadd.f32 0.0, %v202
  %v204 = vpop.f32.mrb[0].mxu0
  %205 = vmatprep.mubr.bf16.mxu0 0
  %206 = vmatmul.mubr.bf16.gmra.mrb[0].mxu0 %v135
  %v207 = vpop.f32.mrb[0].mxu0
  %v208 = vadd.f32 0.0, %v207
  %v209 = vpop.f32.mrb[0].mxu0
  %v210 = vpop.f32.mrb[0].mxu0
  %v211 = vadd.f32 0.0, %v210
  %v212 = vpop.f32.mrb[0].mxu0
  %213 = vmatprep.mubr.bf16.mxu0 0
  %214 = vmatmul.mubr.bf16.gmra.mrb[0].mxu0 %v138
  %v215 = vpop.f32.mrb[0].mxu0
  %v216 = vadd.f32 0.0, %v215
  %v217 = vpop.f32.mrb[0].mxu0
  %v218 = vpop.f32.mrb[0].mxu0
  %v219 = vadd.f32 0.0, %v218
  %v220 = vpop.f32.mrb[0].mxu0
  %221 = vmatprep.mubr.bf16.mxu0 0
  %222 = vmatmul.mubr.bf16.gmra.mrb[0].mxu0 %v141
  %v223 = vpop.f32.mrb[0].mxu0
  %v224 = vadd.f32 0.0, %v223
  %v225 = vpop.f32.mrb[0].mxu0
  %v226 = vpop.f32.mrb[0].mxu0
  %v227 = vadd.f32 0.0, %v226
  %v228 = vpop.f32.mrb[0].mxu0
  %229 = vmatprep.mubr.bf16.mxu0 0
  %230 = vmatmul.mubr.bf16.gmra.mrb[0].mxu0 %v144
  %v231 = vpop.f32.mrb[0].mxu0
  %v232 = vadd.f32 0.0, %v231
  %v233 = vpop.f32.mrb[0].mxu0
  %v234 = vpop.f32.mrb[0].mxu0
  %v235 = vadd.f32 0.0, %v234
  %v236 = vpop.f32.mrb[0].mxu0
  %237 = vmatprep.mubr.bf16.mxu0 0
  %238 = vmatmul.mubr.bf16.gmra.mrb[0].mxu0 %v147
  %v239 = vpop.f32.mrb[0].mxu0
  %v240 = vadd.f32 0.0, %v239
  %v241 = vpop.f32.mrb[0].mxu0
  %v242 = vpop.f32.mrb[0].mxu0
  %v243 = vadd.f32 0.0, %v242
  %v244 = vpop.f32.mrb[0].mxu0
  %245 = vdwg.mxu0
  %v246 = vadd.f32 %v36, %v184
  %v247 = vadd.f32 %v37, %v187
  %v248 = vadd.f32 %v38, %v192
  %v249 = vadd.f32 %v39, %v195
  %v250 = vadd.f32 %v40, %v200
  %v251 = vadd.f32 %v41, %v203
  %v252 = vadd.f32 %v42, %v208
  %v253 = vadd.f32 %v43, %v211
  %v254 = vadd.f32 %v44, %v216
  %v255 = vadd.f32 %v45, %v219
  %v256 = vadd.f32 %v46, %v224
  %v257 = vadd.f32 %v47, %v227
  %v258 = vadd.f32 %v48, %v232
  %v259 = vadd.f32 %v49, %v235
  %v260 = vadd.f32 %v50, %v240
  %v261 = vadd.f32 %v51, %v243
  %vm262 = vcmask 523264
  %263 = vst.msk [vmem:[#allocation2] sm:$0xff] %vm262, %v246
  %264 = vst.msk [vmem:[#allocation2 + $0x8] sm:$0xff] %vm262, %v247
  %265 = vst.msk [vmem:[#allocation2 + $0x10] sm:$0xff] %vm262, %v248
  %266 = vst.msk [vmem:[#allocation2 + $0x18] sm:$0xff] %vm262, %v249
  %267 = vst.msk [vmem:[#allocation2 + $0x20] sm:$0xff] %vm262, %v250
  %268 = vst.msk [vmem:[#allocation2 + $0x28] sm:$0xff] %vm262, %v251
  %269 = vst.msk [vmem:[#allocation2 + $0x30] sm:$0xff] %vm262, %v252
  %270 = vst.msk [vmem:[#allocation2 + $0x38] sm:$0xff] %vm262, %v253
  %271 = vst.msk [vmem:[#allocation2 + $0x40] sm:$0xff] %vm262, %v254
  %272 = vst.msk [vmem:[#allocation2 + $0x48] sm:$0xff] %vm262, %v255
  %273 = vst.msk [vmem:[#allocation2 + $0x50] sm:$0xff] %vm262, %v256
  %274 = vst.msk [vmem:[#allocation2 + $0x58] sm:$0xff] %vm262, %v257
  %275 = vst.msk [vmem:[#allocation2 + $0x60] sm:$0xff] %vm262, %v258
  %276 = vst.msk [vmem:[#allocation2 + $0x68] sm:$0xff] %vm262, %v259
  %277 = vst.msk [vmem:[#allocation2 + $0x70] sm:$0xff] %vm262, %v260
  %278 = vst.msk [vmem:[#allocation2 + $0x78] sm:$0xff] %vm262, %v261
  // Predicated region
  $region18: #{transformer_forward.13} parent=0 // pred_check
    %p279 = pneg %p15
  $region19: #{transformer_forward.13} parent=0 // pred_check_branch
    %281 = sbr.rel (%p279) target = $region21
  $region20: #{transformer_forward.13} parent=0 // pred_region
    %v282 = vld [vmem:[#allocation2] sm:$0xff]
    %v283 = vld [vmem:[#allocation2 + $0x8] sm:$0xff]
    %v284 = vld [vmem:[#allocation2 + $0x10] sm:$0xff]
    %v285 = vld [vmem:[#allocation2 + $0x18] sm:$0xff]
    %v286 = vld [vmem:[#allocation2 + $0x20] sm:$0xff]
    %v287 = vld [vmem:[#allocation2 + $0x28] sm:$0xff]
    %v288 = vld [vmem:[#allocation2 + $0x30] sm:$0xff]
    %v289 = vld [vmem:[#allocation2 + $0x38] sm:$0xff]
    %v290 = vld [vmem:[#allocation2 + $0x40] sm:$0xff]
    %v291 = vld [vmem:[#allocation2 + $0x48] sm:$0xff]
    %v292 = vld [vmem:[#allocation2 + $0x50] sm:$0xff]
    %v293 = vld [vmem:[#allocation2 + $0x58] sm:$0xff]
    %v294 = vld [vmem:[#allocation2 + $0x60] sm:$0xff]
    %v295 = vld [vmem:[#allocation2 + $0x68] sm:$0xff]
    %v296 = vld [vmem:[#allocation2 + $0x70] sm:$0xff]
    %v297 = vld [vmem:[#allocation2 + $0x78] sm:$0xff]
    %v298 = vld [vmem:[%s2] sm:$0x1]
    %v300 = vlaneseq
    %v301 = vshrl.u32 %v300, 7
    %v302 = vsub.s32 0, %v301
    %v303 = vrot.slane %v298, %v302
    %v305 = vadd.f32 %v282, %v303
    %v306 = vadd.f32 %v283, %v303
    %v307 = vadd.f32 %v284, %v303
    %v308 = vadd.f32 %v285, %v303
    %v309 = vadd.f32 %v286, %v303
    %v310 = vadd.f32 %v287, %v303
    %v311 = vadd.f32 %v288, %v303
    %v312 = vadd.f32 %v289, %v303
    %v313 = vadd.f32 %v290, %v303
    %v314 = vadd.f32 %v291, %v303
    %v315 = vadd.f32 %v292, %v303
    %v316 = vadd.f32 %v293, %v303
    %v317 = vadd.f32 %v294, %v303
    %v318 = vadd.f32 %v295, %v303
    %v319 = vadd.f32 %v296, %v303
    %v320 = vadd.f32 %v297, %v303
    %v321 = vpack.c.bf16 %v306, %v305
    %v322 = vpack.c.bf16 %v308, %v307
    %v323 = vpack.c.bf16 %v310, %v309
    %v324 = vpack.c.bf16 %v312, %v311
    %v325 = vpack.c.bf16 %v314, %v313
    %v326 = vpack.c.bf16 %v316, %v315
    %v327 = vpack.c.bf16 %v318, %v317
    %v328 = vpack.c.bf16 %v320, %v319
    %v337 = vunpack.c.l.b16 %v321
    %v338 = vunpack.c.h.b16 %v321
    %v339 = vunpack.c.l.b16 %v322
    %v340 = vunpack.c.h.b16 %v322
    %v341 = vunpack.c.l.b16 %v323
    %v342 = vunpack.c.h.b16 %v323
    %v343 = vunpack.c.l.b16 %v324
    %v344 = vunpack.c.h.b16 %v324
    %v345 = vunpack.c.l.b16 %v325
    %v346 = vunpack.c.h.b16 %v325
    %v347 = vunpack.c.l.b16 %v326
    %v348 = vunpack.c.h.b16 %v326
    %v349 = vunpack.c.l.b16 %v327
    %v350 = vunpack.c.h.b16 %v327
    %v351 = vunpack.c.l.b16 %v328
    %v352 = vunpack.c.h.b16 %v328
    %v353 = vpack.c.b16 %v337, %v337
    %v354 = vpack.c.b16 %v338, %v338
    %v355 = vpack.c.b16 %v339, %v339
    %v356 = vpack.c.b16 %v340, %v340
    %v357 = vpack.c.b16 %v341, %v341
    %v358 = vpack.c.b16 %v342, %v342
    %v359 = vpack.c.b16 %v343, %v343
    %v360 = vpack.c.b16 %v344, %v344
    %v361 = vpack.c.b16 %v345, %v345
    %v362 = vpack.c.b16 %v346, %v346
    %v363 = vpack.c.b16 %v347, %v347
    %v364 = vpack.c.b16 %v348, %v348
    %v365 = vpack.c.b16 %v349, %v349
    %v366 = vpack.c.b16 %v350, %v350
    %v367 = vpack.c.b16 %v351, %v351
    %v368 = vpack.c.b16 %v352, %v352
    %vm385 = vcmask 519168
    %386 = vst.msk [vmem:[%s3] sm:$0xf] %vm385, %v353
    %387 = vst.msk [vmem:[%s3 + $0x4] sm:$0xf] %vm385, %v354
    %388 = vst.msk [vmem:[%s3 + $0x8] sm:$0xf] %vm385, %v355
    %389 = vst.msk [vmem:[%s3 + $0xc] sm:$0xf] %vm385, %v356
    %390 = vst.msk [vmem:[%s3 + $0x10] sm:$0xf] %vm385, %v357
    %391 = vst.msk [vmem:[%s3 + $0x14] sm:$0xf] %vm385, %v358
    %392 = vst.msk [vmem:[%s3 + $0x18] sm:$0xf] %vm385, %v359
    %393 = vst.msk [vmem:[%s3 + $0x1c] sm:$0xf] %vm385, %v360
    %394 = vst.msk [vmem:[%s3 + $0x20] sm:$0xf] %vm385, %v361
    %395 = vst.msk [vmem:[%s3 + $0x24] sm:$0xf] %vm385, %v362
    %396 = vst.msk [vmem:[%s3 + $0x28] sm:$0xf] %vm385, %v363
    %397 = vst.msk [vmem:[%s3 + $0x2c] sm:$0xf] %vm385, %v364
    %398 = vst.msk [vmem:[%s3 + $0x30] sm:$0xf] %vm385, %v365
    %399 = vst.msk [vmem:[%s3 + $0x34] sm:$0xf] %vm385, %v366
    %400 = vst.msk [vmem:[%s3 + $0x38] sm:$0xf] %vm385, %v367
    %401 = vst.msk [vmem:[%s3 + $0x3c] sm:$0xf] %vm385, %v368
  $region21: #{transformer_forward.13} parent=0 // pred_fallthru
    _
  // Predicated region
  $region22: #{transformer_forward.13} parent=0 // pred_check
    _
  $region23: #{transformer_forward.13} parent=0 // pred_check_branch
    %403 = sbr.rel (0) target = $region25
  $region24: #{transformer_forward.13} parent=0 // pred_region
    _
  $region25: #{transformer_forward.13} parent=0 // pred_fallthru
    _
  // Predicated region
  $region26: #{transformer_forward.13} parent=0 // pred_check
    _
  $region27: #{transformer_forward.13} parent=0 // pred_check_branch
    %405 = sbr.rel (0) target = $region29
  $region28: #{transformer_forward.13} parent=0 // pred_region
    _
  $region29: #{transformer_forward.13} parent=0 // pred_fallthru
    _

// kernel: transformer_forward.16
$region0: #{transformer_forward.16}
  #allocation0 [shape = 'u32[]', space=smem, size = 0x4, offset = 0x4, fixed_abs, tag = 'smem constant byte address 0x4 - core index']
  #allocation1 [shape = 'u32[144,128]{1,0:T(1,128)}', space=vmem, size = 0x12000, scoped, tag = 'internal scratch']
  #allocation2 [shape = 'f32[16,32]{1,0:T(8,128)}', space=vmem, size = 0x2000, scoped, tag = 'scratch operand']
  %s0 = inlined_call_operand.vmem [shape: bf16[16,32], index: 0, kind: input, shape index: {}]
  %s1 = inlined_call_operand.vmem [shape: bf16[32,32], index: 1, kind: input, shape index: {}]
  %s2 = inlined_call_operand.vmem [shape: f32[1,32], index: 2, kind: input, shape index: {}]
  %s3 = inlined_call_operand.vmem [shape: bf16[16,32], index: 3, kind: input, shape index: {}]
  %s4 = inlined_call_operand.vmem [shape: bf16[16,32], index: 4, kind: output, shape index: {}]
  %s5 = sld [smem:[#allocation0]]
  $region34: #{transformer_forward.16} parent=0
    _
  %s7 = ssub.s32 1, %s5
  %s8 = scalar_select 0, %s7, %s5
  // Predicated region
  $region2: #{transformer_forward.16} parent=0 // pred_check
    _
  $region3: #{transformer_forward.16} parent=0 // pred_check_branch
    %10 = sbr.rel (0) target = $region5
  $region4: #{transformer_forward.16} parent=0 // pred_region
    _
  $region5: #{transformer_forward.16} parent=0 // pred_fallthru
    _
  // Predicated region
  $region6: #{transformer_forward.16} parent=0 // pred_check
    _
  $region7: #{transformer_forward.16} parent=0 // pred_check_branch
    %12 = sbr.rel (0) target = $region9
  $region8: #{transformer_forward.16} parent=0 // pred_region
    _
  $region9: #{transformer_forward.16} parent=0 // pred_fallthru
    _
  // Predicated region
  $region10: #{transformer_forward.16} parent=0 // pred_check
    _
  $region11: #{transformer_forward.16} parent=0 // pred_check_branch
    %14 = sbr.rel (0) target = $region13
  $region12: #{transformer_forward.16} parent=0 // pred_region
    _
  $region13: #{transformer_forward.16} parent=0 // pred_fallthru
    _
  // Predicated region
  $region14: #{transformer_forward.16} parent=0 // pred_check
    _
  $region15: #{transformer_forward.16} parent=0 // pred_check_branch
    %16 = sbr.rel (0) target = $region17
  $region16: #{transformer_forward.16} parent=0 // pred_region
    _
  $region17: #{transformer_forward.16} parent=0 // pred_fallthru
    _
  %p18 = scmp.eq.s32.totalorder 0, 0
  // Predicated region
  $region18: #{transformer_forward.16} parent=0 // pred_check
    %p19 = pneg %p18
  $region19: #{transformer_forward.16} parent=0 // pred_check_branch
    %21 = sbr.rel (%p19) target = $region21
  $region20: #{transformer_forward.16} parent=0 // pred_region
    %vm22 = vcmask 261120
    %23 = vst.msk [vmem:[#allocation2] sm:$0xff] %vm22, 0.0
    %24 = vst.msk [vmem:[#allocation2 + $0x8] sm:$0xff] %vm22, 0.0
  $region21: #{transformer_forward.16} parent=0 // pred_fallthru
    _
  %v25 = vld [vmem:[#allocation2] sm:$0xff]
  %v26 = vld [vmem:[#allocation2 + $0x8] sm:$0xff]
  %v27 = vld [vmem:[%s0] sm:$0xf]
  %v28 = vld [vmem:[%s0 + $0x4] sm:$0xf]
  %v29 = vld [vmem:[%s1] sm:$0xf]
  %v30 = vld [vmem:[%s1 + $0x4] sm:$0xf]
  %v31 = vld [vmem:[%s1 + $0x8] sm:$0xf]
  %v32 = vld [vmem:[%s1 + $0xc] sm:$0xf]
  %v35 = vunpack.c.l.b16 %v27
  %v36 = vunpack.c.l.b16 %v28
  %v37 = vpack.c.b16 %v36, %v35
  %v42 = vunpack.c.l.b16 %v29
  %v43 = vunpack.c.l.b16 %v30
  %v44 = vunpack.c.l.b16 %v31
  %v45 = vunpack.c.l.b16 %v32
  %v46 = vpack.c.b16 %v43, %v42
  %v47 = vpack.c.b16 %v45, %v44
  %vm50 = vcmask 261120
  %v52 = vsel %vm50, %v37, 0
  %54 = vmatprep.subr.bf16.mxu0 0
  %55 = vmatpush1.bf16.msra.mxu0 %v46
  %56 = vmatprep.subr.bf16.mxu0 0
  %57 = vmatpush1.bf16.msra.mxu0 %v47
  %58 = vmatprep.subr.bf16.mxu0 0
  %59 = vmatpush1.bf16.msra.mxu0 0
  %60 = vmatprep.subr.bf16.mxu0 0
  %61 = vmatpush1.bf16.msra.mxu0 0
  %62 = vmatprep.subr.bf16.mxu0 0
  %63 = vmatpush1.bf16.msra.mxu0 0
  %64 = vmatprep.subr.bf16.mxu0 0
  %65 = vmatpush1.bf16.msra.mxu0 0
  %66 = vmatprep.subr.bf16.mxu0 0
  %67 = vmatpush1.bf16.msra.mxu0 0
  %68 = vmatprep.subr.bf16.mxu0 0
  %69 = vmatpush1.bf16.msra.mxu0 0
  %70 = vmatprep.subr.bf16.mxu0 0
  %71 = vmatpush1.bf16.msra.mxu0 0
  %72 = vmatprep.subr.bf16.mxu0 0
  %73 = vmatpush1.bf16.msra.mxu0 0
  %74 = vmatprep.subr.bf16.mxu0 0
  %75 = vmatpush1.bf16.msra.mxu0 0
  %76 = vmatprep.subr.bf16.mxu0 0
  %77 = vmatpush1.bf16.msra.mxu0 0
  %78 = vmatprep.subr.bf16.mxu0 0
  %79 = vmatpush1.bf16.msra.mxu0 0
  %80 = vmatprep.subr.bf16.mxu0 0
  %81 = vmatpush1.bf16.msra.mxu0 0
  %82 = vmatprep.subr.bf16.mxu0 0
  %83 = vmatpush1.bf16.msra.mxu0 0
  %84 = vmatprep.subr.bf16.mxu0 0
  %85 = vmatpush1.bf16.msra.mxu0 0
  %86 = vmatprep.mubr.bf16.mxu0 0
  %87 = vmatmul.mubr.bf16.gmra.mrb[0].mxu0 %v52
  %v88 = vpop.f32.mrb[0].mxu0
  %v89 = vadd.f32 0.0, %v88
  %v90 = vpop.f32.mrb[0].mxu0
  %v91 = vpop.f32.mrb[0].mxu0
  %v92 = vadd.f32 0.0, %v91
  %v93 = vpop.f32.mrb[0].mxu0
  %94 = vdwg.mxu0
  %v95 = vadd.f32 %v25, %v89
  %v96 = vadd.f32 %v26, %v92
  %97 = vst.msk [vmem:[#allocation2] sm:$0xff] %vm50, %v95
  %98 = vst.msk [vmem:[#allocation2 + $0x8] sm:$0xff] %vm50, %v96
  // Predicated region
  $region22: #{transformer_forward.16} parent=0 // pred_check
    %p99 = pneg %p18
  $region23: #{transformer_forward.16} parent=0 // pred_check_branch
    %101 = sbr.rel (%p99) target = $region25
  $region24: #{transformer_forward.16} parent=0 // pred_region
    %v102 = vld [vmem:[#allocation2] sm:$0xff]
    %v103 = vld [vmem:[#allocation2 + $0x8] sm:$0xff]
    %v104 = vld [vmem:[%s2] sm:$0x1]
    %v106 = vlaneseq
    %v107 = vshrl.u32 %v106, 7
    %v108 = vsub.s32 0, %v107
    %v109 = vrot.slane %v104, %v108
    %v111 = vadd.f32 %v102, %v109
    %v112 = vadd.f32 %v103, %v109
    %v113 = vld [vmem:[%s3] sm:$0xf]
    %v114 = vld [vmem:[%s3 + $0x4] sm:$0xf]
    %v115 = vunpack.c.l.bf16 %v113
    %v116 = vunpack.c.l.bf16 %v114
    %v117 = vadd.f32 %v111, %v115
    %v118 = vadd.f32 %v112, %v116
    %v119 = vpack.c.bf16 %v118, %v117
    %v121 = vunpack.c.l.b16 %v119
    %v122 = vunpack.c.h.b16 %v119
    %v123 = vpack.c.b16 %v121, %v121
    %v124 = vpack.c.b16 %v122, %v122
    %vm127 = vcmask 257024
    %128 = vst.msk [vmem:[%s4] sm:$0xf] %vm127, %v123
    %129 = vst.msk [vmem:[%s4 + $0x4] sm:$0xf] %vm127, %v124
  $region25: #{transformer_forward.16} parent=0 // pred_fallthru
    _
  // Predicated region
  $region26: #{transformer_forward.16} parent=0 // pred_check
    _
  $region27: #{transformer_forward.16} parent=0 // pred_check_branch
    %131 = sbr.rel (0) target = $region29
  $region28: #{transformer_forward.16} parent=0 // pred_region
    _
  $region29: #{transformer_forward.16} parent=0 // pred_fallthru
    _
  // Predicated region
  $region30: #{transformer_forward.16} parent=0 // pred_check
    _
  $region31: #{transformer_forward.16} parent=0 // pred_check_branch
    %133 = sbr.rel (0) target = $region33
  $region32: #{transformer_forward.16} parent=0 // pred_region
    _
  $region33: #{transformer_forward.16} parent=0 // pred_fallthru
    _

// kernel: transformer_forward.15
$region0: #{transformer_forward.15}
  #allocation0 [shape = 'u32[]', space=smem, size = 0x4, offset = 0x4, fixed_abs, tag = 'smem constant byte address 0x4 - core index']
  #allocation1 [shape = 'u32[144,128]{1,0:T(1,128)}', space=vmem, size = 0x12000, scoped, tag = 'internal scratch']
  #allocation2 [shape = 's32[1]{0}', space=sflag, size = 0x4, scoped, tag = 'scoped memory for transformer_forward.15']
  #allocation3 [shape = 'u8[512]{0}', space=smem, size = 0x200, scoped, tag = 'prefetched SMEM operand 0']
  %s0 = inlined_call_operand.vmem [shape: s32[2], index: 0, kind: input, shape index: {}]
  %s1 = inlined_call_operand.vmem [shape: bf16[2,8,96], index: 1, kind: input, shape index: {}]
  %s2 = inlined_call_operand.vmem [shape: bf16[128,32], index: 2, kind: input, shape index: {}]
  %s3 = inlined_call_operand.vmem [shape: f32[4,8], index: 3, kind: input, shape index: {}]
  %s4 = inlined_call_operand.vmem [shape: f32[4,8], index: 4, kind: input, shape index: {}]
  %s5 = inlined_call_operand.vmem [shape: bf16[2,8,32], index: 5, kind: output, shape index: {}]
  %s6 = sld [smem:[#allocation0]]
  $region49: #{transformer_forward.15} parent=0
    _
  %s8 = ssub.s32 1, %s6
  %s9 = scalar_select 0, %s8, %s6
  %s10 = sshll.u32 %s0, 4
  %s11 = int_to_ptr.vmem [resolvable:$true] %s10
  %13 = dma.vmem_to_smem %s11, 16, [#allocation3], [#allocation2]
  %14 = dma.done [#allocation2], 16
  %15 = sfence
  loop: start=0, step=1, limit=4
  $region2: #{transformer_forward.15} parent=0 // loop_pre_header
    _
  $region3: #{transformer_forward.15} parent=0 // loop_header
    %s17 = sphi 0, %s21
    %p18 = scmp.ge.s32.totalorder %s17, 4
    %s27 = sphi 0, %s29
    %s30 = sphi 0, %s27
    %s31 = sphi 0, %s30
    %s47 = sphi 0, %s31
    %s51 = sphi 0, %s51
    %s53 = sphi 0, %s51
    %s54 = sphi 0, %s53
    %s68 = sphi 0, %s54
    %s72 = sphi 0, %s72
    %s74 = sphi 0, %s72
    %s75 = sphi 0, %s74
    %s89 = sphi 0, %s75
    %s93 = sphi 0, %s93
    %s95 = sphi 0, %s93
    %s96 = sphi 0, %s95
    %s110 = sphi 0, %s96
    %s116 = sphi 0, %s118
    %s119 = sphi 0, %s116
    %s120 = sphi 0, %s119
    %s136 = sphi 0, %s120
  $region4: #{transformer_forward.15} parent=0 // loop_header_branch
    %20 = sbr.rel (%p18) target = $region8
  $region5: #{transformer_forward.15} parent=0 // loop_body
    %s22 = ssub.s32 %s17, 1
    %s23 = ssub.s32 %s17, 2
    %s24 = sadd.s32 %s17, 1
    %s25 = ssub.s32 %s17, %s24
    %p26 = scmp.eq.s32.totalorder %s25, 0
    %s28 = sadd.s32 %s27, 1
    %s29 = scalar_select %p26, %s27, %s28
    %p32 = pneg %p26
    %p33 = scmp.eq.s32.totalorder %s17, 1
    %p34 = por %p32, %p33
    %p35 = scmp.ne.s32.totalorder %s27, %s30
    %p36 = scmp.eq.s32.totalorder %s17, 0
    %p37 = por %p35, %p36
    %p38 = scmp.ne.s32.totalorder %s27, %s30
    %p39 = scmp.eq.s32.totalorder %s22, 1
    %p40 = por %p38, %p39
    %p41 = scmp.ne.s32.totalorder %s30, %s31
    %p42 = scmp.eq.s32.totalorder %s22, 0
    %p43 = por %p41, %p42
    %p44 = scmp.ne.s32.totalorder %s30, %s31
    %p45 = scmp.eq.s32.totalorder %s23, 1
    %p46 = por %p44, %p45
    %p48 = scmp.ne.s32.totalorder %s31, %s47
    %p49 = scmp.eq.s32.totalorder %s23, 0
    %p50 = por %p48, %p49
    %s52 = sadd.s32 %s51, 1
    %p55 = scmp.eq.s32.totalorder %s17, 1
    %p56 = scmp.ne.s32.totalorder %s51, %s53
    %p57 = scmp.eq.s32.totalorder %s17, 0
    %p58 = por %p56, %p57
    %p59 = scmp.ne.s32.totalorder %s51, %s53
    %p60 = scmp.eq.s32.totalorder %s22, 1
    %p61 = por %p59, %p60
    %p62 = scmp.ne.s32.totalorder %s53, %s54
    %p63 = scmp.eq.s32.totalorder %s22, 0
    %p64 = por %p62, %p63
    %p65 = scmp.ne.s32.totalorder %s53, %s54
    %p66 = scmp.eq.s32.totalorder %s23, 1
    %p67 = por %p65, %p66
    %p69 = scmp.ne.s32.totalorder %s54, %s68
    %p70 = scmp.eq.s32.totalorder %s23, 0
    %p71 = por %p69, %p70
    %s73 = sadd.s32 %s72, 1
    %p76 = scmp.eq.s32.totalorder %s17, 1
    %p77 = scmp.ne.s32.totalorder %s72, %s74
    %p78 = scmp.eq.s32.totalorder %s17, 0
    %p79 = por %p77, %p78
    %p80 = scmp.ne.s32.totalorder %s72, %s74
    %p81 = scmp.eq.s32.totalorder %s22, 1
    %p82 = por %p80, %p81
    %p83 = scmp.ne.s32.totalorder %s74, %s75
    %p84 = scmp.eq.s32.totalorder %s22, 0
    %p85 = por %p83, %p84
    %p86 = scmp.ne.s32.totalorder %s74, %s75
    %p87 = scmp.eq.s32.totalorder %s23, 1
    %p88 = por %p86, %p87
    %p90 = scmp.ne.s32.totalorder %s75, %s89
    %p91 = scmp.eq.s32.totalorder %s23, 0
    %p92 = por %p90, %p91
    %s94 = sadd.s32 %s93, 1
    %p97 = scmp.eq.s32.totalorder %s17, 1
    %p98 = scmp.ne.s32.totalorder %s93, %s95
    %p99 = scmp.eq.s32.totalorder %s17, 0
    %p100 = por %p98, %p99
    %p101 = scmp.ne.s32.totalorder %s93, %s95
    %p102 = scmp.eq.s32.totalorder %s22, 1
    %p103 = por %p101, %p102
    %p104 = scmp.ne.s32.totalorder %s95, %s96
    %p105 = scmp.eq.s32.totalorder %s22, 0
    %p106 = por %p104, %p105
    %p107 = scmp.ne.s32.totalorder %s95, %s96
    %p108 = scmp.eq.s32.totalorder %s23, 1
    %p109 = por %p107, %p108
    %p111 = scmp.ne.s32.totalorder %s96, %s110
    %p112 = scmp.eq.s32.totalorder %s23, 0
    %p113 = por %p111, %p112
    %s114 = ssub.s32 %s17, %s24
    %p115 = scmp.eq.s32.totalorder %s114, 0
    %s117 = sadd.s32 %s116, 1
    %s118 = scalar_select %p115, %s116, %s117
    %p121 = pneg %p115
    %p122 = scmp.eq.s32.totalorder %s17, 1
    %p123 = por %p121, %p122
    %p124 = scmp.ne.s32.totalorder %s116, %s119
    %p125 = scmp.eq.s32.totalorder %s17, 0
    %p126 = por %p124, %p125
    %p127 = scmp.ne.s32.totalorder %s116, %s119
    %p128 = scmp.eq.s32.totalorder %s22, 1
    %p129 = por %p127, %p128
    %p130 = scmp.ne.s32.totalorder %s119, %s120
    %p131 = scmp.eq.s32.totalorder %s22, 0
    %p132 = por %p130, %p131
    %p133 = scmp.ne.s32.totalorder %s119, %s120
    %p134 = scmp.eq.s32.totalorder %s23, 1
    %p135 = por %p133, %p134
    %p137 = scmp.ne.s32.totalorder %s120, %s136
    %p138 = scmp.eq.s32.totalorder %s23, 0
    %p139 = por %p137, %p138
    %p140 = scmp.le.s32.totalorder 1, %s17
    %p141 = scmp.lt.s32.totalorder %s17, 3
    %p142 = pnand %p140, %p141
    %p143 = pneg %p142
    // Predicated region
    $region9: #{transformer_forward.15} parent=5 // pred_check
      _
    $region10: #{transformer_forward.15} parent=5 // pred_check_branch
      %145 = sbr.rel (%p142) target = $region12
    $region11: #{transformer_forward.15} parent=5 // pred_region
      %s146 = ssub.s32 %s17, 1
      // Predicated region
      $region13: #{transformer_forward.15} parent=11 // pred_check
        %p147 = pneg %p64
      $region14: #{transformer_forward.15} parent=11 // pred_check_branch
        %149 = sbr.rel (%p147) target = $region16
      $region15: #{transformer_forward.15} parent=11 // pred_region
        _
      $region16: #{transformer_forward.15} parent=11 // pred_fallthru
        _
      // Predicated region
      $region17: #{transformer_forward.15} parent=11 // pred_check
        %p150 = pneg %p85
      $region18: #{transformer_forward.15} parent=11 // pred_check_branch
        %152 = sbr.rel (%p150) target = $region20
      $region19: #{transformer_forward.15} parent=11 // pred_region
        _
      $region20: #{transformer_forward.15} parent=11 // pred_fallthru
        _
      // Predicated region
      $region21: #{transformer_forward.15} parent=11 // pred_check
        %p153 = pneg %p106
      $region22: #{transformer_forward.15} parent=11 // pred_check_branch
        %155 = sbr.rel (%p153) target = $region24
      $region23: #{transformer_forward.15} parent=11 // pred_region
        _
      $region24: #{transformer_forward.15} parent=11 // pred_fallthru
        _
    $region12: #{transformer_forward.15} parent=5 // pred_fallthru
      _
    %p156 = scmp.lt.s32.totalorder %s17, 2
    // Predicated region
    $region25: #{transformer_forward.15} parent=5 // pred_check
      %p157 = pneg %p156
    $region26: #{transformer_forward.15} parent=5 // pred_check_branch
      %159 = sbr.rel (%p157) target = $region28
    $region27: #{transformer_forward.15} parent=5 // pred_region
      // Predicated region
      $region29: #{transformer_forward.15} parent=27 // pred_check
        %p160 = pneg %p37
      $region30: #{transformer_forward.15} parent=27 // pred_check_branch
        %162 = sbr.rel (%p160) target = $region32
      $region31: #{transformer_forward.15} parent=27 // pred_region
        %p163 = scmp.lt.s32.totalorder %s17, 1
        %s164 = scalar_select %p163, %s17, 1
        %s165 = smul.addr %s164, 4
        %s166 = scalar_lea.vmem %s1, %s165
      $region32: #{transformer_forward.15} parent=27 // pred_fallthru
        _
    $region28: #{transformer_forward.15} parent=5 // pred_fallthru
      _
    %p167 = scmp.le.s32.totalorder 1, %s17
    %p168 = scmp.lt.s32.totalorder %s17, 3
    %p169 = pnand %p167, %p168
    %p170 = pneg %p169
    // Predicated region
    $region33: #{transformer_forward.15} parent=5 // pred_check
      _
    $region34: #{transformer_forward.15} parent=5 // pred_check_branch
      %172 = sbr.rel (%p169) target = $region36
    $region35: #{transformer_forward.15} parent=5 // pred_region
      %s173 = ssub.s32 %s17, 1
      %p174 = scmp.lt.s32.totalorder %s22, 1
      %s175 = scalar_select %p174, %s22, 1
      %s176 = smul.addr %s175, 4
      %s177 = scalar_lea.vmem %s1, %s176
      %p178 = pneg %p43
      %p179 = pneg %p40
      %p180 = pneg %p64
      %p181 = pneg %p61
      %p182 = pneg %p85
      %p183 = pneg %p82
      %p184 = pneg %p106
      %p185 = pneg %p103
      %p186 = pneg %p132
      %p187 = pneg %p129
      %p188 = scmp.lt.s32.totalorder %s22, 1
      %s189 = scalar_select %p188, %s22, 1
      %s190 = smul.addr %s189, 4
      %s191 = scalar_lea.vmem %s5, %s190
      %p192 = scmp.lt.s32.totalorder %s22, 1
      %s193 = scalar_select %p192, %s22, 1
      %s194 = smul.addr %s193, 4
      %s195 = scalar_lea.vmem %s1, %s194
      %p196 = scmp.lt.s32.totalorder %s22, 1
      %s197 = scalar_select %p196, %s22, 1
      %s198 = smul.addr %s197, 4
      %s199 = scalar_lea.vmem %s5, %s198
      %s201 = sld [smem:[#allocation3 + %s22]]
      %v202 = vlaneseq
      %v203 = vshrl.u32 %v202, 7
      %v204 = vlaneseq
      %v205 = vand.u32 %v204, 127
      %vm206 = vcmp.gt.s32.totalorder %v205, %v203
      %v207 = vstv %s201
      %vm208 = vcmp.ge.s32.totalorder %v205, %v207
      %vm209 = vmor %vm206, %vm208
      %v210 = vsel %vm209, -1e+30, 0.0
      %v211 = vld [vmem:[%s195] sm:$0xf]
      %v212 = vunpack.c.l.bf16 %v211
      %v213 = vmul.f32 %v212, 0.35355338
      %v214 = vld [vmem:[%s3] sm:$0x1]
      %v215 = vlaneseq
      %v216 = vshrl.u32 %v215, 7
      %v217 = vsub.s32 0, %v216
      %v218 = vrot.slane %v214, %v217
      %v219 = vadd.f32 %v213, %v218
      %v220 = vpack.c.bf16 %v219, %v219
      %v221 = vld [vmem:[%s4] sm:$0x1]
      %v222 = vlaneseq
      %v223 = vshrl.u32 %v222, 7
      %v224 = vsub.s32 0, %v223
      %v225 = vrot.slane %v221, %v224
      %v226 = vadd.f32 %v213, %v225
      %v227 = vpack.c.bf16 %v226, %v226
      %v228 = vld [vmem:[%s2] sm:$0xf]
      %v229 = vld [vmem:[%s2 + $0x4] sm:$0xf]
      %v230 = vld [vmem:[%s2 + $0x8] sm:$0xf]
      %v231 = vld [vmem:[%s2 + $0xc] sm:$0xf]
      %v232 = vld [vmem:[%s2 + $0x10] sm:$0xf]
      %v233 = vld [vmem:[%s2 + $0x14] sm:$0xf]
      %v234 = vld [vmem:[%s2 + $0x18] sm:$0xf]
      %v235 = vld [vmem:[%s2 + $0x1c] sm:$0xf]
      %v236 = vld [vmem:[%s2 + $0x20] sm:$0xf]
      %v237 = vld [vmem:[%s2 + $0x24] sm:$0xf]
      %v238 = vld [vmem:[%s2 + $0x28] sm:$0xf]
      %v239 = vld [vmem:[%s2 + $0x2c] sm:$0xf]
      %v240 = vld [vmem:[%s2 + $0x30] sm:$0xf]
      %v241 = vld [vmem:[%s2 + $0x34] sm:$0xf]
      %v242 = vld [vmem:[%s2 + $0x38] sm:$0xf]
      %v243 = vld [vmem:[%s2 + $0x3c] sm:$0xf]
      %v260 = vunpack.c.l.b16 %v228
      %v261 = vunpack.c.l.b16 %v229
      %v262 = vunpack.c.l.b16 %v230
      %v263 = vunpack.c.l.b16 %v231
      %v264 = vunpack.c.l.b16 %v232
      %v265 = vunpack.c.l.b16 %v233
      %v266 = vunpack.c.l.b16 %v234
      %v267 = vunpack.c.l.b16 %v235
      %v268 = vunpack.c.l.b16 %v236
      %v269 = vunpack.c.l.b16 %v237
      %v270 = vunpack.c.l.b16 %v238
      %v271 = vunpack.c.l.b16 %v239
      %v272 = vunpack.c.l.b16 %v240
      %v273 = vunpack.c.l.b16 %v241
      %v274 = vunpack.c.l.b16 %v242
      %v275 = vunpack.c.l.b16 %v243
      %v276 = vpack.c.b16 %v261, %v260
      %v277 = vpack.c.b16 %v263, %v262
      %v278 = vpack.c.b16 %v265, %v264
      %v279 = vpack.c.b16 %v267, %v266
      %v280 = vpack.c.b16 %v269, %v268
      %v281 = vpack.c.b16 %v271, %v270
      %v282 = vpack.c.b16 %v273, %v272
      %v283 = vpack.c.b16 %v275, %v274
      %vm284 = vcmask 64512
      %v286 = vsel %vm284, %v227, 0
      %v289 = vsel %vm284, %v276, 0
      %v292 = vsel %vm284, %v277, 0
      %v295 = vsel %vm284, %v278, 0
      %v298 = vsel %vm284, %v279, 0
      %v301 = vsel %vm284, %v280, 0
      %v304 = vsel %vm284, %v281, 0
      %v307 = vsel %vm284, %v282, 0
      %v310 = vsel %vm284, %v283, 0
      %312 = vmatprep.subr.bf16.mxu0 0
      %313 = vmatpush1.bf16.xpose.msra.mxu0 %v289
      %314 = vmatprep.subr.bf16.mxu0 0
      %315 = vmatpush1.bf16.xpose.msra.mxu0 %v292
      %316 = vmatprep.subr.bf16.mxu0 0
      %317 = vmatpush1.bf16.xpose.msra.mxu0 %v295
      %318 = vmatprep.subr.bf16.mxu0 0
      %319 = vmatpush1.bf16.xpose.msra.mxu0 %v298
      %320 = vmatprep.subr.bf16.mxu0 0
      %321 = vmatpush1.bf16.xpose.msra.mxu0 %v301
      %322 = vmatprep.subr.bf16.mxu0 0
      %323 = vmatpush1.bf16.xpose.msra.mxu0 %v304
      %324 = vmatprep.subr.bf16.mxu0 0
      %325 = vmatpush1.bf16.xpose.msra.mxu0 %v307
      %326 = vmatprep.subr.bf16.mxu0 0
      %327 = vmatpush1.bf16.xpose.msra.mxu0 %v310
      %328 = vmatprep.subr.bf16.mxu0 0
      %329 = vmatpush1.bf16.xpose.msra.mxu0 0
      %330 = vmatprep.subr.bf16.mxu0 0
      %331 = vmatpush1.bf16.xpose.msra.mxu0 0
      %332 = vmatprep.subr.bf16.mxu0 0
      %333 = vmatpush1.bf16.xpose.msra.mxu0 0
      %334 = vmatprep.subr.bf16.mxu0 0
      %335 = vmatpush1.bf16.xpose.msra.mxu0 0
      %336 = vmatprep.subr.bf16.mxu0 0
      %337 = vmatpush1.bf16.xpose.msra.mxu0 0
      %338 = vmatprep.subr.bf16.mxu0 0
      %339 = vmatpush1.bf16.xpose.msra.mxu0 0
      %340 = vmatprep.subr.bf16.mxu0 0
      %341 = vmatpush1.bf16.xpose.msra.mxu0 0
      %342 = vmatprep.subr.bf16.mxu0 0
      %343 = vmatpush1.bf16.xpose.msra.mxu0 0
      %344 = vmatprep.mubr.bf16.mxu0 0
      %345 = vmatmul.mubr.bf16.gmra.mrb[0].mxu0 %v286
      %v346 = vpop.f32.mrb[0].mxu0
      %v347 = vadd.f32 0.0, %v346
      %v348 = vpop.f32.mrb[0].mxu0
      %v349 = vpop.f32.mrb[0].mxu0
      %v350 = vpop.f32.mrb[0].mxu0
      %351 = vdwg.mxu0
      %s353 = sor.u32 256, 121
      %354 = vrot.lane.b32.xlu0 %v347, %s353
      %v355 = vpop.permute.xlu0 %354
      %v357 = vunpack.c.l.b16 %v211
      %v358 = vpack.c.b16 %v357, %v357
      %359 = vrot.lane.b32.xlu0 %v358, 96
      %v360 = vpop.permute.xlu0 %359
      %v362 = vsel %vm284, %v220, 0
      %v365 = vsel %vm284, %v360, 0
      %367 = vmatprep.subr.bf16.mxu0 0
      %368 = vmatpush1.bf16.xpose.msra.mxu0 %v365
      %369 = vmatprep.subr.bf16.mxu0 0
      %370 = vmatpush1.bf16.xpose.msra.mxu0 0
      %371 = vmatprep.subr.bf16.mxu0 0
      %372 = vmatpush1.bf16.xpose.msra.mxu0 0
      %373 = vmatprep.subr.bf16.mxu0 0
      %374 = vmatpush1.bf16.xpose.msra.mxu0 0
      %375 = vmatprep.subr.bf16.mxu0 0
      %376 = vmatpush1.bf16.xpose.msra.mxu0 0
      %377 = vmatprep.subr.bf16.mxu0 0
      %378 = vmatpush1.bf16.xpose.msra.mxu0 0
      %379 = vmatprep.subr.bf16.mxu0 0
      %380 = vmatpush1.bf16.xpose.msra.mxu0 0
      %381 = vmatprep.subr.bf16.mxu0 0
      %382 = vmatpush1.bf16.xpose.msra.mxu0 0
      %383 = vmatprep.subr.bf16.mxu0 0
      %384 = vmatpush1.bf16.xpose.msra.mxu0 0
      %385 = vmatprep.subr.bf16.mxu0 0
      %386 = vmatpush1.bf16.xpose.msra.mxu0 0
      %387 = vmatprep.subr.bf16.mxu0 0
      %388 = vmatpush1.bf16.xpose.msra.mxu0 0
      %389 = vmatprep.subr.bf16.mxu0 0
      %390 = vmatpush1.bf16.xpose.msra.mxu0 0
      %391 = vmatprep.subr.bf16.mxu0 0
      %392 = vmatpush1.bf16.xpose.msra.mxu0 0
      %393 = vmatprep.subr.bf16.mxu0 0
      %394 = vmatpush1.bf16.xpose.msra.mxu0 0
      %395 = vmatprep.subr.bf16.mxu0 0
      %396 = vmatpush1.bf16.xpose.msra.mxu0 0
      %397 = vmatprep.subr.bf16.mxu0 0
      %398 = vmatpush1.bf16.xpose.msra.mxu0 0
      %399 = vmatprep.mubr.bf16.mxu0 0
      %400 = vmatmul.mubr.bf16.gmra.mrb[0].mxu0 %v362
      %v401 = vpop.f32.mrb[0].mxu0
      %v402 = vadd.f32 %v355, %v401
      %v403 = vpop.f32.mrb[0].mxu0
      %v404 = vpop.f32.mrb[0].mxu0
      %v405 = vpop.f32.mrb[0].mxu0
      %406 = vdwg.mxu0
      %v407 = vadd.f32 %v402, %v210
      %v408 = vsel %vm284, %v407, -inf
      %409 = vmax.xlane.f32.xlu0 %v408
      %v410 = vpop.xlane.xlu0 %409
      %v411 = vsub.f32 %v407, %v410
      %v412 = vmul.f32 %v411, 1.442695
      %v413 = vpow.pop %v412
      %v414 = vsel %vm284, %v413, 0.0
      %415 = vadd.xlane.f32.xlu0 %v414
      %v416 = vpop.xlane.xlu0 %415
      %v417 = vrcp.pop %v416
      %v418 = vmul.f32 %v413, %v417
      %v419 = vpack.c.bf16 %v418, %v418
      %420 = vrot.lane.b32.xlu0 %v358, 64
      %v421 = vpop.permute.xlu0 %420
      %v423 = vsel %vm284, %v419, 0
      %vm425 = vcmask 1043456
      %v427 = vsel %vm425, %v421, 0
      %429 = vmatprep.subr.bf16.mxu0 0
      %430 = vmatpush1.bf16.msra.mxu0 %v427
      %431 = vmatprep.subr.bf16.mxu0 0
      %432 = vmatpush1.bf16.msra.mxu0 0
      %433 = vmatprep.subr.bf16.mxu0 0
      %434 = vmatpush1.bf16.msra.mxu0 0
      %435 = vmatprep.subr.bf16.mxu0 0
      %436 = vmatpush1.bf16.msra.mxu0 0
      %437 = vmatprep.subr.bf16.mxu0 0
      %438 = vmatpush1.bf16.msra.mxu0 0
      %439 = vmatprep.subr.bf16.mxu0 0
      %440 = vmatpush1.bf16.msra.mxu0 0
      %441 = vmatprep.subr.bf16.mxu0 0
      %442 = vmatpush1.bf16.msra.mxu0 0
      %443 = vmatprep.subr.bf16.mxu0 0
      %444 = vmatpush1.bf16.msra.mxu0 0
      %445 = vmatprep.subr.bf16.mxu0 0
      %446 = vmatpush1.bf16.msra.mxu0 0
      %447 = vmatprep.subr.bf16.mxu0 0
      %448 = vmatpush1.bf16.msra.mxu0 0
      %449 = vmatprep.subr.bf16.mxu0 0
      %450 = vmatpush1.bf16.msra.mxu0 0
      %451 = vmatprep.subr.bf16.mxu0 0
      %452 = vmatpush1.bf16.msra.mxu0 0
      %453 = vmatprep.subr.bf16.mxu0 0
      %454 = vmatpush1.bf16.msra.mxu0 0
      %455 = vmatprep.subr.bf16.mxu0 0
      %456 = vmatpush1.bf16.msra.mxu0 0
      %457 = vmatprep.subr.bf16.mxu0 0
      %458 = vmatpush1.bf16.msra.mxu0 0
      %459 = vmatprep.subr.bf16.mxu0 0
      %460 = vmatpush1.bf16.msra.mxu0 0
      %461 = vmatprep.mubr.bf16.mxu0 0
      %462 = vmatmul.mubr.bf16.gmra.mrb[0].mxu0 %v423
      %v463 = vpop.f32.mrb[0].mxu0
      %v464 = vadd.f32 0.0, %v463
      %v465 = vpop.f32.mrb[0].mxu0
      %v466 = vpop.f32.mrb[0].mxu0
      %v467 = vpop.f32.mrb[0].mxu0
      %468 = vdwg.mxu0
      %v469 = vpack.c.bf16 %v464, %v464
      %vm470 = vcmask 60416
      %471 = vst.msk [vmem:[%s199] sm:$0xf] %vm470, %v469
      %v472 = vld [vmem:[%s195] sm:$0xf]
      %v473 = vunpack.c.l.bf16 %v472
      %v474 = vmul.f32 %v473, 0.35355338
      %v475 = vld [vmem:[%s3 + $0x1] sm:$0x1]
      %v476 = vlaneseq
      %v477 = vshrl.u32 %v476, 7
      %v478 = vsub.s32 0, %v477
      %v479 = vrot.slane %v475, %v478
      %481 = vrot.lane.b32.xlu0 %v479, 8
      %v482 = vpop.permute.xlu0 %481
      %v484 = vadd.f32 %v474, %v482
      %v485 = vpack.c.bf16 %v484, %v484
      %v486 = vld [vmem:[%s4 + $0x1] sm:$0x1]
      %v487 = vlaneseq
      %v488 = vshrl.u32 %v487, 7
      %v489 = vsub.s32 0, %v488
      %v490 = vrot.slane %v486, %v489
      %492 = vrot.lane.b32.xlu0 %v490, 8
      %v493 = vpop.permute.xlu0 %492
      %v495 = vadd.f32 %v474, %v493
      %v496 = vpack.c.bf16 %v495, %v495
      %v497 = vld [vmem:[%s2] sm:$0xf]
      %v498 = vld [vmem:[%s2 + $0x4] sm:$0xf]
      %v499 = vld [vmem:[%s2 + $0x8] sm:$0xf]
      %v500 = vld [vmem:[%s2 + $0xc] sm:$0xf]
      %v501 = vld [vmem:[%s2 + $0x10] sm:$0xf]
      %v502 = vld [vmem:[%s2 + $0x14] sm:$0xf]
      %v503 = vld [vmem:[%s2 + $0x18] sm:$0xf]
      %v504 = vld [vmem:[%s2 + $0x1c] sm:$0xf]
      %v505 = vld [vmem:[%s2 + $0x20] sm:$0xf]
      %v506 = vld [vmem:[%s2 + $0x24] sm:$0xf]
      %v507 = vld [vmem:[%s2 + $0x28] sm:$0xf]
      %v508 = vld [vmem:[%s2 + $0x2c] sm:$0xf]
      %v509 = vld [vmem:[%s2 + $0x30] sm:$0xf]
      %v510 = vld [vmem:[%s2 + $0x34] sm:$0xf]
      %v511 = vld [vmem:[%s2 + $0x38] sm:$0xf]
      %v512 = vld [vmem:[%s2 + $0x3c] sm:$0xf]
      %514 = vrot.lane.b32.xlu0 %v496, 120
      %v515 = vpop.permute.xlu0 %514
      %v532 = vunpack.c.l.b16 %v497
      %v533 = vunpack.c.l.b16 %v498
      %v534 = vunpack.c.l.b16 %v499
      %v535 = vunpack.c.l.b16 %v500
      %v536 = vunpack.c.l.b16 %v501
      %v537 = vunpack.c.l.b16 %v502
      %v538 = vunpack.c.l.b16 %v503
      %v539 = vunpack.c.l.b16 %v504
      %v540 = vunpack.c.l.b16 %v505
      %v541 = vunpack.c.l.b16 %v506
      %v542 = vunpack.c.l.b16 %v507
      %v543 = vunpack.c.l.b16 %v508
      %v544 = vunpack.c.l.b16 %v509
      %v545 = vunpack.c.l.b16 %v510
      %v546 = vunpack.c.l.b16 %v511
      %v547 = vunpack.c.l.b16 %v512
      %v548 = vpack.c.b16 %v533, %v532
      %v549 = vpack.c.b16 %v535, %v534
      %v550 = vpack.c.b16 %v537, %v536
      %v551 = vpack.c.b16 %v539, %v538
      %v552 = vpack.c.b16 %v541, %v540
      %v553 = vpack.c.b16 %v543, %v542
      %v554 = vpack.c.b16 %v545, %v544
      %v555 = vpack.c.b16 %v547, %v546
      %556 = vrot.lane.b32.xlu0 %v548, 120
      %v557 = vpop.permute.xlu0 %556
      %558 = vrot.lane.b32.xlu0 %v549, 120
      %v559 = vpop.permute.xlu0 %558
      %560 = vrot.lane.b32.xlu0 %v550, 120
      %v561 = vpop.permute.xlu0 %560
      %562 = vrot.lane.b32.xlu0 %v551, 120
      %v563 = vpop.permute.xlu0 %562
      %564 = vrot.lane.b32.xlu0 %v552, 120
      %v565 = vpop.permute.xlu0 %564
      %566 = vrot.lane.b32.xlu0 %v553, 120
      %v567 = vpop.permute.xlu0 %566
      %568 = vrot.lane.b32.xlu0 %v554, 120
      %v569 = vpop.permute.xlu0 %568
      %570 = vrot.lane.b32.xlu0 %v555, 120
      %v571 = vpop.permute.xlu0 %570
      %v573 = vsel %vm284, %v515, 0
      %v576 = vsel %vm284, %v557, 0
      %v579 = vsel %vm284, %v559, 0
      %v582 = vsel %vm284, %v561, 0
      %v585 = vsel %vm284, %v563, 0
      %v588 = vsel %vm284, %v565, 0
      %v591 = vsel %vm284, %v567, 0
      %v594 = vsel %vm284, %v569, 0
      %v597 = vsel %vm284, %v571, 0
      %599 = vmatprep.subr.bf16.mxu0 0
      %600 = vmatpush1.bf16.xpose.msra.mxu0 %v576
      %601 = vmatprep.subr.bf16.mxu0 0
      %602 = vmatpush1.bf16.xpose.msra.mxu0 %v579
      %603 = vmatprep.subr.bf16.mxu0 0
      %604 = vmatpush1.bf16.xpose.msra.mxu0 %v582
      %605 = vmatprep.subr.bf16.mxu0 0
      %606 = vmatpush1.bf16.xpose.msra.mxu0 %v585
      %607 = vmatprep.subr.bf16.mxu0 0
      %608 = vmatpush1.bf16.xpose.msra.mxu0 %v588
      %609 = vmatprep.subr.bf16.mxu0 0
      %610 = vmatpush1.bf16.xpose.msra.mxu0 %v591
      %611 = vmatprep.subr.bf16.mxu0 0
      %612 = vmatpush1.bf16.xpose.msra.mxu0 %v594
      %613 = vmatprep.subr.bf16.mxu0 0
      %614 = vmatpush1.bf16.xpose.msra.mxu0 %v597
      %615 = vmatprep.subr.bf16.mxu0 0
      %616 = vmatpush1.bf16.xpose.msra.mxu0 0
      %617 = vmatprep.subr.bf16.mxu0 0
      %618 = vmatpush1.bf16.xpose.msra.mxu0 0
      %619 = vmatprep.subr.bf16.mxu0 0
      %620 = vmatpush1.bf16.xpose.msra.mxu0 0
      %621 = vmatprep.subr.bf16.mxu0 0
      %622 = vmatpush1.bf16.xpose.msra.mxu0 0
      %623 = vmatprep.subr.bf16.mxu0 0
      %624 = vmatpush1.bf16.xpose.msra.mxu0 0
      %625 = vmatprep.subr.bf16.mxu0 0
      %626 = vmatpush1.bf16.xpose.msra.mxu0 0
      %627 = vmatprep.subr.bf16.mxu0 0
      %628 = vmatpush1.bf16.xpose.msra.mxu0 0
      %629 = vmatprep.subr.bf16.mxu0 0
      %630 = vmatpush1.bf16.xpose.msra.mxu0 0
      %631 = vmatprep.mubr.bf16.mxu0 0
      %632 = vmatmul.mubr.bf16.gmra.mrb[0].mxu0 %v573
      %v633 = vpop.f32.mrb[0].mxu0
      %v634 = vadd.f32 0.0, %v633
      %v635 = vpop.f32.mrb[0].mxu0
      %v636 = vpop.f32.mrb[0].mxu0
      %v637 = vpop.f32.mrb[0].mxu0
      %638 = vdwg.mxu0
      %s640 = sor.u32 256, 121
      %641 = vrot.lane.b32.xlu0 %v634, %s640
      %v642 = vpop.permute.xlu0 %641
      %644 = vrot.lane.b32.xlu0 %v485, 120
      %v645 = vpop.permute.xlu0 %644
      %v647 = vunpack.c.l.b16 %v472
      %v648 = vpack.c.b16 %v647, %v647
      %649 = vrot.lane.b32.xlu0 %v648, 88
      %v650 = vpop.permute.xlu0 %649
      %v652 = vsel %vm284, %v645, 0
      %v655 = vsel %vm284, %v650, 0
      %657 = vmatprep.subr.bf16.mxu0 0
      %658 = vmatpush1.bf16.xpose.msra.mxu0 %v655
      %659 = vmatprep.subr.bf16.mxu0 0
      %660 = vmatpush1.bf16.xpose.msra.mxu0 0
      %661 = vmatprep.subr.bf16.mxu0 0
      %662 = vmatpush1.bf16.xpose.msra.mxu0 0
      %663 = vmatprep.subr.bf16.mxu0 0
      %664 = vmatpush1.bf16.xpose.msra.mxu0 0
      %665 = vmatprep.subr.bf16.mxu0 0
      %666 = vmatpush1.bf16.xpose.msra.mxu0 0
      %667 = vmatprep.subr.bf16.mxu0 0
      %668 = vmatpush1.bf16.xpose.msra.mxu0 0
      %669 = vmatprep.subr.bf16.mxu0 0
      %670 = vmatpush1.bf16.xpose.msra.mxu0 0
      %671 = vmatprep.subr.bf16.mxu0 0
      %672 = vmatpush1.bf16.xpose.msra.mxu0 0
      %673 = vmatprep.subr.bf16.mxu0 0
      %674 = vmatpush1.bf16.xpose.msra.mxu0 0
      %675 = vmatprep.subr.bf16.mxu0 0
      %676 = vmatpush1.bf16.xpose.msra.mxu0 0
      %677 = vmatprep.subr.bf16.mxu0 0
      %678 = vmatpush1.bf16.xpose.msra.mxu0 0
      %679 = vmatprep.subr.bf16.mxu0 0
      %680 = vmatpush1.bf16.xpose.msra.mxu0 0
      %681 = vmatprep.subr.bf16.mxu0 0
      %682 = vmatpush1.bf16.xpose.msra.mxu0 0
      %683 = vmatprep.subr.bf16.mxu0 0
      %684 = vmatpush1.bf16.xpose.msra.mxu0 0
      %685 = vmatprep.subr.bf16.mxu0 0
      %686 = vmatpush1.bf16.xpose.msra.mxu0 0
      %687 = vmatprep.subr.bf16.mxu0 0
      %688 = vmatpush1.bf16.xpose.msra.mxu0 0
      %689 = vmatprep.mubr.bf16.mxu0 0
      %690 = vmatmul.mubr.bf16.gmra.mrb[0].mxu0 %v652
      %v691 = vpop.f32.mrb[0].mxu0
      %v692 = vadd.f32 %v642, %v691
      %v693 = vpop.f32.mrb[0].mxu0
      %v694 = vpop.f32.mrb[0].mxu0
      %v695 = vpop.f32.mrb[0].mxu0
      %696 = vdwg.mxu0
      %v697 = vadd.f32 %v692, %v210
      %v698 = vsel %vm284, %v697, -inf
      %699 = vmax.xlane.f32.xlu0 %v698
      %v700 = vpop.xlane.xlu0 %699
      %v701 = vsub.f32 %v697, %v700
      %v702 = vmul.f32 %v701, 1.442695
      %v703 = vpow.pop %v702
      %v704 = vsel %vm284, %v703, 0.0
      %705 = vadd.xlane.f32.xlu0 %v704
      %v706 = vpop.xlane.xlu0 %705
      %v707 = vrcp.pop %v706
      %v708 = vmul.f32 %v703, %v707
      %v709 = vpack.c.bf16 %v708, %v708
      %710 = vrot.lane.b32.xlu0 %v648, 56
      %v711 = vpop.permute.xlu0 %710
      %v713 = vsel %vm284, %v709, 0
      %v716 = vsel %vm425, %v711, 0
      %718 = vmatprep.subr.bf16.mxu0 0
      %719 = vmatpush1.bf16.msra.mxu0 %v716
      %720 = vmatprep.subr.bf16.mxu0 0
      %721 = vmatpush1.bf16.msra.mxu0 0
      %722 = vmatprep.subr.bf16.mxu0 0
      %723 = vmatpush1.bf16.msra.mxu0 0
      %724 = vmatprep.subr.bf16.mxu0 0
      %725 = vmatpush1.bf16.msra.mxu0 0
      %726 = vmatprep.subr.bf16.mxu0 0
      %727 = vmatpush1.bf16.msra.mxu0 0
      %728 = vmatprep.subr.bf16.mxu0 0
      %729 = vmatpush1.bf16.msra.mxu0 0
      %730 = vmatprep.subr.bf16.mxu0 0
      %731 = vmatpush1.bf16.msra.mxu0 0
      %732 = vmatprep.subr.bf16.mxu0 0
      %733 = vmatpush1.bf16.msra.mxu0 0
      %734 = vmatprep.subr.bf16.mxu0 0
      %735 = vmatpush1.bf16.msra.mxu0 0
      %736 = vmatprep.subr.bf16.mxu0 0
      %737 = vmatpush1.bf16.msra.mxu0 0
      %738 = vmatprep.subr.bf16.mxu0 0
      %739 = vmatpush1.bf16.msra.mxu0 0
      %740 = vmatprep.subr.bf16.mxu0 0
      %741 = vmatpush1.bf16.msra.mxu0 0
      %742 = vmatprep.subr.bf16.mxu0 0
      %743 = vmatpush1.bf16.msra.mxu0 0
      %744 = vmatprep.subr.bf16.mxu0 0
      %745 = vmatpush1.bf16.msra.mxu0 0
      %746 = vmatprep.subr.bf16.mxu0 0
      %747 = vmatpush1.bf16.msra.mxu0 0
      %748 = vmatprep.subr.bf16.mxu0 0
      %749 = vmatpush1.bf16.msra.mxu0 0
      %750 = vmatprep.mubr.bf16.mxu0 0
      %751 = vmatmul.mubr.bf16.gmra.mrb[0].mxu0 %v713
      %v752 = vpop.f32.mrb[0].mxu0
      %v753 = vadd.f32 0.0, %v752
      %v754 = vpop.f32.mrb[0].mxu0
      %v755 = vpop.f32.mrb[0].mxu0
      %v756 = vpop.f32.mrb[0].mxu0
      %757 = vdwg.mxu0
      %v758 = vpack.c.bf16 %v753, %v753
      %v760 = vunpack.c.l.b16 %v758
      %v761 = vpack.c.b16 %v760, %v760
      %762 = vrot.lane.b32.xlu0 %v761, 8
      %v763 = vpop.permute.xlu0 %762
      %vm765 = vcmask 126016
      %766 = vst.msk [vmem:[%s199] sm:$0xf] %vm765, %v763
      %v767 = vld [vmem:[%s195] sm:$0xf]
      %v768 = vunpack.c.l.bf16 %v767
      %v769 = vmul.f32 %v768, 0.35355338
      %v770 = vld [vmem:[%s3 + $0x2] sm:$0x1]
      %v771 = vlaneseq
      %v772 = vshrl.u32 %v771, 7
      %v773 = vsub.s32 0, %v772
      %v774 = vrot.slane %v770, %v773
      %776 = vrot.lane.b32.xlu0 %v774, 16
      %v777 = vpop.permute.xlu0 %776
      %v779 = vadd.f32 %v769, %v777
      %v780 = vpack.c.bf16 %v779, %v779
      %v781 = vld [vmem:[%s4 + $0x2] sm:$0x1]
      %v782 = vlaneseq
      %v783 = vshrl.u32 %v782, 7
      %v784 = vsub.s32 0, %v783
      %v785 = vrot.slane %v781, %v784
      %787 = vrot.lane.b32.xlu0 %v785, 16
      %v788 = vpop.permute.xlu0 %787
      %v790 = vadd.f32 %v769, %v788
      %v791 = vpack.c.bf16 %v790, %v790
      %v792 = vld [vmem:[%s2] sm:$0xf]
      %v793 = vld [vmem:[%s2 + $0x4] sm:$0xf]
      %v794 = vld [vmem:[%s2 + $0x8] sm:$0xf]
      %v795 = vld [vmem:[%s2 + $0xc] sm:$0xf]
      %v796 = vld [vmem:[%s2 + $0x10] sm:$0xf]
      %v797 = vld [vmem:[%s2 + $0x14] sm:$0xf]
      %v798 = vld [vmem:[%s2 + $0x18] sm:$0xf]
      %v799 = vld [vmem:[%s2 + $0x1c] sm:$0xf]
      %v800 = vld [vmem:[%s2 + $0x20] sm:$0xf]
      %v801 = vld [vmem:[%s2 + $0x24] sm:$0xf]
      %v802 = vld [vmem:[%s2 + $0x28] sm:$0xf]
      %v803 = vld [vmem:[%s2 + $0x2c] sm:$0xf]
      %v804 = vld [vmem:[%s2 + $0x30] sm:$0xf]
      %v805 = vld [vmem:[%s2 + $0x34] sm:$0xf]
      %v806 = vld [vmem:[%s2 + $0x38] sm:$0xf]
      %v807 = vld [vmem:[%s2 + $0x3c] sm:$0xf]
      %809 = vrot.lane.b32.xlu0 %v791, 112
      %v810 = vpop.permute.xlu0 %809
      %v827 = vunpack.c.l.b16 %v792
      %v828 = vunpack.c.l.b16 %v793
      %v829 = vunpack.c.l.b16 %v794
      %v830 = vunpack.c.l.b16 %v795
      %v831 = vunpack.c.l.b16 %v796
      %v832 = vunpack.c.l.b16 %v797
      %v833 = vunpack.c.l.b16 %v798
      %v834 = vunpack.c.l.b16 %v799
      %v835 = vunpack.c.l.b16 %v800
      %v836 = vunpack.c.l.b16 %v801
      %v837 = vunpack.c.l.b16 %v802
      %v838 = vunpack.c.l.b16 %v803
      %v839 = vunpack.c.l.b16 %v804
      %v840 = vunpack.c.l.b16 %v805
      %v841 = vunpack.c.l.b16 %v806
      %v842 = vunpack.c.l.b16 %v807
      %v843 = vpack.c.b16 %v828, %v827
      %v844 = vpack.c.b16 %v830, %v829
      %v845 = vpack.c.b16 %v832, %v831
      %v846 = vpack.c.b16 %v834, %v833
      %v847 = vpack.c.b16 %v836, %v835
      %v848 = vpack.c.b16 %v838, %v837
      %v849 = vpack.c.b16 %v840, %v839
      %v850 = vpack.c.b16 %v842, %v841
      %851 = vrot.lane.b32.xlu0 %v843, 112
      %v852 = vpop.permute.xlu0 %851
      %853 = vrot.lane.b32.xlu0 %v844, 112
      %v854 = vpop.permute.xlu0 %853
      %855 = vrot.lane.b32.xlu0 %v845, 112
      %v856 = vpop.permute.xlu0 %855
      %857 = vrot.lane.b32.xlu0 %v846, 112
      %v858 = vpop.permute.xlu0 %857
      %859 = vrot.lane.b32.xlu0 %v847, 112
      %v860 = vpop.permute.xlu0 %859
      %861 = vrot.lane.b32.xlu0 %v848, 112
      %v862 = vpop.permute.xlu0 %861
      %863 = vrot.lane.b32.xlu0 %v849, 112
      %v864 = vpop.permute.xlu0 %863
      %865 = vrot.lane.b32.xlu0 %v850, 112
      %v866 = vpop.permute.xlu0 %865
      %v868 = vsel %vm284, %v810, 0
      %v871 = vsel %vm284, %v852, 0
      %v874 = vsel %vm284, %v854, 0
      %v877 = vsel %vm284, %v856, 0
      %v880 = vsel %vm284, %v858, 0
      %v883 = vsel %vm284, %v860, 0
      %v886 = vsel %vm284, %v862, 0
      %v889 = vsel %vm284, %v864, 0
      %v892 = vsel %vm284, %v866, 0
      %894 = vmatprep.subr.bf16.mxu0 0
      %895 = vmatpush1.bf16.xpose.msra.mxu0 %v871
      %896 = vmatprep.subr.bf16.mxu0 0
      %897 = vmatpush1.bf16.xpose.msra.mxu0 %v874
      %898 = vmatprep.subr.bf16.mxu0 0
      %899 = vmatpush1.bf16.xpose.msra.mxu0 %v877
      %900 = vmatprep.subr.bf16.mxu0 0
      %901 = vmatpush1.bf16.xpose.msra.mxu0 %v880
      %902 = vmatprep.subr.bf16.mxu0 0
      %903 = vmatpush1.bf16.xpose.msra.mxu0 %v883
      %904 = vmatprep.subr.bf16.mxu0 0
      %905 = vmatpush1.bf16.xpose.msra.mxu0 %v886
      %906 = vmatprep.subr.bf16.mxu0 0
      %907 = vmatpush1.bf16.xpose.msra.mxu0 %v889
      %908 = vmatprep.subr.bf16.mxu0 0
      %909 = vmatpush1.bf16.xpose.msra.mxu0 %v892
      %910 = vmatprep.subr.bf16.mxu0 0
      %911 = vmatpush1.bf16.xpose.msra.mxu0 0
      %912 = vmatprep.subr.bf16.mxu0 0
      %913 = vmatpush1.bf16.xpose.msra.mxu0 0
      %914 = vmatprep.subr.bf16.mxu0 0
      %915 = vmatpush1.bf16.xpose.msra.mxu0 0
      %916 = vmatprep.subr.bf16.mxu0 0
      %917 = vmatpush1.bf16.xpose.msra.mxu0 0
      %918 = vmatprep.subr.bf16.mxu0 0
      %919 = vmatpush1.bf16.xpose.msra.mxu0 0
      %920 = vmatprep.subr.bf16.mxu0 0
      %921 = vmatpush1.bf16.xpose.msra.mxu0 0
      %922 = vmatprep.subr.bf16.mxu0 0
      %923 = vmatpush1.bf16.xpose.msra.mxu0 0
      %924 = vmatprep.subr.bf16.mxu0 0
      %925 = vmatpush1.bf16.xpose.msra.mxu0 0
      %926 = vmatprep.mubr.bf16.mxu0 0
      %927 = vmatmul.mubr.bf16.gmra.mrb[0].mxu0 %v868
      %v928 = vpop.f32.mrb[0].mxu0
      %v929 = vadd.f32 0.0, %v928
      %v930 = vpop.f32.mrb[0].mxu0
      %v931 = vpop.f32.mrb[0].mxu0
      %v932 = vpop.f32.mrb[0].mxu0
      %933 = vdwg.mxu0
      %s935 = sor.u32 256, 121
      %936 = vrot.lane.b32.xlu0 %v929, %s935
      %v937 = vpop.permute.xlu0 %936
      %939 = vrot.lane.b32.xlu0 %v780, 112
      %v940 = vpop.permute.xlu0 %939
      %v942 = vunpack.c.l.b16 %v767
      %v943 = vpack.c.b16 %v942, %v942
      %944 = vrot.lane.b32.xlu0 %v943, 80
      %v945 = vpop.permute.xlu0 %944
      %v947 = vsel %vm284, %v940, 0
      %v950 = vsel %vm284, %v945, 0
      %952 = vmatprep.subr.bf16.mxu0 0
      %953 = vmatpush1.bf16.xpose.msra.mxu0 %v950
      %954 = vmatprep.subr.bf16.mxu0 0
      %955 = vmatpush1.bf16.xpose.msra.mxu0 0
      %956 = vmatprep.subr.bf16.mxu0 0
      %957 = vmatpush1.bf16.xpose.msra.mxu0 0
      %958 = vmatprep.subr.bf16.mxu0 0
      %959 = vmatpush1.bf16.xpose.msra.mxu0 0
      %960 = vmatprep.subr.bf16.mxu0 0
      %961 = vmatpush1.bf16.xpose.msra.mxu0 0
      %962 = vmatprep.subr.bf16.mxu0 0
      %963 = vmatpush1.bf16.xpose.msra.mxu0 0
      %964 = vmatprep.subr.bf16.mxu0 0
      %965 = vmatpush1.bf16.xpose.msra.mxu0 0
      %966 = vmatprep.subr.bf16.mxu0 0
      %967 = vmatpush1.bf16.xpose.msra.mxu0 0
      %968 = vmatprep.subr.bf16.mxu0 0
      %969 = vmatpush1.bf16.xpose.msra.mxu0 0
      %970 = vmatprep.subr.bf16.mxu0 0
      %971 = vmatpush1.bf16.xpose.msra.mxu0 0
      %972 = vmatprep.subr.bf16.mxu0 0
      %973 = vmatpush1.bf16.xpose.msra.mxu0 0
      %974 = vmatprep.subr.bf16.mxu0 0
      %975 = vmatpush1.bf16.xpose.msra.mxu0 0
      %976 = vmatprep.subr.bf16.mxu0 0
      %977 = vmatpush1.bf16.xpose.msra.mxu0 0
      %978 = vmatprep.subr.bf16.mxu0 0
      %979 = vmatpush1.bf16.xpose.msra.mxu0 0
      %980 = vmatprep.subr.bf16.mxu0 0
      %981 = vmatpush1.bf16.xpose.msra.mxu0 0
      %982 = vmatprep.subr.bf16.mxu0 0
      %983 = vmatpush1.bf16.xpose.msra.mxu0 0
      %984 = vmatprep.mubr.bf16.mxu0 0
      %985 = vmatmul.mubr.bf16.gmra.mrb[0].mxu0 %v947
      %v986 = vpop.f32.mrb[0].mxu0
      %v987 = vadd.f32 %v937, %v986
      %v988 = vpop.f32.mrb[0].mxu0
      %v989 = vpop.f32.mrb[0].mxu0
      %v990 = vpop.f32.mrb[0].mxu0
      %991 = vdwg.mxu0
      %v992 = vadd.f32 %v987, %v210
      %v993 = vsel %vm284, %v992, -inf
      %994 = vmax.xlane.f32.xlu0 %v993
      %v995 = vpop.xlane.xlu0 %994
      %v996 = vsub.f32 %v992, %v995
      %v997 = vmul.f32 %v996, 1.442695
      %v998 = vpow.pop %v997
      %v999 = vsel %vm284, %v998, 0.0
      %1000 = vadd.xlane.f32.xlu0 %v999
      %v1001 = vpop.xlane.xlu0 %1000
      %v1002 = vrcp.pop %v1001
      %v1003 = vmul.f32 %v998, %v1002
      %v1004 = vpack.c.bf16 %v1003, %v1003
      %1005 = vrot.lane.b32.xlu0 %v943, 48
      %v1006 = vpop.permute.xlu0 %1005
      %v1008 = vsel %vm284, %v1004, 0
      %v1011 = vsel %vm425, %v1006, 0
      %1013 = vmatprep.subr.bf16.mxu0 0
      %1014 = vmatpush1.bf16.msra.mxu0 %v1011
      %1015 = vmatprep.subr.bf16.mxu0 0
      %1016 = vmatpush1.bf16.msra.mxu0 0
      %1017 = vmatprep.subr.bf16.mxu0 0
      %1018 = vmatpush1.bf16.msra.mxu0 0
      %1019 = vmatprep.subr.bf16.mxu0 0
      %1020 = vmatpush1.bf16.msra.mxu0 0
      %1021 = vmatprep.subr.bf16.mxu0 0
      %1022 = vmatpush1.bf16.msra.mxu0 0
      %1023 = vmatprep.subr.bf16.mxu0 0
      %1024 = vmatpush1.bf16.msra.mxu0 0
      %1025 = vmatprep.subr.bf16.mxu0 0
      %1026 = vmatpush1.bf16.msra.mxu0 0
      %1027 = vmatprep.subr.bf16.mxu0 0
      %1028 = vmatpush1.bf16.msra.mxu0 0
      %1029 = vmatprep.subr.bf16.mxu0 0
      %1030 = vmatpush1.bf16.msra.mxu0 0
      %1031 = vmatprep.subr.bf16.mxu0 0
      %1032 = vmatpush1.bf16.msra.mxu0 0
      %1033 = vmatprep.subr.bf16.mxu0 0
      %1034 = vmatpush1.bf16.msra.mxu0 0
      %1035 = vmatprep.subr.bf16.mxu0 0
      %1036 = vmatpush1.bf16.msra.mxu0 0
      %1037 = vmatprep.subr.bf16.mxu0 0
      %1038 = vmatpush1.bf16.msra.mxu0 0
      %1039 = vmatprep.subr.bf16.mxu0 0
      %1040 = vmatpush1.bf16.msra.mxu0 0
      %1041 = vmatprep.subr.bf16.mxu0 0
      %1042 = vmatpush1.bf16.msra.mxu0 0
      %1043 = vmatprep.subr.bf16.mxu0 0
      %1044 = vmatpush1.bf16.msra.mxu0 0
      %1045 = vmatprep.mubr.bf16.mxu0 0
      %1046 = vmatmul.mubr.bf16.gmra.mrb[0].mxu0 %v1008
      %v1047 = vpop.f32.mrb[0].mxu0
      %v1048 = vadd.f32 0.0, %v1047
      %v1049 = vpop.f32.mrb[0].mxu0
      %v1050 = vpop.f32.mrb[0].mxu0
      %v1051 = vpop.f32.mrb[0].mxu0
      %1052 = vdwg.mxu0
      %v1053 = vpack.c.bf16 %v1048, %v1048
      %v1055 = vunpack.c.l.b16 %v1053
      %v1056 = vpack.c.b16 %v1055, %v1055
      %1057 = vrot.lane.b32.xlu0 %v1056, 16
      %v1058 = vpop.permute.xlu0 %1057
      %vm1060 = vcmask 191616
      %1061 = vst.msk [vmem:[%s199] sm:$0xf] %vm1060, %v1058
      %v1062 = vld [vmem:[%s195] sm:$0xf]
      %v1063 = vunpack.c.l.bf16 %v1062
      %v1064 = vmul.f32 %v1063, 0.35355338
      %v1065 = vld [vmem:[%s3 + $0x3] sm:$0x1]
      %v1066 = vlaneseq
      %v1067 = vshrl.u32 %v1066, 7
      %v1068 = vsub.s32 0, %v1067
      %v1069 = vrot.slane %v1065, %v1068
      %1071 = vrot.lane.b32.xlu0 %v1069, 24
      %v1072 = vpop.permute.xlu0 %1071
      %v1074 = vadd.f32 %v1064, %v1072
      %v1075 = vpack.c.bf16 %v1074, %v1074
      %v1076 = vld [vmem:[%s4 + $0x3] sm:$0x1]
      %v1077 = vlaneseq
      %v1078 = vshrl.u32 %v1077, 7
      %v1079 = vsub.s32 0, %v1078
      %v1080 = vrot.slane %v1076, %v1079
      %1082 = vrot.lane.b32.xlu0 %v1080, 24
      %v1083 = vpop.permute.xlu0 %1082
      %v1085 = vadd.f32 %v1064, %v1083
      %v1086 = vpack.c.bf16 %v1085, %v1085
      %v1087 = vld [vmem:[%s2] sm:$0xf]
      %v1088 = vld [vmem:[%s2 + $0x4] sm:$0xf]
      %v1089 = vld [vmem:[%s2 + $0x8] sm:$0xf]
      %v1090 = vld [vmem:[%s2 + $0xc] sm:$0xf]
      %v1091 = vld [vmem:[%s2 + $0x10] sm:$0xf]
      %v1092 = vld [vmem:[%s2 + $0x14] sm:$0xf]
      %v1093 = vld [vmem:[%s2 + $0x18] sm:$0xf]
      %v1094 = vld [vmem:[%s2 + $0x1c] sm:$0xf]
      %v1095 = vld [vmem:[%s2 + $0x20] sm:$0xf]
      %v1096 = vld [vmem:[%s2 + $0x24] sm:$0xf]
      %v1097 = vld [vmem:[%s2 + $0x28] sm:$0xf]
      %v1098 = vld [vmem:[%s2 + $0x2c] sm:$0xf]
      %v1099 = vld [vmem:[%s2 + $0x30] sm:$0xf]
      %v1100 = vld [vmem:[%s2 + $0x34] sm:$0xf]
      %v1101 = vld [vmem:[%s2 + $0x38] sm:$0xf]
      %v1102 = vld [vmem:[%s2 + $0x3c] sm:$0xf]
      %1104 = vrot.lane.b32.xlu0 %v1086, 104
      %v1105 = vpop.permute.xlu0 %1104
      %v1122 = vunpack.c.l.b16 %v1087
      %v1123 = vunpack.c.l.b16 %v1088
      %v1124 = vunpack.c.l.b16 %v1089
      %v1125 = vunpack.c.l.b16 %v1090
      %v1126 = vunpack.c.l.b16 %v1091
      %v1127 = vunpack.c.l.b16 %v1092
      %v1128 = vunpack.c.l.b16 %v1093
      %v1129 = vunpack.c.l.b16 %v1094
      %v1130 = vunpack.c.l.b16 %v1095
      %v1131 = vunpack.c.l.b16 %v1096
      %v1132 = vunpack.c.l.b16 %v1097
      %v1133 = vunpack.c.l.b16 %v1098
      %v1134 = vunpack.c.l.b16 %v1099
      %v1135 = vunpack.c.l.b16 %v1100
      %v1136 = vunpack.c.l.b16 %v1101
      %v1137 = vunpack.c.l.b16 %v1102
      %v1138 = vpack.c.b16 %v1123, %v1122
      %v1139 = vpack.c.b16 %v1125, %v1124
      %v1140 = vpack.c.b16 %v1127, %v1126
      %v1141 = vpack.c.b16 %v1129, %v1128
      %v1142 = vpack.c.b16 %v1131, %v1130
      %v1143 = vpack.c.b16 %v1133, %v1132
      %v1144 = vpack.c.b16 %v1135, %v1134
      %v1145 = vpack.c.b16 %v1137, %v1136
      %1146 = vrot.lane.b32.xlu0 %v1138, 104
      %v1147 = vpop.permute.xlu0 %1146
      %1148 = vrot.lane.b32.xlu0 %v1139, 104
      %v1149 = vpop.permute.xlu0 %1148
      %1150 = vrot.lane.b32.xlu0 %v1140, 104
      %v1151 = vpop.permute.xlu0 %1150
      %1152 = vrot.lane.b32.xlu0 %v1141, 104
      %v1153 = vpop.permute.xlu0 %1152
      %1154 = vrot.lane.b32.xlu0 %v1142, 104
      %v1155 = vpop.permute.xlu0 %1154
      %1156 = vrot.lane.b32.xlu0 %v1143, 104
      %v1157 = vpop.permute.xlu0 %1156
      %1158 = vrot.lane.b32.xlu0 %v1144, 104
      %v1159 = vpop.permute.xlu0 %1158
      %1160 = vrot.lane.b32.xlu0 %v1145, 104
      %v1161 = vpop.permute.xlu0 %1160
      %v1163 = vsel %vm284, %v1105, 0
      %v1166 = vsel %vm284, %v1147, 0
      %v1169 = vsel %vm284, %v1149, 0
      %v1172 = vsel %vm284, %v1151, 0
      %v1175 = vsel %vm284, %v1153, 0
      %v1178 = vsel %vm284, %v1155, 0
      %v1181 = vsel %vm284, %v1157, 0
      %v1184 = vsel %vm284, %v1159, 0
      %v1187 = vsel %vm284, %v1161, 0
      %1189 = vmatprep.subr.bf16.mxu0 0
      %1190 = vmatpush1.bf16.xpose.msra.mxu0 %v1166
      %1191 = vmatprep.subr.bf16.mxu0 0
      %1192 = vmatpush1.bf16.xpose.msra.mxu0 %v1169
      %1193 = vmatprep.subr.bf16.mxu0 0
      %1194 = vmatpush1.bf16.xpose.msra.mxu0 %v1172
      %1195 = vmatprep.subr.bf16.mxu0 0
      %1196 = vmatpush1.bf16.xpose.msra.mxu0 %v1175
      %1197 = vmatprep.subr.bf16.mxu0 0
      %1198 = vmatpush1.bf16.xpose.msra.mxu0 %v1178
      %1199 = vmatprep.subr.bf16.mxu0 0
      %1200 = vmatpush1.bf16.xpose.msra.mxu0 %v1181
      %1201 = vmatprep.subr.bf16.mxu0 0
      %1202 = vmatpush1.bf16.xpose.msra.mxu0 %v1184
      %1203 = vmatprep.subr.bf16.mxu0 0
      %1204 = vmatpush1.bf16.xpose.msra.mxu0 %v1187
      %1205 = vmatprep.subr.bf16.mxu0 0
      %1206 = vmatpush1.bf16.xpose.msra.mxu0 0
      %1207 = vmatprep.subr.bf16.mxu0 0
      %1208 = vmatpush1.bf16.xpose.msra.mxu0 0
      %1209 = vmatprep.subr.bf16.mxu0 0
      %1210 = vmatpush1.bf16.xpose.msra.mxu0 0
      %1211 = vmatprep.subr.bf16.mxu0 0
      %1212 = vmatpush1.bf16.xpose.msra.mxu0 0
      %1213 = vmatprep.subr.bf16.mxu0 0
      %1214 = vmatpush1.bf16.xpose.msra.mxu0 0
      %1215 = vmatprep.subr.bf16.mxu0 0
      %1216 = vmatpush1.bf16.xpose.msra.mxu0 0
      %1217 = vmatprep.subr.bf16.mxu0 0
      %1218 = vmatpush1.bf16.xpose.msra.mxu0 0
      %1219 = vmatprep.subr.bf16.mxu0 0
      %1220 = vmatpush1.bf16.xpose.msra.mxu0 0
      %1221 = vmatprep.mubr.bf16.mxu0 0
      %1222 = vmatmul.mubr.bf16.gmra.mrb[0].mxu0 %v1163
      %v1223 = vpop.f32.mrb[0].mxu0
      %v1224 = vadd.f32 0.0, %v1223
      %v1225 = vpop.f32.mrb[0].mxu0
      %v1226 = vpop.f32.mrb[0].mxu0
      %v1227 = vpop.f32.mrb[0].mxu0
      %1228 = vdwg.mxu0
      %s1230 = sor.u32 256, 121
      %1231 = vrot.lane.b32.xlu0 %v1224, %s1230
      %v1232 = vpop.permute.xlu0 %1231
      %1234 = vrot.lane.b32.xlu0 %v1075, 104
      %v1235 = vpop.permute.xlu0 %1234
      %v1237 = vunpack.c.l.b16 %v1062
      %v1238 = vpack.c.b16 %v1237, %v1237
      %1239 = vrot.lane.b32.xlu0 %v1238, 72
      %v1240 = vpop.permute.xlu0 %1239
      %v1242 = vsel %vm284, %v1235, 0
      %v1245 = vsel %vm284, %v1240, 0
      %1247 = vmatprep.subr.bf16.mxu0 0
      %1248 = vmatpush1.bf16.xpose.msra.mxu0 %v1245
      %1249 = vmatprep.subr.bf16.mxu0 0
      %1250 = vmatpush1.bf16.xpose.msra.mxu0 0
      %1251 = vmatprep.subr.bf16.mxu0 0
      %1252 = vmatpush1.bf16.xpose.msra.mxu0 0
      %1253 = vmatprep.subr.bf16.mxu0 0
      %1254 = vmatpush1.bf16.xpose.msra.mxu0 0
      %1255 = vmatprep.subr.bf16.mxu0 0
      %1256 = vmatpush1.bf16.xpose.msra.mxu0 0
      %1257 = vmatprep.subr.bf16.mxu0 0
      %1258 = vmatpush1.bf16.xpose.msra.mxu0 0
      %1259 = vmatprep.subr.bf16.mxu0 0
      %1260 = vmatpush1.bf16.xpose.msra.mxu0 0
      %1261 = vmatprep.subr.bf16.mxu0 0
      %1262 = vmatpush1.bf16.xpose.msra.mxu0 0
      %1263 = vmatprep.subr.bf16.mxu0 0
      %1264 = vmatpush1.bf16.xpose.msra.mxu0 0
      %1265 = vmatprep.subr.bf16.mxu0 0
      %1266 = vmatpush1.bf16.xpose.msra.mxu0 0
      %1267 = vmatprep.subr.bf16.mxu0 0
      %1268 = vmatpush1.bf16.xpose.msra.mxu0 0
      %1269 = vmatprep.subr.bf16.mxu0 0
      %1270 = vmatpush1.bf16.xpose.msra.mxu0 0
      %1271 = vmatprep.subr.bf16.mxu0 0
      %1272 = vmatpush1.bf16.xpose.msra.mxu0 0
      %1273 = vmatprep.subr.bf16.mxu0 0
      %1274 = vmatpush1.bf16.xpose.msra.mxu0 0
      %1275 = vmatprep.subr.bf16.mxu0 0
      %1276 = vmatpush1.bf16.xpose.msra.mxu0 0
      %1277 = vmatprep.subr.bf16.mxu0 0
      %1278 = vmatpush1.bf16.xpose.msra.mxu0 0
      %1279 = vmatprep.mubr.bf16.mxu0 0
      %1280 = vmatmul.mubr.bf16.gmra.mrb[0].mxu0 %v1242
      %v1281 = vpop.f32.mrb[0].mxu0
      %v1282 = vadd.f32 %v1232, %v1281
      %v1283 = vpop.f32.mrb[0].mxu0
      %v1284 = vpop.f32.mrb[0].mxu0
      %v1285 = vpop.f32.mrb[0].mxu0
      %1286 = vdwg.mxu0
      %v1287 = vadd.f32 %v1282, %v210
      %v1288 = vsel %vm284, %v1287, -inf
      %1289 = vmax.xlane.f32.xlu0 %v1288
      %v1290 = vpop.xlane.xlu0 %1289
      %v1291 = vsub.f32 %v1287, %v1290
      %v1292 = vmul.f32 %v1291, 1.442695
      %v1293 = vpow.pop %v1292
      %v1294 = vsel %vm284, %v1293, 0.0
      %1295 = vadd.xlane.f32.xlu0 %v1294
      %v1296 = vpop.xlane.xlu0 %1295
      %v1297 = vrcp.pop %v1296
      %v1298 = vmul.f32 %v1293, %v1297
      %v1299 = vpack.c.bf16 %v1298, %v1298
      %1300 = vrot.lane.b32.xlu0 %v1238, 40
      %v1301 = vpop.permute.xlu0 %1300
      %v1303 = vsel %vm284, %v1299, 0
      %v1306 = vsel %vm425, %v1301, 0
      %1308 = vmatprep.subr.bf16.mxu0 0
      %1309 = vmatpush1.bf16.msra.mxu0 %v1306
      %1310 = vmatprep.subr.bf16.mxu0 0
      %1311 = vmatpush1.bf16.msra.mxu0 0
      %1312 = vmatprep.subr.bf16.mxu0 0
      %1313 = vmatpush1.bf16.msra.mxu0 0
      %1314 = vmatprep.subr.bf16.mxu0 0
      %1315 = vmatpush1.bf16.msra.mxu0 0
      %1316 = vmatprep.subr.bf16.mxu0 0
      %1317 = vmatpush1.bf16.msra.mxu0 0
      %1318 = vmatprep.subr.bf16.mxu0 0
      %1319 = vmatpush1.bf16.msra.mxu0 0
      %1320 = vmatprep.subr.bf16.mxu0 0
      %1321 = vmatpush1.bf16.msra.mxu0 0
      %1322 = vmatprep.subr.bf16.mxu0 0
      %1323 = vmatpush1.bf16.msra.mxu0 0
      %1324 = vmatprep.subr.bf16.mxu0 0
      %1325 = vmatpush1.bf16.msra.mxu0 0
      %1326 = vmatprep.subr.bf16.mxu0 0
      %1327 = vmatpush1.bf16.msra.mxu0 0
      %1328 = vmatprep.subr.bf16.mxu0 0
      %1329 = vmatpush1.bf16.msra.mxu0 0
      %1330 = vmatprep.subr.bf16.mxu0 0
      %1331 = vmatpush1.bf16.msra.mxu0 0
      %1332 = vmatprep.subr.bf16.mxu0 0
      %1333 = vmatpush1.bf16.msra.mxu0 0
      %1334 = vmatprep.subr.bf16.mxu0 0
      %1335 = vmatpush1.bf16.msra.mxu0 0
      %1336 = vmatprep.subr.bf16.mxu0 0
      %1337 = vmatpush1.bf16.msra.mxu0 0
      %1338 = vmatprep.subr.bf16.mxu0 0
      %1339 = vmatpush1.bf16.msra.mxu0 0
      %1340 = vmatprep.mubr.bf16.mxu0 0
      %1341 = vmatmul.mubr.bf16.gmra.mrb[0].mxu0 %v1303
      %v1342 = vpop.f32.mrb[0].mxu0
      %v1343 = vadd.f32 0.0, %v1342
      %v1344 = vpop.f32.mrb[0].mxu0
      %v1345 = vpop.f32.mrb[0].mxu0
      %v1346 = vpop.f32.mrb[0].mxu0
      %1347 = vdwg.mxu0
      %v1348 = vpack.c.bf16 %v1343, %v1343
      %v1350 = vunpack.c.l.b16 %v1348
      %v1351 = vpack.c.b16 %v1350, %v1350
      %1352 = vrot.lane.b32.xlu0 %v1351, 24
      %v1353 = vpop.permute.xlu0 %1352
      %vm1355 = vcmask 257216
      %1356 = vst.msk [vmem:[%s199] sm:$0xf] %vm1355, %v1353
      %p1357 = scmp.lt.s32.totalorder %s22, 1
      %s1358 = scalar_select %p1357, %s22, 1
      %s1359 = smul.addr %s1358, 4
      %s1360 = scalar_lea.vmem %s5, %s1359
      // Predicated region
      $region37: #{transformer_forward.15} parent=35 // pred_check
        %p1361 = pneg %p129
      $region38: #{transformer_forward.15} parent=35 // pred_check_branch
        %1363 = sbr.rel (%p1361) target = $region40
      $region39: #{transformer_forward.15} parent=35 // pred_region
        _
      $region40: #{transformer_forward.15} parent=35 // pred_fallthru
        _
    $region36: #{transformer_forward.15} parent=5 // pred_fallthru
      _
    %p1364 = scmp.le.s32.totalorder 2, %s17
    // Predicated region
    $region41: #{transformer_forward.15} parent=5 // pred_check
      %p1365 = pneg %p1364
    $region42: #{transformer_forward.15} parent=5 // pred_check_branch
      %1367 = sbr.rel (%p1365) target = $region44
    $region43: #{transformer_forward.15} parent=5 // pred_region
      %s1368 = ssub.s32 %s17, 2
      // Predicated region
      $region45: #{transformer_forward.15} parent=43 // pred_check
        %p1369 = pneg %p135
      $region46: #{transformer_forward.15} parent=43 // pred_check_branch
        %1371 = sbr.rel (%p1369) target = $region48
      $region47: #{transformer_forward.15} parent=43 // pred_region
        %p1372 = scmp.lt.s32.totalorder %s23, 1
        %s1373 = scalar_select %p1372, %s23, 1
        %s1374 = smul.addr %s1373, 4
        %s1375 = scalar_lea.vmem %s5, %s1374
      $region48: #{transformer_forward.15} parent=43 // pred_fallthru
        _
    $region44: #{transformer_forward.15} parent=5 // pred_fallthru
      _
  $region6: #{transformer_forward.15} parent=0 // loop_footer
    %s21 = sadd.s32 1, %s17
  $region7: #{transformer_forward.15} parent=0 // loop_footer_branch
    %16 = sbr.rel target = $region3
  $region8: #{transformer_forward.15} parent=0 // loop_exit
    _

// kernel: transformer_forward.17
$region0: #{transformer_forward.17}
  #allocation0 [shape = 'u32[]', space=smem, size = 0x4, offset = 0x4, fixed_abs, tag = 'smem constant byte address 0x4 - core index']
  #allocation1 [shape = 'u32[144,128]{1,0:T(1,128)}', space=vmem, size = 0x12000, scoped, tag = 'internal scratch']
  #allocation2 [shape = 'f32[16,64]{1,0:T(8,128)}', space=vmem, size = 0x2000, scoped, tag = 'scratch operand']
  %s0 = inlined_call_operand.vmem [shape: bf16[16,32], index: 0, kind: input, shape index: {}]
  %s1 = inlined_call_operand.vmem [shape: bf16[32,64], index: 1, kind: input, shape index: {}]
  %s2 = inlined_call_operand.vmem [shape: f32[1,64], index: 2, kind: input, shape index: {}]
  %s3 = inlined_call_operand.vmem [shape: bf16[16,64], index: 3, kind: output, shape index: {}]
  %s4 = sld [smem:[#allocation0]]
  $region30: #{transformer_forward.17} parent=0
    _
  %s6 = ssub.s32 1, %s4
  %s7 = scalar_select 0, %s6, %s4
  // Predicated region
  $region2: #{transformer_forward.17} parent=0 // pred_check
    _
  $region3: #{transformer_forward.17} parent=0 // pred_check_branch
    %9 = sbr.rel (0) target = $region5
  $region4: #{transformer_forward.17} parent=0 // pred_region
    _
  $region5: #{transformer_forward.17} parent=0 // pred_fallthru
    _
  // Predicated region
  $region6: #{transformer_forward.17} parent=0 // pred_check
    _
  $region7: #{transformer_forward.17} parent=0 // pred_check_branch
    %11 = sbr.rel (0) target = $region9
  $region8: #{transformer_forward.17} parent=0 // pred_region
    _
  $region9: #{transformer_forward.17} parent=0 // pred_fallthru
    _
  // Predicated region
  $region10: #{transformer_forward.17} parent=0 // pred_check
    _
  $region11: #{transformer_forward.17} parent=0 // pred_check_branch
    %13 = sbr.rel (0) target = $region13
  $region12: #{transformer_forward.17} parent=0 // pred_region
    _
  $region13: #{transformer_forward.17} parent=0 // pred_fallthru
    _
  %p15 = scmp.eq.s32.totalorder 0, 0
  // Predicated region
  $region14: #{transformer_forward.17} parent=0 // pred_check
    %p16 = pneg %p15
  $region15: #{transformer_forward.17} parent=0 // pred_check_branch
    %18 = sbr.rel (%p16) target = $region17
  $region16: #{transformer_forward.17} parent=0 // pred_region
    %vm19 = vcmask 523264
    %20 = vst.msk [vmem:[#allocation2] sm:$0xff] %vm19, 0.0
    %21 = vst.msk [vmem:[#allocation2 + $0x8] sm:$0xff] %vm19, 0.0
  $region17: #{transformer_forward.17} parent=0 // pred_fallthru
    _
  %v22 = vld [vmem:[#allocation2] sm:$0xff]
  %v23 = vld [vmem:[#allocation2 + $0x8] sm:$0xff]
  %v24 = vld [vmem:[%s0] sm:$0xf]
  %v25 = vld [vmem:[%s0 + $0x4] sm:$0xf]
  %v26 = vld [vmem:[%s1] sm:$0xf]
  %v27 = vld [vmem:[%s1 + $0x4] sm:$0xf]
  %v28 = vld [vmem:[%s1 + $0x8] sm:$0xf]
  %v29 = vld [vmem:[%s1 + $0xc] sm:$0xf]
  %v32 = vunpack.c.l.b16 %v24
  %v33 = vunpack.c.l.b16 %v25
  %v34 = vpack.c.b16 %v33, %v32
  %v39 = vunpack.c.l.b16 %v26
  %v40 = vunpack.c.l.b16 %v27
  %v41 = vunpack.c.l.b16 %v28
  %v42 = vunpack.c.l.b16 %v29
  %v43 = vpack.c.b16 %v40, %v39
  %v44 = vpack.c.b16 %v42, %v41
  %vm47 = vcmask 261120
  %v49 = vsel %vm47, %v34, 0
  %51 = vmatprep.subr.bf16.mxu0 0
  %52 = vmatpush1.bf16.msra.mxu0 %v43
  %53 = vmatprep.subr.bf16.mxu0 0
  %54 = vmatpush1.bf16.msra.mxu0 %v44
  %55 = vmatprep.subr.bf16.mxu0 0
  %56 = vmatpush1.bf16.msra.mxu0 0
  %57 = vmatprep.subr.bf16.mxu0 0
  %58 = vmatpush1.bf16.msra.mxu0 0
  %59 = vmatprep.subr.bf16.mxu0 0
  %60 = vmatpush1.bf16.msra.mxu0 0
  %61 = vmatprep.subr.bf16.mxu0 0
  %62 = vmatpush1.bf16.msra.mxu0 0
  %63 = vmatprep.subr.bf16.mxu0 0
  %64 = vmatpush1.bf16.msra.mxu0 0
  %65 = vmatprep.subr.bf16.mxu0 0
  %66 = vmatpush1.bf16.msra.mxu0 0
  %67 = vmatprep.subr.bf16.mxu0 0
  %68 = vmatpush1.bf16.msra.mxu0 0
  %69 = vmatprep.subr.bf16.mxu0 0
  %70 = vmatpush1.bf16.msra.mxu0 0
  %71 = vmatprep.subr.bf16.mxu0 0
  %72 = vmatpush1.bf16.msra.mxu0 0
  %73 = vmatprep.subr.bf16.mxu0 0
  %74 = vmatpush1.bf16.msra.mxu0 0
  %75 = vmatprep.subr.bf16.mxu0 0
  %76 = vmatpush1.bf16.msra.mxu0 0
  %77 = vmatprep.subr.bf16.mxu0 0
  %78 = vmatpush1.bf16.msra.mxu0 0
  %79 = vmatprep.subr.bf16.mxu0 0
  %80 = vmatpush1.bf16.msra.mxu0 0
  %81 = vmatprep.subr.bf16.mxu0 0
  %82 = vmatpush1.bf16.msra.mxu0 0
  %83 = vmatprep.mubr.bf16.mxu0 0
  %84 = vmatmul.mubr.bf16.gmra.mrb[0].mxu0 %v49
  %v85 = vpop.f32.mrb[0].mxu0
  %v86 = vadd.f32 0.0, %v85
  %v87 = vpop.f32.mrb[0].mxu0
  %v88 = vpop.f32.mrb[0].mxu0
  %v89 = vadd.f32 0.0, %v88
  %v90 = vpop.f32.mrb[0].mxu0
  %91 = vdwg.mxu0
  %v92 = vadd.f32 %v22, %v86
  %v93 = vadd.f32 %v23, %v89
  %vm94 = vcmask 523264
  %95 = vst.msk [vmem:[#allocation2] sm:$0xff] %vm94, %v92
  %96 = vst.msk [vmem:[#allocation2 + $0x8] sm:$0xff] %vm94, %v93
  // Predicated region
  $region18: #{transformer_forward.17} parent=0 // pred_check
    %p97 = pneg %p15
  $region19: #{transformer_forward.17} parent=0 // pred_check_branch
    %99 = sbr.rel (%p97) target = $region21
  $region20: #{transformer_forward.17} parent=0 // pred_region
    %v100 = vld [vmem:[#allocation2] sm:$0xff]
    %v101 = vld [vmem:[#allocation2 + $0x8] sm:$0xff]
    %v102 = vld [vmem:[%s2] sm:$0x1]
    %v104 = vlaneseq
    %v105 = vshrl.u32 %v104, 7
    %v106 = vsub.s32 0, %v105
    %v107 = vrot.slane %v102, %v106
    %v109 = vadd.f32 %v100, %v107
    %v110 = vadd.f32 %v101, %v107
    %v111 = vsub.f32 %v109, 1.0
    %v112 = vsub.f32 %v110, 1.0
    %v113 = vxor.u32 %v111, 2147483648
    %v114 = vxor.u32 %v112, 2147483648
    %v115 = vmul.f32 %v113, 1.442695
    %v116 = vpow.pop %v115
    %v117 = vmul.f32 %v114, 1.442695
    %v118 = vpow.pop %v117
    %v119 = vadd.f32 %v116, 1.0
    %v120 = vadd.f32 %v118, 1.0
    %v121 = vrcp.pop %v119
    %v122 = vmul.f32 1.0, %v121
    %v123 = vrcp.pop %v120
    %v124 = vmul.f32 1.0, %v123
    %v125 = vmul.f32 %v109, %v122
    %v126 = vmul.f32 %v110, %v124
    %v127 = vpack.c.bf16 %v126, %v125
    %v129 = vunpack.c.l.b16 %v127
    %v130 = vunpack.c.h.b16 %v127
    %v131 = vpack.c.b16 %v129, %v129
    %v132 = vpack.c.b16 %v130, %v130
    %vm135 = vcmask 519168
    %136 = vst.msk [vmem:[%s3] sm:$0xf] %vm135, %v131
    %137 = vst.msk [vmem:[%s3 + $0x4] sm:$0xf] %vm135, %v132
  $region21: #{transformer_forward.17} parent=0 // pred_fallthru
    _
  // Predicated region
  $region22: #{transformer_forward.17} parent=0 // pred_check
    _
  $region23: #{transformer_forward.17} parent=0 // pred_check_branch
    %139 = sbr.rel (0) target = $region25
  $region24: #{transformer_forward.17} parent=0 // pred_region
    _
  $region25: #{transformer_forward.17} parent=0 // pred_fallthru
    _
  // Predicated region
  $region26: #{transformer_forward.17} parent=0 // pred_check
    _
  $region27: #{transformer_forward.17} parent=0 // pred_check_branch
    %141 = sbr.rel (0) target = $region29
  $region28: #{transformer_forward.17} parent=0 // pred_region
    _
  $region29: #{transformer_forward.17} parent=0 // pred_fallthru
    _

// kernel: transformer_forward.18
$region0: #{transformer_forward.18}
  #allocation0 [shape = 'u32[]', space=smem, size = 0x4, offset = 0x4, fixed_abs, tag = 'smem constant byte address 0x4 - core index']
  #allocation1 [shape = 'u32[144,128]{1,0:T(1,128)}', space=vmem, size = 0x12000, scoped, tag = 'internal scratch']
  #allocation2 [shape = 'f32[16,32]{1,0:T(8,128)}', space=vmem, size = 0x2000, scoped, tag = 'scratch operand']
  %s0 = inlined_call_operand.vmem [shape: bf16[16,64], index: 0, kind: input, shape index: {}]
  %s1 = inlined_call_operand.vmem [shape: bf16[64,32], index: 1, kind: input, shape index: {}]
  %s2 = inlined_call_operand.vmem [shape: f32[1,32], index: 2, kind: input, shape index: {}]
  %s3 = inlined_call_operand.vmem [shape: bf16[16,32], index: 3, kind: input, shape index: {}]
  %s4 = inlined_call_operand.vmem [shape: bf16[16,32], index: 4, kind: output, shape index: {}]
  %s5 = sld [smem:[#allocation0]]
  $region34: #{transformer_forward.18} parent=0
    _
  %s7 = ssub.s32 1, %s5
  %s8 = scalar_select 0, %s7, %s5
  // Predicated region
  $region2: #{transformer_forward.18} parent=0 // pred_check
    _
  $region3: #{transformer_forward.18} parent=0 // pred_check_branch
    %10 = sbr.rel (0) target = $region5
  $region4: #{transformer_forward.18} parent=0 // pred_region
    _
  $region5: #{transformer_forward.18} parent=0 // pred_fallthru
    _
  // Predicated region
  $region6: #{transformer_forward.18} parent=0 // pred_check
    _
  $region7: #{transformer_forward.18} parent=0 // pred_check_branch
    %12 = sbr.rel (0) target = $region9
  $region8: #{transformer_forward.18} parent=0 // pred_region
    _
  $region9: #{transformer_forward.18} parent=0 // pred_fallthru
    _
  // Predicated region
  $region10: #{transformer_forward.18} parent=0 // pred_check
    _
  $region11: #{transformer_forward.18} parent=0 // pred_check_branch
    %14 = sbr.rel (0) target = $region13
  $region12: #{transformer_forward.18} parent=0 // pred_region
    _
  $region13: #{transformer_forward.18} parent=0 // pred_fallthru
    _
  // Predicated region
  $region14: #{transformer_forward.18} parent=0 // pred_check
    _
  $region15: #{transformer_forward.18} parent=0 // pred_check_branch
    %16 = sbr.rel (0) target = $region17
  $region16: #{transformer_forward.18} parent=0 // pred_region
    _
  $region17: #{transformer_forward.18} parent=0 // pred_fallthru
    _
  %p18 = scmp.eq.s32.totalorder 0, 0
  // Predicated region
  $region18: #{transformer_forward.18} parent=0 // pred_check
    %p19 = pneg %p18
  $region19: #{transformer_forward.18} parent=0 // pred_check_branch
    %21 = sbr.rel (%p19) target = $region21
  $region20: #{transformer_forward.18} parent=0 // pred_region
    %vm22 = vcmask 261120
    %23 = vst.msk [vmem:[#allocation2] sm:$0xff] %vm22, 0.0
    %24 = vst.msk [vmem:[#allocation2 + $0x8] sm:$0xff] %vm22, 0.0
  $region21: #{transformer_forward.18} parent=0 // pred_fallthru
    _
  %v25 = vld [vmem:[#allocation2] sm:$0xff]
  %v26 = vld [vmem:[#allocation2 + $0x8] sm:$0xff]
  %v27 = vld [vmem:[%s0] sm:$0xf]
  %v28 = vld [vmem:[%s0 + $0x4] sm:$0xf]
  %v29 = vld [vmem:[%s1] sm:$0xf]
  %v30 = vld [vmem:[%s1 + $0x4] sm:$0xf]
  %v31 = vld [vmem:[%s1 + $0x8] sm:$0xf]
  %v32 = vld [vmem:[%s1 + $0xc] sm:$0xf]
  %v33 = vld [vmem:[%s1 + $0x10] sm:$0xf]
  %v34 = vld [vmem:[%s1 + $0x14] sm:$0xf]
  %v35 = vld [vmem:[%s1 + $0x18] sm:$0xf]
  %v36 = vld [vmem:[%s1 + $0x1c] sm:$0xf]
  %v39 = vunpack.c.l.b16 %v27
  %v40 = vunpack.c.l.b16 %v28
  %v41 = vpack.c.b16 %v40, %v39
  %v50 = vunpack.c.l.b16 %v29
  %v51 = vunpack.c.l.b16 %v30
  %v52 = vunpack.c.l.b16 %v31
  %v53 = vunpack.c.l.b16 %v32
  %v54 = vunpack.c.l.b16 %v33
  %v55 = vunpack.c.l.b16 %v34
  %v56 = vunpack.c.l.b16 %v35
  %v57 = vunpack.c.l.b16 %v36
  %v58 = vpack.c.b16 %v51, %v50
  %v59 = vpack.c.b16 %v53, %v52
  %v60 = vpack.c.b16 %v55, %v54
  %v61 = vpack.c.b16 %v57, %v56
  %vm66 = vcmask 523264
  %v68 = vsel %vm66, %v41, 0
  %70 = vmatprep.subr.bf16.mxu0 0
  %71 = vmatpush1.bf16.msra.mxu0 %v58
  %72 = vmatprep.subr.bf16.mxu0 0
  %73 = vmatpush1.bf16.msra.mxu0 %v59
  %74 = vmatprep.subr.bf16.mxu0 0
  %75 = vmatpush1.bf16.msra.mxu0 %v60
  %76 = vmatprep.subr.bf16.mxu0 0
  %77 = vmatpush1.bf16.msra.mxu0 %v61
  %78 = vmatprep.subr.bf16.mxu0 0
  %79 = vmatpush1.bf16.msra.mxu0 0
  %80 = vmatprep.subr.bf16.mxu0 0
  %81 = vmatpush1.bf16.msra.mxu0 0
  %82 = vmatprep.subr.bf16.mxu0 0
  %83 = vmatpush1.bf16.msra.mxu0 0
  %84 = vmatprep.subr.bf16.mxu0 0
  %85 = vmatpush1.bf16.msra.mxu0 0
  %86 = vmatprep.subr.bf16.mxu0 0
  %87 = vmatpush1.bf16.msra.mxu0 0
  %88 = vmatprep.subr.bf16.mxu0 0
  %89 = vmatpush1.bf16.msra.mxu0 0
  %90 = vmatprep.subr.bf16.mxu0 0
  %91 = vmatpush1.bf16.msra.mxu0 0
  %92 = vmatprep.subr.bf16.mxu0 0
  %93 = vmatpush1.bf16.msra.mxu0 0
  %94 = vmatprep.subr.bf16.mxu0 0
  %95 = vmatpush1.bf16.msra.mxu0 0
  %96 = vmatprep.subr.bf16.mxu0 0
  %97 = vmatpush1.bf16.msra.mxu0 0
  %98 = vmatprep.subr.bf16.mxu0 0
  %99 = vmatpush1.bf16.msra.mxu0 0
  %100 = vmatprep.subr.bf16.mxu0 0
  %101 = vmatpush1.bf16.msra.mxu0 0
  %102 = vmatprep.mubr.bf16.mxu0 0
  %103 = vmatmul.mubr.bf16.gmra.mrb[0].mxu0 %v68
  %v104 = vpop.f32.mrb[0].mxu0
  %v105 = vadd.f32 0.0, %v104
  %v106 = vpop.f32.mrb[0].mxu0
  %v107 = vpop.f32.mrb[0].mxu0
  %v108 = vadd.f32 0.0, %v107
  %v109 = vpop.f32.mrb[0].mxu0
  %110 = vdwg.mxu0
  %v111 = vadd.f32 %v25, %v105
  %v112 = vadd.f32 %v26, %v108
  %vm113 = vcmask 261120
  %114 = vst.msk [vmem:[#allocation2] sm:$0xff] %vm113, %v111
  %115 = vst.msk [vmem:[#allocation2 + $0x8] sm:$0xff] %vm113, %v112
  // Predicated region
  $region22: #{transformer_forward.18} parent=0 // pred_check
    %p116 = pneg %p18
  $region23: #{transformer_forward.18} parent=0 // pred_check_branch
    %118 = sbr.rel (%p116) target = $region25
  $region24: #{transformer_forward.18} parent=0 // pred_region
    %v119 = vld [vmem:[#allocation2] sm:$0xff]
    %v120 = vld [vmem:[#allocation2 + $0x8] sm:$0xff]
    %v121 = vld [vmem:[%s2] sm:$0x1]
    %v123 = vlaneseq
    %v124 = vshrl.u32 %v123, 7
    %v125 = vsub.s32 0, %v124
    %v126 = vrot.slane %v121, %v125
    %v128 = vadd.f32 %v119, %v126
    %v129 = vadd.f32 %v120, %v126
    %v130 = vld [vmem:[%s3] sm:$0xf]
    %v131 = vld [vmem:[%s3 + $0x4] sm:$0xf]
    %v132 = vunpack.c.l.bf16 %v130
    %v133 = vunpack.c.l.bf16 %v131
    %v134 = vadd.f32 %v128, %v132
    %v135 = vadd.f32 %v129, %v133
    %v136 = vmul.f32 %v134, %v134
    %v137 = vmul.f32 %v135, %v135
    %v138 = vsel %vm113, %v136, 0.0
    %139 = vadd.xlane.f32.xlu0 %v138
    %v140 = vpop.xlane.xlu0 %139
    %v141 = vsel %vm113, %v137, 0.0
    %142 = vadd.xlane.f32.xlu0 %v141
    %v143 = vpop.xlane.xlu0 %142
    %v144 = vrcp.pop 32.0
    %v145 = vmul.f32 %v140, %v144
    %v146 = vmul.f32 %v143, %v144
    %v147 = vadd.f32 %v145, 0.25
    %v148 = vadd.f32 %v146, 0.25
    %v149 = vrsqrt.pop %v147
    %v150 = vrsqrt.pop %v148
    %v151 = vmul.f32 %v134, %v149
    %v152 = vmul.f32 %v135, %v150
    %v153 = vpack.c.bf16 %v152, %v151
    %v155 = vunpack.c.l.b16 %v153
    %v156 = vunpack.c.h.b16 %v153
    %v157 = vpack.c.b16 %v155, %v155
    %v158 = vpack.c.b16 %v156, %v156
    %vm161 = vcmask 257024
    %162 = vst.msk [vmem:[%s4] sm:$0xf] %vm161, %v157
    %163 = vst.msk [vmem:[%s4 + $0x4] sm:$0xf] %vm161, %v158
  $region25: #{transformer_forward.18} parent=0 // pred_fallthru
    _
  // Predicated region
  $region26: #{transformer_forward.18} parent=0 // pred_check
    _
  $region27: #{transformer_forward.18} parent=0 // pred_check_branch
    %165 = sbr.rel (0) target = $region29
  $region28: #{transformer_forward.18} parent=0 // pred_region
    _
  $region29: #{transformer_forward.18} parent=0 // pred_fallthru
    _
  // Predicated region
  $region30: #{transformer_forward.18} parent=0 // pred_check
    _
  $region31: #{transformer_forward.18} parent=0 // pred_check_branch
    %167 = sbr.rel (0) target = $region33
  $region32: #{transformer_forward.18} parent=0 // pred_region
    _
  $region33: #{transformer_forward.18} parent=0 // pred_fallthru
    _

// kernel: transformer_forward.23
$region0: #{transformer_forward.23}
  #allocation0 [shape = 'u32[]', space=smem, size = 0x4, offset = 0x4, fixed_abs, tag = 'smem constant byte address 0x4 - core index']
  #allocation1 [shape = 'u32[144,128]{1,0:T(1,128)}', space=vmem, size = 0x12000, scoped, tag = 'internal scratch']
  #allocation2 [shape = 'f32[16,32]{1,0:T(8,128)}', space=vmem, size = 0x2000, scoped, tag = 'scratch operand']
  %s0 = inlined_call_operand.vmem [shape: bf16[16,64], index: 0, kind: input, shape index: {}]
  %s1 = inlined_call_operand.vmem [shape: bf16[64,32], index: 1, kind: input, shape index: {}]
  %s2 = inlined_call_operand.vmem [shape: f32[1,32], index: 2, kind: input, shape index: {}]
  %s3 = inlined_call_operand.vmem [shape: bf16[16,32], index: 3, kind: input, shape index: {}]
  %s4 = inlined_call_operand.hbm [shape: f32[16,32], index: 4, kind: output, shape index: {}]
  %s5 = sld [smem:[#allocation0]]
  $region34: #{transformer_forward.23} parent=0
    _
  %s7 = ssub.s32 1, %s5
  %s8 = scalar_select 0, %s7, %s5
  $region1: #{transformer_forward.23} parent=0
    #allocation3 [shape = 'u8[8192]{0}', space=vmem, size = 0x2000, scoped, tag = 'output window, operand 0, single buffered']
    #allocation4 [shape = 's32[1]{0}', space=sflag, size = 0x4, scoped, tag = 'scoped memory for transformer_forward.23']
    %9 = vsyncpa [#allocation4], 0
    // Predicated region
    $region2: #{transformer_forward.23} parent=1 // pred_check
      _
    $region3: #{transformer_forward.23} parent=1 // pred_check_branch
      %11 = sbr.rel (0) target = $region5
    $region4: #{transformer_forward.23} parent=1 // pred_region
      _
    $region5: #{transformer_forward.23} parent=1 // pred_fallthru
      _
    // Predicated region
    $region6: #{transformer_forward.23} parent=1 // pred_check
      _
    $region7: #{transformer_forward.23} parent=1 // pred_check_branch
      %13 = sbr.rel (0) target = $region9
    $region8: #{transformer_forward.23} parent=1 // pred_region
      _
    $region9: #{transformer_forward.23} parent=1 // pred_fallthru
      _
    // Predicated region
    $region10: #{transformer_forward.23} parent=1 // pred_check
      _
    $region11: #{transformer_forward.23} parent=1 // pred_check_branch
      %15 = sbr.rel (0) target = $region13
    $region12: #{transformer_forward.23} parent=1 // pred_region
      _
    $region13: #{transformer_forward.23} parent=1 // pred_fallthru
      _
    // Predicated region
    $region14: #{transformer_forward.23} parent=1 // pred_check
      _
    $region15: #{transformer_forward.23} parent=1 // pred_check_branch
      %17 = sbr.rel (0) target = $region17
    $region16: #{transformer_forward.23} parent=1 // pred_region
      _
    $region17: #{transformer_forward.23} parent=1 // pred_fallthru
      _
    %p19 = scmp.eq.s32.totalorder 0, 0
    // Predicated region
    $region18: #{transformer_forward.23} parent=1 // pred_check
      %p20 = pneg %p19
    $region19: #{transformer_forward.23} parent=1 // pred_check_branch
      %22 = sbr.rel (%p20) target = $region21
    $region20: #{transformer_forward.23} parent=1 // pred_region
      %vm23 = vcmask 261120
      %24 = vst.msk [vmem:[#allocation2] sm:$0xff] %vm23, 0.0
      %25 = vst.msk [vmem:[#allocation2 + $0x8] sm:$0xff] %vm23, 0.0
    $region21: #{transformer_forward.23} parent=1 // pred_fallthru
      _
    %v26 = vld [vmem:[#allocation2] sm:$0xff]
    %v27 = vld [vmem:[#allocation2 + $0x8] sm:$0xff]
    %v28 = vld [vmem:[%s0] sm:$0xf]
    %v29 = vld [vmem:[%s0 + $0x4] sm:$0xf]
    %v30 = vld [vmem:[%s1] sm:$0xf]
    %v31 = vld [vmem:[%s1 + $0x4] sm:$0xf]
    %v32 = vld [vmem:[%s1 + $0x8] sm:$0xf]
    %v33 = vld [vmem:[%s1 + $0xc] sm:$0xf]
    %v34 = vld [vmem:[%s1 + $0x10] sm:$0xf]
    %v35 = vld [vmem:[%s1 + $0x14] sm:$0xf]
    %v36 = vld [vmem:[%s1 + $0x18] sm:$0xf]
    %v37 = vld [vmem:[%s1 + $0x1c] sm:$0xf]
    %v40 = vunpack.c.l.b16 %v28
    %v41 = vunpack.c.l.b16 %v29
    %v42 = vpack.c.b16 %v41, %v40
    %v51 = vunpack.c.l.b16 %v30
    %v52 = vunpack.c.l.b16 %v31
    %v53 = vunpack.c.l.b16 %v32
    %v54 = vunpack.c.l.b16 %v33
    %v55 = vunpack.c.l.b16 %v34
    %v56 = vunpack.c.l.b16 %v35
    %v57 = vunpack.c.l.b16 %v36
    %v58 = vunpack.c.l.b16 %v37
    %v59 = vpack.c.b16 %v52, %v51
    %v60 = vpack.c.b16 %v54, %v53
    %v61 = vpack.c.b16 %v56, %v55
    %v62 = vpack.c.b16 %v58, %v57
    %vm67 = vcmask 523264
    %v69 = vsel %vm67, %v42, 0
    %71 = vmatprep.subr.bf16.mxu0 0
    %72 = vmatpush1.bf16.msra.mxu0 %v59
    %73 = vmatprep.subr.bf16.mxu0 0
    %74 = vmatpush1.bf16.msra.mxu0 %v60
    %75 = vmatprep.subr.bf16.mxu0 0
    %76 = vmatpush1.bf16.msra.mxu0 %v61
    %77 = vmatprep.subr.bf16.mxu0 0
    %78 = vmatpush1.bf16.msra.mxu0 %v62
    %79 = vmatprep.subr.bf16.mxu0 0
    %80 = vmatpush1.bf16.msra.mxu0 0
    %81 = vmatprep.subr.bf16.mxu0 0
    %82 = vmatpush1.bf16.msra.mxu0 0
    %83 = vmatprep.subr.bf16.mxu0 0
    %84 = vmatpush1.bf16.msra.mxu0 0
    %85 = vmatprep.subr.bf16.mxu0 0
    %86 = vmatpush1.bf16.msra.mxu0 0
    %87 = vmatprep.subr.bf16.mxu0 0
    %88 = vmatpush1.bf16.msra.mxu0 0
    %89 = vmatprep.subr.bf16.mxu0 0
    %90 = vmatpush1.bf16.msra.mxu0 0
    %91 = vmatprep.subr.bf16.mxu0 0
    %92 = vmatpush1.bf16.msra.mxu0 0
    %93 = vmatprep.subr.bf16.mxu0 0
    %94 = vmatpush1.bf16.msra.mxu0 0
    %95 = vmatprep.subr.bf16.mxu0 0
    %96 = vmatpush1.bf16.msra.mxu0 0
    %97 = vmatprep.subr.bf16.mxu0 0
    %98 = vmatpush1.bf16.msra.mxu0 0
    %99 = vmatprep.subr.bf16.mxu0 0
    %100 = vmatpush1.bf16.msra.mxu0 0
    %101 = vmatprep.subr.bf16.mxu0 0
    %102 = vmatpush1.bf16.msra.mxu0 0
    %103 = vmatprep.mubr.bf16.mxu0 0
    %104 = vmatmul.mubr.bf16.gmra.mrb[0].mxu0 %v69
    %v105 = vpop.f32.mrb[0].mxu0
    %v106 = vadd.f32 0.0, %v105
    %v107 = vpop.f32.mrb[0].mxu0
    %v108 = vpop.f32.mrb[0].mxu0
    %v109 = vadd.f32 0.0, %v108
    %v110 = vpop.f32.mrb[0].mxu0
    %111 = vdwg.mxu0
    %v112 = vadd.f32 %v26, %v106
    %v113 = vadd.f32 %v27, %v109
    %vm114 = vcmask 261120
    %115 = vst.msk [vmem:[#allocation2] sm:$0xff] %vm114, %v112
    %116 = vst.msk [vmem:[#allocation2 + $0x8] sm:$0xff] %vm114, %v113
    // Predicated region
    $region22: #{transformer_forward.23} parent=1 // pred_check
      %p117 = pneg %p19
    $region23: #{transformer_forward.23} parent=1 // pred_check_branch
      %119 = sbr.rel (%p117) target = $region25
    $region24: #{transformer_forward.23} parent=1 // pred_region
      %v120 = vld [vmem:[#allocation2] sm:$0xff]
      %v121 = vld [vmem:[#allocation2 + $0x8] sm:$0xff]
      %v122 = vld [vmem:[%s2] sm:$0x1]
      %v124 = vlaneseq
      %v125 = vshrl.u32 %v124, 7
      %v126 = vsub.s32 0, %v125
      %v127 = vrot.slane %v122, %v126
      %v129 = vadd.f32 %v120, %v127
      %v130 = vadd.f32 %v121, %v127
      %v131 = vld [vmem:[%s3] sm:$0xf]
      %v132 = vld [vmem:[%s3 + $0x4] sm:$0xf]
      %v133 = vunpack.c.l.bf16 %v131
      %v134 = vunpack.c.l.bf16 %v132
      %v135 = vadd.f32 %v129, %v133
      %v136 = vadd.f32 %v130, %v134
      %v137 = vmul.f32 %v135, %v135
      %v138 = vmul.f32 %v136, %v136
      %v139 = vsel %vm114, %v137, 0.0
      %140 = vadd.xlane.f32.xlu0 %v139
      %v141 = vpop.xlane.xlu0 %140
      %v142 = vsel %vm114, %v138, 0.0
      %143 = vadd.xlane.f32.xlu0 %v142
      %v144 = vpop.xlane.xlu0 %143
      %v145 = vrcp.pop 32.0
      %v146 = vmul.f32 %v141, %v145
      %v147 = vmul.f32 %v144, %v145
      %v148 = vadd.f32 %v146, 0.25
      %v149 = vadd.f32 %v147, 0.25
      %v150 = vrsqrt.pop %v148
      %v151 = vrsqrt.pop %v149
      %v152 = vmul.f32 %v135, %v150
      %v153 = vmul.f32 %v136, %v151
      %154 = vst.msk [vmem:[#allocation3] sm:$0xff] %vm114, %v152
      %155 = vst.msk [vmem:[#allocation3 + $0x8] sm:$0xff] %vm114, %v153
    $region25: #{transformer_forward.23} parent=1 // pred_fallthru
      _
    // Predicated region
    $region26: #{transformer_forward.23} parent=1 // pred_check
      _
    $region27: #{transformer_forward.23} parent=1 // pred_check_branch
      %157 = sbr.rel (0) target = $region29
    $region28: #{transformer_forward.23} parent=1 // pred_region
      %s159 = ssub.s32 256, 256
      %160 = vsyncadd [#allocation4], %s159
      %s161 = sshll.u32 [#allocation3], 4
      %s162 = int_to_ptr.vmem [resolvable:$true] %s161
      %167 = dma.vmem_to_hbm [thread:$0]  %s162, 256, %s4, [#allocation4], 128, 128, 8
    $region29: #{transformer_forward.23} parent=1 // pred_fallthru
      _
    // Predicated region
    $region30: #{transformer_forward.23} parent=1 // pred_check
      _
    $region31: #{transformer_forward.23} parent=1 // pred_check_branch
      %169 = sbr.rel (0) target = $region33
    $region32: #{transformer_forward.23} parent=1 // pred_region
      %170 = dma.done [#allocation4], 256
    $region33: #{transformer_forward.23} parent=1 // pred_fallthru
      _
    %171 = vsyncpa [#allocation4], 1

</llo_original>
